<compile_context>
chip_gen: v7x
topology: tpu7x:2x2x1
jax: 0.10.0
libtpu: 0.0.40
codegen_flags: <defaults>
</compile_context>

<pallas_src>
import functools

import numpy as np

import jax
import jax.numpy as jnp
from jax.experimental import pallas as pl
from jax.experimental.pallas import tpu as pltpu


# ---------------------------------------------------------------------------
# Kernels
# ---------------------------------------------------------------------------

def _shift_rows_zero(y, off):
    """out[q] = y[q + off] if 0 <= q + off < M else 0   (off is Python-static)."""
    if off == 0:
        return y
    pad = jnp.zeros((abs(off), y.shape[1]), y.dtype)
    if off > 0:
        return jnp.concatenate([y[off:], pad], axis=0)
    return jnp.concatenate([pad, y[:off]], axis=0)


def _conv_same_kernel(x_ref, w_ref, m_ref, s_ref, b_ref, o_ref, *, taps):
    """Stride-1 'same' (or 1x1) conv as kh*kw shifted matmuls on one image.

    x_ref: (H*W, Cin) bf16     w_ref: (T, Cin, Cout) bf16
    m_ref: (T, H*W, 1) f32     s_ref/b_ref: (1, Cout) f32 (fused BN)
    o_ref: (H*W, Cout) f32
    """
    x = x_ref[...]                                   # loaded once, reused by all taps
    acc = None
    for t, off, need_mask in taps:                   # static unroll over kernel taps
        y = jnp.dot(x, w_ref[t], preferred_element_type=jnp.float32)
        y = _shift_rows_zero(y, off)
        if need_mask:
            y = y * m_ref[t]
        acc = y if acc is None else acc + y
    y = acc * s_ref[...] + b_ref[...]
    o_ref[...] = jnp.maximum(y, 0.0).astype(o_ref.dtype)


def _conv_general_kernel(x_ref, w_ref, s_ref, b_ref, o_ref, *, kh, kw, stride, OH, OW):
    """Fallback path (non-'same' padding / stride): per-tap slice + matmul."""
    xp = x_ref[...]                                  # (Hp, Wp, Cin) bf16 (pre-padded)
    cin = xp.shape[-1]
    cout = w_ref.shape[-1]
    acc = jnp.zeros((OH * OW, cout), jnp.float32)
    for dy in range(kh):
        for dx in range(kw):
            if stride == 1:
                patch = xp[dy:dy + OH, dx:dx + OW, :]
            else:
                # TODO(synk): stride>1 uses strided value slices; not exercised below.
                patch = xp[dy:dy + (OH - 1) * stride + 1:stride,
                           dx:dx + (OW - 1) * stride + 1:stride, :]
            acc = acc + jnp.dot(patch.reshape(OH * OW, cin), w_ref[dy * kw + dx],
                                preferred_element_type=jnp.float32)
    y = jnp.maximum(acc * s_ref[...] + b_ref[...], 0.0)
    o_ref[...] = y.astype(o_ref.dtype)


# ---------------------------------------------------------------------------
# pallas_call wrappers
# ---------------------------------------------------------------------------

def _conv_same(x_nhwc, w_taps, scale, bias, kh, kw, padding):
    N, H, W, Cin = x_nhwc.shape
    T, _, Cout = w_taps.shape
    M = H * W
    x2 = x_nhwc.reshape(N, M, Cin)                   # free on contiguous NHWC

    # Static per-tap flat offsets + boundary masks (host numpy, folded as constants).
    taps = []
    masks = np.ones((T, M, 1), np.float32)
    for dy in range(kh):
        for dx in range(kw):
            t = dy * kw + dx
            dyr, dxr = dy - padding, dx - padding
            oy = np.arange(H)[:, None]
            ox = np.arange(W)[None, :]
            valid = ((oy + dyr >= 0) & (oy + dyr < H) &
                     (ox + dxr >= 0) & (ox + dxr < W))
            masks[t, :, 0] = valid.astype(np.float32).reshape(M)
            taps.append((t, dyr * W + dxr, not bool(valid.all())))
    masks = jnp.asarray(masks)

    return pl.pallas_call(
        functools.partial(_conv_same_kernel, taps=tuple(taps)),
        out_shape=jax.ShapeDtypeStruct((N, M, Cout), jnp.float32),
        grid=(N,),
        in_specs=[
            pl.BlockSpec((None, M, Cin), lambda n: (n, 0, 0)),
            pl.BlockSpec((T, Cin, Cout), lambda n: (0, 0, 0)),
            pl.BlockSpec((T, M, 1), lambda n: (0, 0, 0)),
            pl.BlockSpec((1, Cout), lambda n: (0, 0)),
            pl.BlockSpec((1, Cout), lambda n: (0, 0)),
        ],
        out_specs=pl.BlockSpec((None, M, Cout), lambda n: (n, 0, 0)),
        compiler_params=pltpu.CompilerParams(dimension_semantics=("parallel",)),
    )(x2, w_taps, masks, scale, bias)


def _conv_general(x_nhwc, w_taps, scale, bias, kh, kw, stride, padding, OH, OW):
    N, H, W, Cin = x_nhwc.shape
    T, _, Cout = w_taps.shape
    if padding > 0:
        # TODO(synk): fallback path pads on host; the common 'same'/1x1 configs use
        # the padding-free shifted-matmul path above.
        x_nhwc = jnp.pad(x_nhwc, ((0, 0), (padding, padding), (padding, padding), (0, 0)))
    Hp, Wp = H + 2 * padding, W + 2 * padding

    return pl.pallas_call(
        functools.partial(_conv_general_kernel, kh=kh, kw=kw, stride=stride, OH=OH, OW=OW),
        out_shape=jax.ShapeDtypeStruct((N, OH * OW, Cout), jnp.float32),
        grid=(N,),
        in_specs=[
            pl.BlockSpec((None, Hp, Wp, Cin), lambda n: (n, 0, 0, 0)),
            pl.BlockSpec((T, Cin, Cout), lambda n: (0, 0, 0)),
            pl.BlockSpec((1, Cout), lambda n: (0, 0)),
            pl.BlockSpec((1, Cout), lambda n: (0, 0)),
        ],
        out_specs=pl.BlockSpec((None, OH * OW, Cout), lambda n: (n, 0, 0)),
        compiler_params=pltpu.CompilerParams(dimension_semantics=("parallel",)),
    )(x_nhwc, w_taps, scale, bias)


def basic_conv2d(x, weight, gamma, beta, running_mean, running_var,
                 *, stride=1, padding=0, eps=1e-3):
    """BasicConv2d.forward: Conv2d(bias=False) -> BatchNorm2d(eval) -> ReLU.

    x: (N, Cin, H, W) f32 NCHW (PyTorch layout); weight: (Cout, Cin, kh, kw) OIHW.
    Returns (N, Cout, OH, OW) f32.
    """
    N, Cin, H, W = x.shape
    Cout, Cin_w, kh, kw = weight.shape
    assert Cin == Cin_w

    # Fused inference-mode BatchNorm -> per-channel scale / bias (f32).
    inv = gamma.astype(jnp.float32) / jnp.sqrt(running_var.astype(jnp.float32) + eps)
    scale = inv.reshape(1, Cout)
    bias = (beta.astype(jnp.float32) - running_mean.astype(jnp.float32) * inv).reshape(1, Cout)

    # NCHW -> NHWC, bf16 activations / weights for the MXU (f32 accumulation in-kernel).
    x_nhwc = jnp.transpose(x, (0, 2, 3, 1)).astype(jnp.bfloat16)
    w_taps = jnp.transpose(weight, (2, 3, 1, 0)).reshape(kh * kw, Cin, Cout).astype(jnp.bfloat16)

    OH = (H + 2 * padding - kh) // stride + 1
    OW = (W + 2 * padding - kw) // stride + 1

    if stride == 1 and OH == H and OW == W:          # 1x1 and 'same' kxk convs
        out2d = _conv_same(x_nhwc, w_taps, scale, bias, kh, kw, padding)
    else:
        out2d = _conv_general(x_nhwc, w_taps, scale, bias, kh, kw, stride, padding, OH, OW)

    out = out2d.reshape(N, OH, OW, Cout)
    return jnp.transpose(out, (0, 3, 1, 2)).astype(jnp.float32)   # back to NCHW


# ---------------------------------------------------------------------------
# Pure-JAX reference (same math, no Pallas)
# ---------------------------------------------------------------------------

def ref_basic_conv2d(x, weight, gamma, beta, running_mean, running_var,
                     *, stride=1, padding=0, eps=1e-3):
    x_nhwc = jnp.transpose(x, (0, 2, 3, 1)).astype(jnp.bfloat16)
    w_hwio = jnp.transpose(weight, (2, 3, 1, 0)).astype(jnp.bfloat16)
    y = jax.lax.conv_general_dilated(
        x_nhwc, w_hwio, (stride, stride), [(padding, padding), (padding, padding)],
        dimension_numbers=('NHWC', 'HWIO', 'NHWC'),
        preferred_element_type=jnp.float32)
    inv = gamma / jnp.sqrt(running_var + eps)
    b = beta - running_mean * inv
    y = jnp.maximum(y * inv.reshape(1, 1, 1, -1) + b.reshape(1, 1, 1, -1), 0.0)
    return jnp.transpose(y, (0, 3, 1, 2))


# ---------------------------------------------------------------------------

if __name__ == "__main__":
    key = jax.random.PRNGKey(0)
    kx = jax.random.fold_in(key, 1000)

    # Small shapes consistent with the module (channels-first PyTorch input).
    N, Cin, H, W = 2, 32, 16, 16
    x = jax.random.normal(kx, (N, Cin, H, W), jnp.float32)

    # (out_planes, kernel_size, stride, padding) — typical BasicConv2d configs.
    configs = [
        (32, 3, 1, 1),   # 3x3 'same'      -> padding-free shifted-matmul fast path
        (64, 1, 1, 0),   # 1x1 pointwise   -> single-matmul fast path
        (32, 3, 1, 0),   # 3x3 'valid'     -> general fallback path
    ]

    for i, (cout, k, s, p) in enumerate(configs):
        kk = jax.random.fold_in(key, i)
        k1, k2, k3, k4, k5 = jax.random.split(kk, 5)
        w = 0.05 * jax.random.normal(k1, (cout, Cin, k, k), jnp.float32)
        gamma = 1.0 + 0.1 * jax.random.normal(k2, (cout,), jnp.float32)
        beta = 0.05 * jax.random.normal(k3, (cout,), jnp.float32)
        rm = 0.1 * jax.random.normal(k4, (cout,), jnp.float32)
        rv = 0.5 + 0.5 * jax.random.uniform(k5, (cout,), jnp.float32)

        fwd = jax.jit(functools.partial(basic_conv2d, stride=s, padding=p))
        out = jax.block_until_ready(fwd(x, w, gamma, beta, rm, rv))
        ref = ref_basic_conv2d(x, w, gamma, beta, rm, rv, stride=s, padding=p)

        assert out.shape == ref.shape, (out.shape, ref.shape)
        assert bool(jnp.isfinite(out).all())
        err = float(jnp.max(jnp.abs(out - ref)))
        assert bool(jnp.allclose(out, ref, rtol=3e-2, atol=3e-2)), \
            "config %d (cout=%d k=%d s=%d p=%d): max abs err = %g" % (i, cout, k, s, p, err)

    print("KERNEL_OK")
</pallas_src>

<mosaic_0001>
module attributes {stable_mosaic.version = 11 : i64} {
  func.func @_conv_same_kernel(%arg0: i32, %arg1: memref<1x256x32xbf16, #tpu.memory_space<vmem>>, %arg2: memref<9x32x32xbf16, #tpu.memory_space<vmem>>, %arg3: memref<9x256x1xf32, #tpu.memory_space<vmem>>, %arg4: memref<1x32xf32, #tpu.memory_space<vmem>>, %arg5: memref<1x32xf32, #tpu.memory_space<vmem>>, %arg6: memref<1x256x32xf32, #tpu.memory_space<vmem>>) attributes {dimension_semantics = [#tpu.dimension_semantics<parallel>], iteration_bounds = array<i64: 2>, scalar_prefetch = 0 : i64, scratch_operands = 0 : i64, tpu.core_type = #tpu.core_type<tc>, window_params = [{transform_indices = @transform_0, window_bounds = array<i64: 1, 256, 32>}, {pipeline_mode = #tpu.pipeline_mode<synchronous>, transform_indices = @transform_1, window_bounds = array<i64: 9, 32, 32>}, {pipeline_mode = #tpu.pipeline_mode<synchronous>, transform_indices = @transform_2, window_bounds = array<i64: 9, 256, 1>}, {pipeline_mode = #tpu.pipeline_mode<synchronous>, transform_indices = @transform_3, window_bounds = array<i64: 1, 32>}, {pipeline_mode = #tpu.pipeline_mode<synchronous>, transform_indices = @transform_4, window_bounds = array<i64: 1, 32>}, {transform_indices = @transform_5, window_bounds = array<i64: 1, 256, 32>}]} {
    %c0 = arith.constant 0 : index
    %c0_0 = arith.constant 0 : index
    %c0_1 = arith.constant 0 : index
    %0 = vector.load %arg1[%c0, %c0_0, %c0_1] : memref<1x256x32xbf16, #tpu.memory_space<vmem>>, vector<1x256x32xbf16>
    %1 = vector.shape_cast %0 : vector<1x256x32xbf16> to vector<256x32xbf16>
    %c0_2 = arith.constant 0 : index
    %c0_3 = arith.constant 0 : index
    %c0_4 = arith.constant 0 : index
    %2 = vector.load %arg2[%c0_2, %c0_3, %c0_4] : memref<9x32x32xbf16, #tpu.memory_space<vmem>>, vector<1x32x32xbf16>
    %3 = vector.shape_cast %2 : vector<1x32x32xbf16> to vector<32x32xbf16>
    %cst = arith.constant dense<0.000000e+00> : vector<256x32xf32>
    %4 = tpu.matmul %1, %3, %cst {dimension_numbers = #tpu.dot_dimension_numbers<[1], [0], [0], [1], [0, 0, 1, 1], [], []>} : vector<256x32xbf16>, vector<32x32xbf16>, vector<256x32xf32> -> vector<256x32xf32>
    %cst_5 = arith.constant 0.000000e+00 : f32
    %5 = vector.broadcast %cst_5 : f32 to vector<17x32xf32>
    %6 = vector.extract_strided_slice %4 {offsets = [0, 0], sizes = [239, 32], strides = [1, 1]} : vector<256x32xf32> to vector<239x32xf32>
    %7 = tpu.concatenate %5, %6 in 0 : vector<17x32xf32>, vector<239x32xf32> -> vector<256x32xf32>
    %c0_6 = arith.constant 0 : index
    %c0_7 = arith.constant 0 : index
    %c0_8 = arith.constant 0 : index
    %8 = vector.load %arg3[%c0_6, %c0_7, %c0_8] : memref<9x256x1xf32, #tpu.memory_space<vmem>>, vector<1x256x1xf32>
    %9 = vector.shape_cast %8 : vector<1x256x1xf32> to vector<256x1xf32>
    %10 = vector.broadcast %9 : vector<256x1xf32> to vector<256x32xf32>
    %11 = arith.mulf %7, %10 : vector<256x32xf32>
    %c1 = arith.constant 1 : index
    %c0_9 = arith.constant 0 : index
    %c0_10 = arith.constant 0 : index
    %12 = vector.load %arg2[%c1, %c0_9, %c0_10] : memref<9x32x32xbf16, #tpu.memory_space<vmem>>, vector<1x32x32xbf16>
    %13 = vector.shape_cast %12 : vector<1x32x32xbf16> to vector<32x32xbf16>
    %cst_11 = arith.constant dense<0.000000e+00> : vector<256x32xf32>
    %14 = tpu.matmul %1, %13, %cst_11 {dimension_numbers = #tpu.dot_dimension_numbers<[1], [0], [0], [1], [0, 0, 1, 1], [], []>} : vector<256x32xbf16>, vector<32x32xbf16>, vector<256x32xf32> -> vector<256x32xf32>
    %cst_12 = arith.constant 0.000000e+00 : f32
    %15 = vector.broadcast %cst_12 : f32 to vector<16x32xf32>
    %16 = vector.extract_strided_slice %14 {offsets = [0, 0], sizes = [240, 32], strides = [1, 1]} : vector<256x32xf32> to vector<240x32xf32>
    %17 = tpu.concatenate %15, %16 in 0 : vector<16x32xf32>, vector<240x32xf32> -> vector<256x32xf32>
    %c1_13 = arith.constant 1 : index
    %c0_14 = arith.constant 0 : index
    %c0_15 = arith.constant 0 : index
    %18 = vector.load %arg3[%c1_13, %c0_14, %c0_15] : memref<9x256x1xf32, #tpu.memory_space<vmem>>, vector<1x256x1xf32>
    %19 = vector.shape_cast %18 : vector<1x256x1xf32> to vector<256x1xf32>
    %20 = vector.broadcast %19 : vector<256x1xf32> to vector<256x32xf32>
    %21 = arith.mulf %17, %20 : vector<256x32xf32>
    %22 = arith.addf %11, %21 : vector<256x32xf32>
    %c2 = arith.constant 2 : index
    %c0_16 = arith.constant 0 : index
    %c0_17 = arith.constant 0 : index
    %23 = vector.load %arg2[%c2, %c0_16, %c0_17] : memref<9x32x32xbf16, #tpu.memory_space<vmem>>, vector<1x32x32xbf16>
    %24 = vector.shape_cast %23 : vector<1x32x32xbf16> to vector<32x32xbf16>
    %cst_18 = arith.constant dense<0.000000e+00> : vector<256x32xf32>
    %25 = tpu.matmul %1, %24, %cst_18 {dimension_numbers = #tpu.dot_dimension_numbers<[1], [0], [0], [1], [0, 0, 1, 1], [], []>} : vector<256x32xbf16>, vector<32x32xbf16>, vector<256x32xf32> -> vector<256x32xf32>
    %cst_19 = arith.constant 0.000000e+00 : f32
    %26 = vector.broadcast %cst_19 : f32 to vector<15x32xf32>
    %27 = vector.extract_strided_slice %25 {offsets = [0, 0], sizes = [241, 32], strides = [1, 1]} : vector<256x32xf32> to vector<241x32xf32>
    %28 = tpu.concatenate %26, %27 in 0 : vector<15x32xf32>, vector<241x32xf32> -> vector<256x32xf32>
    %c2_20 = arith.constant 2 : index
    %c0_21 = arith.constant 0 : index
    %c0_22 = arith.constant 0 : index
    %29 = vector.load %arg3[%c2_20, %c0_21, %c0_22] : memref<9x256x1xf32, #tpu.memory_space<vmem>>, vector<1x256x1xf32>
    %30 = vector.shape_cast %29 : vector<1x256x1xf32> to vector<256x1xf32>
    %31 = vector.broadcast %30 : vector<256x1xf32> to vector<256x32xf32>
    %32 = arith.mulf %28, %31 : vector<256x32xf32>
    %33 = arith.addf %22, %32 : vector<256x32xf32>
    %c3 = arith.constant 3 : index
    %c0_23 = arith.constant 0 : index
    %c0_24 = arith.constant 0 : index
    %34 = vector.load %arg2[%c3, %c0_23, %c0_24] : memref<9x32x32xbf16, #tpu.memory_space<vmem>>, vector<1x32x32xbf16>
    %35 = vector.shape_cast %34 : vector<1x32x32xbf16> to vector<32x32xbf16>
    %cst_25 = arith.constant dense<0.000000e+00> : vector<256x32xf32>
    %36 = tpu.matmul %1, %35, %cst_25 {dimension_numbers = #tpu.dot_dimension_numbers<[1], [0], [0], [1], [0, 0, 1, 1], [], []>} : vector<256x32xbf16>, vector<32x32xbf16>, vector<256x32xf32> -> vector<256x32xf32>
    %cst_26 = arith.constant 0.000000e+00 : f32
    %37 = vector.broadcast %cst_26 : f32 to vector<1x32xf32>
    %38 = vector.extract_strided_slice %36 {offsets = [0, 0], sizes = [255, 32], strides = [1, 1]} : vector<256x32xf32> to vector<255x32xf32>
    %39 = tpu.concatenate %37, %38 in 0 : vector<1x32xf32>, vector<255x32xf32> -> vector<256x32xf32>
    %c3_27 = arith.constant 3 : index
    %c0_28 = arith.constant 0 : index
    %c0_29 = arith.constant 0 : index
    %40 = vector.load %arg3[%c3_27, %c0_28, %c0_29] : memref<9x256x1xf32, #tpu.memory_space<vmem>>, vector<1x256x1xf32>
    %41 = vector.shape_cast %40 : vector<1x256x1xf32> to vector<256x1xf32>
    %42 = vector.broadcast %41 : vector<256x1xf32> to vector<256x32xf32>
    %43 = arith.mulf %39, %42 : vector<256x32xf32>
    %44 = arith.addf %33, %43 : vector<256x32xf32>
    %c4 = arith.constant 4 : index
    %c0_30 = arith.constant 0 : index
    %c0_31 = arith.constant 0 : index
    %45 = vector.load %arg2[%c4, %c0_30, %c0_31] : memref<9x32x32xbf16, #tpu.memory_space<vmem>>, vector<1x32x32xbf16>
    %46 = vector.shape_cast %45 : vector<1x32x32xbf16> to vector<32x32xbf16>
    %cst_32 = arith.constant dense<0.000000e+00> : vector<256x32xf32>
    %47 = tpu.matmul %1, %46, %cst_32 {dimension_numbers = #tpu.dot_dimension_numbers<[1], [0], [0], [1], [0, 0, 1, 1], [], []>} : vector<256x32xbf16>, vector<32x32xbf16>, vector<256x32xf32> -> vector<256x32xf32>
    %48 = arith.addf %44, %47 : vector<256x32xf32>
    %c5 = arith.constant 5 : index
    %c0_33 = arith.constant 0 : index
    %c0_34 = arith.constant 0 : index
    %49 = vector.load %arg2[%c5, %c0_33, %c0_34] : memref<9x32x32xbf16, #tpu.memory_space<vmem>>, vector<1x32x32xbf16>
    %50 = vector.shape_cast %49 : vector<1x32x32xbf16> to vector<32x32xbf16>
    %cst_35 = arith.constant dense<0.000000e+00> : vector<256x32xf32>
    %51 = tpu.matmul %1, %50, %cst_35 {dimension_numbers = #tpu.dot_dimension_numbers<[1], [0], [0], [1], [0, 0, 1, 1], [], []>} : vector<256x32xbf16>, vector<32x32xbf16>, vector<256x32xf32> -> vector<256x32xf32>
    %cst_36 = arith.constant 0.000000e+00 : f32
    %52 = vector.broadcast %cst_36 : f32 to vector<1x32xf32>
    %53 = vector.extract_strided_slice %51 {offsets = [1, 0], sizes = [255, 32], strides = [1, 1]} : vector<256x32xf32> to vector<255x32xf32>
    %54 = tpu.concatenate %53, %52 in 0 : vector<255x32xf32>, vector<1x32xf32> -> vector<256x32xf32>
    %c5_37 = arith.constant 5 : index
    %c0_38 = arith.constant 0 : index
    %c0_39 = arith.constant 0 : index
    %55 = vector.load %arg3[%c5_37, %c0_38, %c0_39] : memref<9x256x1xf32, #tpu.memory_space<vmem>>, vector<1x256x1xf32>
    %56 = vector.shape_cast %55 : vector<1x256x1xf32> to vector<256x1xf32>
    %57 = vector.broadcast %56 : vector<256x1xf32> to vector<256x32xf32>
    %58 = arith.mulf %54, %57 : vector<256x32xf32>
    %59 = arith.addf %48, %58 : vector<256x32xf32>
    %c6 = arith.constant 6 : index
    %c0_40 = arith.constant 0 : index
    %c0_41 = arith.constant 0 : index
    %60 = vector.load %arg2[%c6, %c0_40, %c0_41] : memref<9x32x32xbf16, #tpu.memory_space<vmem>>, vector<1x32x32xbf16>
    %61 = vector.shape_cast %60 : vector<1x32x32xbf16> to vector<32x32xbf16>
    %cst_42 = arith.constant dense<0.000000e+00> : vector<256x32xf32>
    %62 = tpu.matmul %1, %61, %cst_42 {dimension_numbers = #tpu.dot_dimension_numbers<[1], [0], [0], [1], [0, 0, 1, 1], [], []>} : vector<256x32xbf16>, vector<32x32xbf16>, vector<256x32xf32> -> vector<256x32xf32>
    %cst_43 = arith.constant 0.000000e+00 : f32
    %63 = vector.broadcast %cst_43 : f32 to vector<15x32xf32>
    %64 = vector.extract_strided_slice %62 {offsets = [15, 0], sizes = [241, 32], strides = [1, 1]} : vector<256x32xf32> to vector<241x32xf32>
    %65 = tpu.concatenate %64, %63 in 0 : vector<241x32xf32>, vector<15x32xf32> -> vector<256x32xf32>
    %c6_44 = arith.constant 6 : index
    %c0_45 = arith.constant 0 : index
    %c0_46 = arith.constant 0 : index
    %66 = vector.load %arg3[%c6_44, %c0_45, %c0_46] : memref<9x256x1xf32, #tpu.memory_space<vmem>>, vector<1x256x1xf32>
    %67 = vector.shape_cast %66 : vector<1x256x1xf32> to vector<256x1xf32>
    %68 = vector.broadcast %67 : vector<256x1xf32> to vector<256x32xf32>
    %69 = arith.mulf %65, %68 : vector<256x32xf32>
    %70 = arith.addf %59, %69 : vector<256x32xf32>
    %c7 = arith.constant 7 : index
    %c0_47 = arith.constant 0 : index
    %c0_48 = arith.constant 0 : index
    %71 = vector.load %arg2[%c7, %c0_47, %c0_48] : memref<9x32x32xbf16, #tpu.memory_space<vmem>>, vector<1x32x32xbf16>
    %72 = vector.shape_cast %71 : vector<1x32x32xbf16> to vector<32x32xbf16>
    %cst_49 = arith.constant dense<0.000000e+00> : vector<256x32xf32>
    %73 = tpu.matmul %1, %72, %cst_49 {dimension_numbers = #tpu.dot_dimension_numbers<[1], [0], [0], [1], [0, 0, 1, 1], [], []>} : vector<256x32xbf16>, vector<32x32xbf16>, vector<256x32xf32> -> vector<256x32xf32>
    %cst_50 = arith.constant 0.000000e+00 : f32
    %74 = vector.broadcast %cst_50 : f32 to vector<16x32xf32>
    %75 = vector.extract_strided_slice %73 {offsets = [16, 0], sizes = [240, 32], strides = [1, 1]} : vector<256x32xf32> to vector<240x32xf32>
    %76 = tpu.concatenate %75, %74 in 0 : vector<240x32xf32>, vector<16x32xf32> -> vector<256x32xf32>
    %c7_51 = arith.constant 7 : index
    %c0_52 = arith.constant 0 : index
    %c0_53 = arith.constant 0 : index
    %77 = vector.load %arg3[%c7_51, %c0_52, %c0_53] : memref<9x256x1xf32, #tpu.memory_space<vmem>>, vector<1x256x1xf32>
    %78 = vector.shape_cast %77 : vector<1x256x1xf32> to vector<256x1xf32>
    %79 = vector.broadcast %78 : vector<256x1xf32> to vector<256x32xf32>
    %80 = arith.mulf %76, %79 : vector<256x32xf32>
    %81 = arith.addf %70, %80 : vector<256x32xf32>
    %c8 = arith.constant 8 : index
    %c0_54 = arith.constant 0 : index
    %c0_55 = arith.constant 0 : index
    %82 = vector.load %arg2[%c8, %c0_54, %c0_55] : memref<9x32x32xbf16, #tpu.memory_space<vmem>>, vector<1x32x32xbf16>
    %83 = vector.shape_cast %82 : vector<1x32x32xbf16> to vector<32x32xbf16>
    %cst_56 = arith.constant dense<0.000000e+00> : vector<256x32xf32>
    %84 = tpu.matmul %1, %83, %cst_56 {dimension_numbers = #tpu.dot_dimension_numbers<[1], [0], [0], [1], [0, 0, 1, 1], [], []>} : vector<256x32xbf16>, vector<32x32xbf16>, vector<256x32xf32> -> vector<256x32xf32>
    %cst_57 = arith.constant 0.000000e+00 : f32
    %85 = vector.broadcast %cst_57 : f32 to vector<17x32xf32>
    %86 = vector.extract_strided_slice %84 {offsets = [17, 0], sizes = [239, 32], strides = [1, 1]} : vector<256x32xf32> to vector<239x32xf32>
    %87 = tpu.concatenate %86, %85 in 0 : vector<239x32xf32>, vector<17x32xf32> -> vector<256x32xf32>
    %c8_58 = arith.constant 8 : index
    %c0_59 = arith.constant 0 : index
    %c0_60 = arith.constant 0 : index
    %88 = vector.load %arg3[%c8_58, %c0_59, %c0_60] : memref<9x256x1xf32, #tpu.memory_space<vmem>>, vector<1x256x1xf32>
    %89 = vector.shape_cast %88 : vector<1x256x1xf32> to vector<256x1xf32>
    %90 = vector.broadcast %89 : vector<256x1xf32> to vector<256x32xf32>
    %91 = arith.mulf %87, %90 : vector<256x32xf32>
    %92 = arith.addf %81, %91 : vector<256x32xf32>
    %c0_61 = arith.constant 0 : index
    %c0_62 = arith.constant 0 : index
    %93 = vector.load %arg4[%c0_61, %c0_62] : memref<1x32xf32, #tpu.memory_space<vmem>>, vector<1x32xf32>
    %94 = vector.broadcast %93 : vector<1x32xf32> to vector<256x32xf32>
    %95 = arith.mulf %92, %94 : vector<256x32xf32>
    %c0_63 = arith.constant 0 : index
    %c0_64 = arith.constant 0 : index
    %96 = vector.load %arg5[%c0_63, %c0_64] : memref<1x32xf32, #tpu.memory_space<vmem>>, vector<1x32xf32>
    %97 = vector.broadcast %96 : vector<1x32xf32> to vector<256x32xf32>
    %98 = arith.addf %95, %97 : vector<256x32xf32>
    %cst_65 = arith.constant 0.000000e+00 : f32
    %99 = vector.broadcast %cst_65 : f32 to vector<256x32xf32>
    %100 = arith.maximumf %98, %99 : vector<256x32xf32>
    %c0_66 = arith.constant 0 : index
    %c0_67 = arith.constant 0 : index
    %c0_68 = arith.constant 0 : index
    %101 = vector.load %arg6[%c0_66, %c0_67, %c0_68] : memref<1x256x32xf32, #tpu.memory_space<vmem>>, vector<1x256x32xf32>
    %102 = vector.shape_cast %101 : vector<1x256x32xf32> to vector<256x32xf32>
    %103 = vector.shape_cast %100 : vector<256x32xf32> to vector<1x256x32xf32>
    tpu.vector_store %arg6[%c0_66, %c0_67, %c0_68], %103 {strides = array<i32>} : memref<1x256x32xf32, #tpu.memory_space<vmem>>, vector<1x256x32xf32>,
    return
  }
  func.func @transform_0(%arg0: i32) -> (i32, i32, i32) {
    %c0_i32 = arith.constant 0 : i32
    %c0_i32_0 = arith.constant 0 : i32
    %c0_i32_1 = arith.constant 0 : i32
    return %arg0, %c0_i32, %c0_i32_0 : i32, i32, i32
  }
  func.func @transform_1(%arg0: i32) -> (i32, i32, i32) {
    %c0_i32 = arith.constant 0 : i32
    %c0_i32_0 = arith.constant 0 : i32
    %c0_i32_1 = arith.constant 0 : i32
    %c0_i32_2 = arith.constant 0 : i32
    return %c0_i32, %c0_i32_0, %c0_i32_1 : i32, i32, i32
  }
  func.func @transform_2(%arg0: i32) -> (i32, i32, i32) {
    %c0_i32 = arith.constant 0 : i32
    %c0_i32_0 = arith.constant 0 : i32
    %c0_i32_1 = arith.constant 0 : i32
    %c0_i32_2 = arith.constant 0 : i32
    return %c0_i32, %c0_i32_0, %c0_i32_1 : i32, i32, i32
  }
  func.func @transform_3(%arg0: i32) -> (i32, i32) {
    %c0_i32 = arith.constant 0 : i32
    %c0_i32_0 = arith.constant 0 : i32
    %c0_i32_1 = arith.constant 0 : i32
    return %c0_i32, %c0_i32_0 : i32, i32
  }
  func.func @transform_4(%arg0: i32) -> (i32, i32) {
    %c0_i32 = arith.constant 0 : i32
    %c0_i32_0 = arith.constant 0 : i32
    %c0_i32_1 = arith.constant 0 : i32
    return %c0_i32, %c0_i32_0 : i32, i32
  }
  func.func @transform_5(%arg0: i32) -> (i32, i32, i32) {
    %c0_i32 = arith.constant 0 : i32
    %c0_i32_0 = arith.constant 0 : i32
    %c0_i32_1 = arith.constant 0 : i32
    return %arg0, %c0_i32, %c0_i32_0 : i32, i32, i32
  }
}

</mosaic_0001>

<llo_original>
// kernel: basic_conv2d.1
$region0: #{basic_conv2d.1}
  #allocation0 [shape = 'u32[]', space=smem, size = 0x4, offset = 0x4, fixed_abs, tag = 'smem constant byte address 0x4 - core index']
  #allocation1 [shape = 'u32[144,128]{1,0:T(1,128)}', space=vmem, size = 0x12000, scoped, tag = 'internal scratch']
  %s0 = inlined_call_operand.vmem [shape: bf16[2,256,32], index: 0, kind: input, shape index: {}]
  %s1 = inlined_call_operand.vmem [shape: bf16[9,32,32], index: 1, kind: input, shape index: {}]
  %s2 = inlined_call_operand.hbm [shape: f32[9,256,1], index: 2, kind: input, shape index: {}]
  %s3 = inlined_call_operand.vmem [shape: f32[1,32], index: 3, kind: input, shape index: {}]
  %s4 = inlined_call_operand.vmem [shape: f32[1,32], index: 4, kind: input, shape index: {}]
  %s5 = inlined_call_operand.hbm [shape: f32[2,256,32], index: 5, kind: output, shape index: {}]
  %s6 = sld [smem:[#allocation0]]
  $region57: #{basic_conv2d.1} parent=0
    _
  %s8 = ssub.s32 1, %s6
  %s9 = scalar_select 0, %s8, %s6
  $region1: #{basic_conv2d.1} parent=0
    #allocation2 [shape = 'u8[1179648]{0}', space=vmem, size = 0x120000, scoped, tag = 'input window, operand 2, single buffered']
    #allocation3 [shape = 's32[2]{0}', space=sflag, size = 0x8, scoped, tag = 'scoped memory for basic_conv2d.1']
    #allocation4 [shape = 's32[2]{0}', space=sflag, size = 0x8, scoped, tag = 'scoped memory for basic_conv2d.1']
    #allocation5 [shape = 'u8[262144]{0}', space=vmem, size = 0x40000, scoped, tag = 'output window, operand 0']
    %10 = vsyncpa [#allocation3], 0
    %11 = vsyncpa [#allocation4], 0
    %s12 = scalar_lea.sflag [#allocation4], 1
    %13 = vsyncpa %s12, 0
    loop: start=0, step=1, limit=4
    $region2: #{basic_conv2d.1} parent=1 // loop_pre_header
      _
    $region3: #{basic_conv2d.1} parent=1 // loop_header
      %s15 = sphi 0, %s19
      %p16 = scmp.ge.s32.totalorder %s15, 4
      %s25 = sphi 0, %s27
      %s28 = sphi 0, %s25
      %s29 = sphi 0, %s28
      %s45 = sphi 0, %s29
      %s49 = sphi 0, %s49
      %s51 = sphi 0, %s49
      %s52 = sphi 0, %s51
      %s66 = sphi 0, %s52
      %s70 = sphi 0, %s70
      %s72 = sphi 0, %s70
      %s73 = sphi 0, %s72
      %s87 = sphi 0, %s73
      %s91 = sphi 0, %s91
      %s93 = sphi 0, %s91
      %s94 = sphi 0, %s93
      %s108 = sphi 0, %s94
      %s112 = sphi 0, %s112
      %s114 = sphi 0, %s112
      %s115 = sphi 0, %s114
      %s129 = sphi 0, %s115
      %s135 = sphi 0, %s137
      %s138 = sphi 0, %s135
      %s139 = sphi 0, %s138
      %s155 = sphi 0, %s139
    $region4: #{basic_conv2d.1} parent=1 // loop_header_branch
      %18 = sbr.rel (%p16) target = $region8
    $region5: #{basic_conv2d.1} parent=1 // loop_body
      %s20 = ssub.s32 %s15, 1
      %s21 = ssub.s32 %s15, 2
      %s22 = sadd.s32 %s15, 1
      %s23 = ssub.s32 %s15, %s22
      %p24 = scmp.eq.s32.totalorder %s23, 0
      %s26 = sadd.s32 %s25, 1
      %s27 = scalar_select %p24, %s25, %s26
      %p30 = pneg %p24
      %p31 = scmp.eq.s32.totalorder %s15, 1
      %p32 = por %p30, %p31
      %p33 = scmp.ne.s32.totalorder %s25, %s28
      %p34 = scmp.eq.s32.totalorder %s15, 0
      %p35 = por %p33, %p34
      %p36 = scmp.ne.s32.totalorder %s25, %s28
      %p37 = scmp.eq.s32.totalorder %s20, 1
      %p38 = por %p36, %p37
      %p39 = scmp.ne.s32.totalorder %s28, %s29
      %p40 = scmp.eq.s32.totalorder %s20, 0
      %p41 = por %p39, %p40
      %p42 = scmp.ne.s32.totalorder %s28, %s29
      %p43 = scmp.eq.s32.totalorder %s21, 1
      %p44 = por %p42, %p43
      %p46 = scmp.ne.s32.totalorder %s29, %s45
      %p47 = scmp.eq.s32.totalorder %s21, 0
      %p48 = por %p46, %p47
      %s50 = sadd.s32 %s49, 1
      %p53 = scmp.eq.s32.totalorder %s15, 1
      %p54 = scmp.ne.s32.totalorder %s49, %s51
      %p55 = scmp.eq.s32.totalorder %s15, 0
      %p56 = por %p54, %p55
      %p57 = scmp.ne.s32.totalorder %s49, %s51
      %p58 = scmp.eq.s32.totalorder %s20, 1
      %p59 = por %p57, %p58
      %p60 = scmp.ne.s32.totalorder %s51, %s52
      %p61 = scmp.eq.s32.totalorder %s20, 0
      %p62 = por %p60, %p61
      %p63 = scmp.ne.s32.totalorder %s51, %s52
      %p64 = scmp.eq.s32.totalorder %s21, 1
      %p65 = por %p63, %p64
      %p67 = scmp.ne.s32.totalorder %s52, %s66
      %p68 = scmp.eq.s32.totalorder %s21, 0
      %p69 = por %p67, %p68
      %s71 = sadd.s32 %s70, 1
      %p74 = scmp.eq.s32.totalorder %s15, 1
      %p75 = scmp.ne.s32.totalorder %s70, %s72
      %p76 = scmp.eq.s32.totalorder %s15, 0
      %p77 = por %p75, %p76
      %p78 = scmp.ne.s32.totalorder %s70, %s72
      %p79 = scmp.eq.s32.totalorder %s20, 1
      %p80 = por %p78, %p79
      %p81 = scmp.ne.s32.totalorder %s72, %s73
      %p82 = scmp.eq.s32.totalorder %s20, 0
      %p83 = por %p81, %p82
      %p84 = scmp.ne.s32.totalorder %s72, %s73
      %p85 = scmp.eq.s32.totalorder %s21, 1
      %p86 = por %p84, %p85
      %p88 = scmp.ne.s32.totalorder %s73, %s87
      %p89 = scmp.eq.s32.totalorder %s21, 0
      %p90 = por %p88, %p89
      %s92 = sadd.s32 %s91, 1
      %p95 = scmp.eq.s32.totalorder %s15, 1
      %p96 = scmp.ne.s32.totalorder %s91, %s93
      %p97 = scmp.eq.s32.totalorder %s15, 0
      %p98 = por %p96, %p97
      %p99 = scmp.ne.s32.totalorder %s91, %s93
      %p100 = scmp.eq.s32.totalorder %s20, 1
      %p101 = por %p99, %p100
      %p102 = scmp.ne.s32.totalorder %s93, %s94
      %p103 = scmp.eq.s32.totalorder %s20, 0
      %p104 = por %p102, %p103
      %p105 = scmp.ne.s32.totalorder %s93, %s94
      %p106 = scmp.eq.s32.totalorder %s21, 1
      %p107 = por %p105, %p106
      %p109 = scmp.ne.s32.totalorder %s94, %s108
      %p110 = scmp.eq.s32.totalorder %s21, 0
      %p111 = por %p109, %p110
      %s113 = sadd.s32 %s112, 1
      %p116 = scmp.eq.s32.totalorder %s15, 1
      %p117 = scmp.ne.s32.totalorder %s112, %s114
      %p118 = scmp.eq.s32.totalorder %s15, 0
      %p119 = por %p117, %p118
      %p120 = scmp.ne.s32.totalorder %s112, %s114
      %p121 = scmp.eq.s32.totalorder %s20, 1
      %p122 = por %p120, %p121
      %p123 = scmp.ne.s32.totalorder %s114, %s115
      %p124 = scmp.eq.s32.totalorder %s20, 0
      %p125 = por %p123, %p124
      %p126 = scmp.ne.s32.totalorder %s114, %s115
      %p127 = scmp.eq.s32.totalorder %s21, 1
      %p128 = por %p126, %p127
      %p130 = scmp.ne.s32.totalorder %s115, %s129
      %p131 = scmp.eq.s32.totalorder %s21, 0
      %p132 = por %p130, %p131
      %s133 = ssub.s32 %s15, %s22
      %p134 = scmp.eq.s32.totalorder %s133, 0
      %s136 = sadd.s32 %s135, 1
      %s137 = scalar_select %p134, %s135, %s136
      %p140 = pneg %p134
      %p141 = scmp.eq.s32.totalorder %s15, 1
      %p142 = por %p140, %p141
      %p143 = scmp.ne.s32.totalorder %s135, %s138
      %p144 = scmp.eq.s32.totalorder %s15, 0
      %p145 = por %p143, %p144
      %p146 = scmp.ne.s32.totalorder %s135, %s138
      %p147 = scmp.eq.s32.totalorder %s20, 1
      %p148 = por %p146, %p147
      %p149 = scmp.ne.s32.totalorder %s138, %s139
      %p150 = scmp.eq.s32.totalorder %s20, 0
      %p151 = por %p149, %p150
      %p152 = scmp.ne.s32.totalorder %s138, %s139
      %p153 = scmp.eq.s32.totalorder %s21, 1
      %p154 = por %p152, %p153
      %p156 = scmp.ne.s32.totalorder %s139, %s155
      %p157 = scmp.eq.s32.totalorder %s21, 0
      %p158 = por %p156, %p157
      %p159 = scmp.le.s32.totalorder 1, %s15
      %p160 = scmp.lt.s32.totalorder %s15, 3
      %p161 = pnand %p159, %p160
      %p162 = pneg %p161
      // Predicated region
      $region9: #{basic_conv2d.1} parent=5 // pred_check
        _
      $region10: #{basic_conv2d.1} parent=5 // pred_check_branch
        %164 = sbr.rel (%p161) target = $region12
      $region11: #{basic_conv2d.1} parent=5 // pred_region
        %s165 = ssub.s32 %s15, 1
        // Predicated region
        $region13: #{basic_conv2d.1} parent=11 // pred_check
          %p166 = pneg %p62
        $region14: #{basic_conv2d.1} parent=11 // pred_check_branch
          %168 = sbr.rel (%p166) target = $region16
        $region15: #{basic_conv2d.1} parent=11 // pred_region
          _
        $region16: #{basic_conv2d.1} parent=11 // pred_fallthru
          _
        // Predicated region
        $region17: #{basic_conv2d.1} parent=11 // pred_check
          %p169 = pneg %p83
        $region18: #{basic_conv2d.1} parent=11 // pred_check_branch
          %171 = sbr.rel (%p169) target = $region20
        $region19: #{basic_conv2d.1} parent=11 // pred_region
          %s173 = ssub.s32 36864, 36864
          %174 = vsyncadd [#allocation3], %s173
          %s175 = sshll.u32 [#allocation2], 4
          %s176 = int_to_ptr.vmem [resolvable:$true] %s175
          %181 = dma.hbm_to_vmem [thread:$0]  %s2, 36864, %s176, [#allocation3], 128, 128, 8
        $region20: #{basic_conv2d.1} parent=11 // pred_fallthru
          _
        // Predicated region
        $region21: #{basic_conv2d.1} parent=11 // pred_check
          %p182 = pneg %p104
        $region22: #{basic_conv2d.1} parent=11 // pred_check_branch
          %184 = sbr.rel (%p182) target = $region24
        $region23: #{basic_conv2d.1} parent=11 // pred_region
          _
        $region24: #{basic_conv2d.1} parent=11 // pred_fallthru
          _
        // Predicated region
        $region25: #{basic_conv2d.1} parent=11 // pred_check
          %p185 = pneg %p125
        $region26: #{basic_conv2d.1} parent=11 // pred_check_branch
          %187 = sbr.rel (%p185) target = $region28
        $region27: #{basic_conv2d.1} parent=11 // pred_region
          _
        $region28: #{basic_conv2d.1} parent=11 // pred_fallthru
          _
      $region12: #{basic_conv2d.1} parent=5 // pred_fallthru
        _
      %p188 = scmp.lt.s32.totalorder %s15, 2
      // Predicated region
      $region29: #{basic_conv2d.1} parent=5 // pred_check
        %p189 = pneg %p188
      $region30: #{basic_conv2d.1} parent=5 // pred_check_branch
        %191 = sbr.rel (%p189) target = $region32
      $region31: #{basic_conv2d.1} parent=5 // pred_region
        // Predicated region
        $region33: #{basic_conv2d.1} parent=31 // pred_check
          %p192 = pneg %p35
        $region34: #{basic_conv2d.1} parent=31 // pred_check_branch
          %194 = sbr.rel (%p192) target = $region36
        $region35: #{basic_conv2d.1} parent=31 // pred_region
          %p195 = scmp.lt.s32.totalorder %s15, 1
          %s196 = scalar_select %p195, %s15, 1
          %s197 = smul.addr %s196, 32
          %s198 = smul.addr %s197, 4
          %s199 = scalar_lea.vmem %s0, %s198
        $region36: #{basic_conv2d.1} parent=31 // pred_fallthru
          _
      $region32: #{basic_conv2d.1} parent=5 // pred_fallthru
        _
      %p200 = scmp.le.s32.totalorder 1, %s15
      %p201 = scmp.lt.s32.totalorder %s15, 3
      %p202 = pnand %p200, %p201
      %p203 = pneg %p202
      // Predicated region
      $region37: #{basic_conv2d.1} parent=5 // pred_check
        _
      $region38: #{basic_conv2d.1} parent=5 // pred_check_branch
        %205 = sbr.rel (%p202) target = $region40
      $region39: #{basic_conv2d.1} parent=5 // pred_region
        %s206 = ssub.s32 %s15, 1
        // Predicated region
        $region41: #{basic_conv2d.1} parent=39 // pred_check
          %p207 = pneg %p83
        $region42: #{basic_conv2d.1} parent=39 // pred_check_branch
          %209 = sbr.rel (%p207) target = $region44
        $region43: #{basic_conv2d.1} parent=39 // pred_region
          %210 = dma.done [#allocation3], 36864
        $region44: #{basic_conv2d.1} parent=39 // pred_fallthru
          _
        %p211 = scmp.lt.s32.totalorder %s20, 1
        %s212 = scalar_select %p211, %s20, 1
        %s213 = smul.addr %s212, 32
        %s214 = smul.addr %s213, 4
        %s215 = scalar_lea.vmem %s0, %s214
        %p216 = pneg %p41
        %p217 = pneg %p38
        %p218 = pneg %p62
        %p219 = pneg %p59
        %p220 = pneg %p83
        %p221 = pneg %p80
        %p222 = pneg %p104
        %p223 = pneg %p101
        %p224 = pneg %p125
        %p225 = pneg %p122
        %p226 = pneg %p151
        %p227 = pneg %p148
        %s228 = sand.u32 %s138, 1
        %s229 = scalar_lea.sflag [#allocation4], %s228
        %s230 = sand.u32 %s138, 1
        %s231 = smul.addr %s230, 256
        %s232 = scalar_lea.vmem [#allocation5], %s231
        %p233 = scmp.lt.s32.totalorder %s20, 1
        %s234 = scalar_select %p233, %s20, 1
        %s235 = smul.addr %s234, 32
        %s236 = smul.addr %s235, 4
        %s237 = scalar_lea.vmem %s0, %s236
        %v239 = vld [vmem:[%s237] sm:$0xf]
        %v240 = vld [vmem:[%s237 + $0x4] sm:$0xf]
        %v241 = vld [vmem:[%s237 + $0x8] sm:$0xf]
        %v242 = vld [vmem:[%s237 + $0xc] sm:$0xf]
        %v243 = vld [vmem:[%s237 + $0x10] sm:$0xf]
        %v244 = vld [vmem:[%s237 + $0x14] sm:$0xf]
        %v245 = vld [vmem:[%s237 + $0x18] sm:$0xf]
        %v246 = vld [vmem:[%s237 + $0x1c] sm:$0xf]
        %v247 = vld [vmem:[%s237 + $0x20] sm:$0xf]
        %v248 = vld [vmem:[%s237 + $0x24] sm:$0xf]
        %v249 = vld [vmem:[%s237 + $0x28] sm:$0xf]
        %v250 = vld [vmem:[%s237 + $0x2c] sm:$0xf]
        %v251 = vld [vmem:[%s237 + $0x30] sm:$0xf]
        %v252 = vld [vmem:[%s237 + $0x34] sm:$0xf]
        %v253 = vld [vmem:[%s237 + $0x38] sm:$0xf]
        %v254 = vld [vmem:[%s237 + $0x3c] sm:$0xf]
        %v255 = vld [vmem:[%s237 + $0x40] sm:$0xf]
        %v256 = vld [vmem:[%s237 + $0x44] sm:$0xf]
        %v257 = vld [vmem:[%s237 + $0x48] sm:$0xf]
        %v258 = vld [vmem:[%s237 + $0x4c] sm:$0xf]
        %v259 = vld [vmem:[%s237 + $0x50] sm:$0xf]
        %v260 = vld [vmem:[%s237 + $0x54] sm:$0xf]
        %v261 = vld [vmem:[%s237 + $0x58] sm:$0xf]
        %v262 = vld [vmem:[%s237 + $0x5c] sm:$0xf]
        %v263 = vld [vmem:[%s237 + $0x60] sm:$0xf]
        %v264 = vld [vmem:[%s237 + $0x64] sm:$0xf]
        %v265 = vld [vmem:[%s237 + $0x68] sm:$0xf]
        %v266 = vld [vmem:[%s237 + $0x6c] sm:$0xf]
        %v267 = vld [vmem:[%s237 + $0x70] sm:$0xf]
        %v268 = vld [vmem:[%s237 + $0x74] sm:$0xf]
        %v269 = vld [vmem:[%s237 + $0x78] sm:$0xf]
        %v270 = vld [vmem:[%s237 + $0x7c] sm:$0xf]
        %v271 = vld [vmem:[%s1] sm:$0xf]
        %v272 = vld [vmem:[%s1 + $0x4] sm:$0xf]
        %v273 = vld [vmem:[%s1 + $0x8] sm:$0xf]
        %v274 = vld [vmem:[%s1 + $0xc] sm:$0xf]
        %v307 = vunpack.c.l.b16 %v239
        %v308 = vunpack.c.l.b16 %v240
        %v309 = vunpack.c.l.b16 %v241
        %v310 = vunpack.c.l.b16 %v242
        %v311 = vunpack.c.l.b16 %v243
        %v312 = vunpack.c.l.b16 %v244
        %v313 = vunpack.c.l.b16 %v245
        %v314 = vunpack.c.l.b16 %v246
        %v315 = vunpack.c.l.b16 %v247
        %v316 = vunpack.c.l.b16 %v248
        %v317 = vunpack.c.l.b16 %v249
        %v318 = vunpack.c.l.b16 %v250
        %v319 = vunpack.c.l.b16 %v251
        %v320 = vunpack.c.l.b16 %v252
        %v321 = vunpack.c.l.b16 %v253
        %v322 = vunpack.c.l.b16 %v254
        %v323 = vunpack.c.l.b16 %v255
        %v324 = vunpack.c.l.b16 %v256
        %v325 = vunpack.c.l.b16 %v257
        %v326 = vunpack.c.l.b16 %v258
        %v327 = vunpack.c.l.b16 %v259
        %v328 = vunpack.c.l.b16 %v260
        %v329 = vunpack.c.l.b16 %v261
        %v330 = vunpack.c.l.b16 %v262
        %v331 = vunpack.c.l.b16 %v263
        %v332 = vunpack.c.l.b16 %v264
        %v333 = vunpack.c.l.b16 %v265
        %v334 = vunpack.c.l.b16 %v266
        %v335 = vunpack.c.l.b16 %v267
        %v336 = vunpack.c.l.b16 %v268
        %v337 = vunpack.c.l.b16 %v269
        %v338 = vunpack.c.l.b16 %v270
        %v339 = vpack.c.b16 %v308, %v307
        %v340 = vpack.c.b16 %v310, %v309
        %v341 = vpack.c.b16 %v312, %v311
        %v342 = vpack.c.b16 %v314, %v313
        %v343 = vpack.c.b16 %v316, %v315
        %v344 = vpack.c.b16 %v318, %v317
        %v345 = vpack.c.b16 %v320, %v319
        %v346 = vpack.c.b16 %v322, %v321
        %v347 = vpack.c.b16 %v324, %v323
        %v348 = vpack.c.b16 %v326, %v325
        %v349 = vpack.c.b16 %v328, %v327
        %v350 = vpack.c.b16 %v330, %v329
        %v351 = vpack.c.b16 %v332, %v331
        %v352 = vpack.c.b16 %v334, %v333
        %v353 = vpack.c.b16 %v336, %v335
        %v354 = vpack.c.b16 %v338, %v337
        %v359 = vunpack.c.l.b16 %v271
        %v360 = vunpack.c.l.b16 %v272
        %v361 = vunpack.c.l.b16 %v273
        %v362 = vunpack.c.l.b16 %v274
        %v363 = vpack.c.b16 %v360, %v359
        %v364 = vpack.c.b16 %v362, %v361
        %vm367 = vcmask 261120
        %v369 = vsel %vm367, %v339, 0
        %v372 = vsel %vm367, %v340, 0
        %v375 = vsel %vm367, %v341, 0
        %v378 = vsel %vm367, %v342, 0
        %v381 = vsel %vm367, %v343, 0
        %v384 = vsel %vm367, %v344, 0
        %v387 = vsel %vm367, %v345, 0
        %v390 = vsel %vm367, %v346, 0
        %v393 = vsel %vm367, %v347, 0
        %v396 = vsel %vm367, %v348, 0
        %v399 = vsel %vm367, %v349, 0
        %v402 = vsel %vm367, %v350, 0
        %v405 = vsel %vm367, %v351, 0
        %v408 = vsel %vm367, %v352, 0
        %v411 = vsel %vm367, %v353, 0
        %v414 = vsel %vm367, %v354, 0
        %416 = vmatprep.subr.bf16.mxu0 0
        %417 = vmatpush1.bf16.msra.mxu0 %v363
        %418 = vmatprep.subr.bf16.mxu0 0
        %419 = vmatpush1.bf16.msra.mxu0 %v364
        %420 = vmatprep.subr.bf16.mxu0 0
        %421 = vmatpush1.bf16.msra.mxu0 0
        %422 = vmatprep.subr.bf16.mxu0 0
        %423 = vmatpush1.bf16.msra.mxu0 0
        %424 = vmatprep.subr.bf16.mxu0 0
        %425 = vmatpush1.bf16.msra.mxu0 0
        %426 = vmatprep.subr.bf16.mxu0 0
        %427 = vmatpush1.bf16.msra.mxu0 0
        %428 = vmatprep.subr.bf16.mxu0 0
        %429 = vmatpush1.bf16.msra.mxu0 0
        %430 = vmatprep.subr.bf16.mxu0 0
        %431 = vmatpush1.bf16.msra.mxu0 0
        %432 = vmatprep.subr.bf16.mxu0 0
        %433 = vmatpush1.bf16.msra.mxu0 0
        %434 = vmatprep.subr.bf16.mxu0 0
        %435 = vmatpush1.bf16.msra.mxu0 0
        %436 = vmatprep.subr.bf16.mxu0 0
        %437 = vmatpush1.bf16.msra.mxu0 0
        %438 = vmatprep.subr.bf16.mxu0 0
        %439 = vmatpush1.bf16.msra.mxu0 0
        %440 = vmatprep.subr.bf16.mxu0 0
        %441 = vmatpush1.bf16.msra.mxu0 0
        %442 = vmatprep.subr.bf16.mxu0 0
        %443 = vmatpush1.bf16.msra.mxu0 0
        %444 = vmatprep.subr.bf16.mxu0 0
        %445 = vmatpush1.bf16.msra.mxu0 0
        %446 = vmatprep.subr.bf16.mxu0 0
        %447 = vmatpush1.bf16.msra.mxu0 0
        %448 = vmatprep.mubr.bf16.mxu0 0
        %449 = vmatmul.mubr.bf16.gmra.mrb[0].mxu0 %v369
        %v450 = vpop.f32.mrb[0].mxu0
        %v451 = vadd.f32 0.0, %v450
        %v452 = vpop.f32.mrb[0].mxu0
        %v453 = vpop.f32.mrb[0].mxu0
        %v454 = vadd.f32 0.0, %v453
        %v455 = vpop.f32.mrb[0].mxu0
        %456 = vmatprep.mubr.bf16.mxu0 0
        %457 = vmatmul.mubr.bf16.gmra.mrb[0].mxu0 %v372
        %v458 = vpop.f32.mrb[0].mxu0
        %v459 = vadd.f32 0.0, %v458
        %v460 = vpop.f32.mrb[0].mxu0
        %v461 = vpop.f32.mrb[0].mxu0
        %v462 = vadd.f32 0.0, %v461
        %v463 = vpop.f32.mrb[0].mxu0
        %464 = vmatprep.mubr.bf16.mxu0 0
        %465 = vmatmul.mubr.bf16.gmra.mrb[0].mxu0 %v375
        %v466 = vpop.f32.mrb[0].mxu0
        %v467 = vadd.f32 0.0, %v466
        %v468 = vpop.f32.mrb[0].mxu0
        %v469 = vpop.f32.mrb[0].mxu0
        %v470 = vadd.f32 0.0, %v469
        %v471 = vpop.f32.mrb[0].mxu0
        %472 = vmatprep.mubr.bf16.mxu0 0
        %473 = vmatmul.mubr.bf16.gmra.mrb[0].mxu0 %v378
        %v474 = vpop.f32.mrb[0].mxu0
        %v475 = vadd.f32 0.0, %v474
        %v476 = vpop.f32.mrb[0].mxu0
        %v477 = vpop.f32.mrb[0].mxu0
        %v478 = vadd.f32 0.0, %v477
        %v479 = vpop.f32.mrb[0].mxu0
        %480 = vmatprep.mubr.bf16.mxu0 0
        %481 = vmatmul.mubr.bf16.gmra.mrb[0].mxu0 %v381
        %v482 = vpop.f32.mrb[0].mxu0
        %v483 = vadd.f32 0.0, %v482
        %v484 = vpop.f32.mrb[0].mxu0
        %v485 = vpop.f32.mrb[0].mxu0
        %v486 = vadd.f32 0.0, %v485
        %v487 = vpop.f32.mrb[0].mxu0
        %488 = vmatprep.mubr.bf16.mxu0 0
        %489 = vmatmul.mubr.bf16.gmra.mrb[0].mxu0 %v384
        %v490 = vpop.f32.mrb[0].mxu0
        %v491 = vadd.f32 0.0, %v490
        %v492 = vpop.f32.mrb[0].mxu0
        %v493 = vpop.f32.mrb[0].mxu0
        %v494 = vadd.f32 0.0, %v493
        %v495 = vpop.f32.mrb[0].mxu0
        %496 = vmatprep.mubr.bf16.mxu0 0
        %497 = vmatmul.mubr.bf16.gmra.mrb[0].mxu0 %v387
        %v498 = vpop.f32.mrb[0].mxu0
        %v499 = vadd.f32 0.0, %v498
        %v500 = vpop.f32.mrb[0].mxu0
        %v501 = vpop.f32.mrb[0].mxu0
        %v502 = vadd.f32 0.0, %v501
        %v503 = vpop.f32.mrb[0].mxu0
        %504 = vmatprep.mubr.bf16.mxu0 0
        %505 = vmatmul.mubr.bf16.gmra.mrb[0].mxu0 %v390
        %v506 = vpop.f32.mrb[0].mxu0
        %v507 = vadd.f32 0.0, %v506
        %v508 = vpop.f32.mrb[0].mxu0
        %v509 = vpop.f32.mrb[0].mxu0
        %v510 = vadd.f32 0.0, %v509
        %v511 = vpop.f32.mrb[0].mxu0
        %512 = vmatprep.mubr.bf16.mxu0 0
        %513 = vmatmul.mubr.bf16.gmra.mrb[0].mxu0 %v393
        %v514 = vpop.f32.mrb[0].mxu0
        %v515 = vadd.f32 0.0, %v514
        %v516 = vpop.f32.mrb[0].mxu0
        %v517 = vpop.f32.mrb[0].mxu0
        %v518 = vadd.f32 0.0, %v517
        %v519 = vpop.f32.mrb[0].mxu0
        %520 = vmatprep.mubr.bf16.mxu0 0
        %521 = vmatmul.mubr.bf16.gmra.mrb[0].mxu0 %v396
        %v522 = vpop.f32.mrb[0].mxu0
        %v523 = vadd.f32 0.0, %v522
        %v524 = vpop.f32.mrb[0].mxu0
        %v525 = vpop.f32.mrb[0].mxu0
        %v526 = vadd.f32 0.0, %v525
        %v527 = vpop.f32.mrb[0].mxu0
        %528 = vmatprep.mubr.bf16.mxu0 0
        %529 = vmatmul.mubr.bf16.gmra.mrb[0].mxu0 %v399
        %v530 = vpop.f32.mrb[0].mxu0
        %v531 = vadd.f32 0.0, %v530
        %v532 = vpop.f32.mrb[0].mxu0
        %v533 = vpop.f32.mrb[0].mxu0
        %v534 = vadd.f32 0.0, %v533
        %v535 = vpop.f32.mrb[0].mxu0
        %536 = vmatprep.mubr.bf16.mxu0 0
        %537 = vmatmul.mubr.bf16.gmra.mrb[0].mxu0 %v402
        %v538 = vpop.f32.mrb[0].mxu0
        %v539 = vadd.f32 0.0, %v538
        %v540 = vpop.f32.mrb[0].mxu0
        %v541 = vpop.f32.mrb[0].mxu0
        %v542 = vadd.f32 0.0, %v541
        %v543 = vpop.f32.mrb[0].mxu0
        %544 = vmatprep.mubr.bf16.mxu0 0
        %545 = vmatmul.mubr.bf16.gmra.mrb[0].mxu0 %v405
        %v546 = vpop.f32.mrb[0].mxu0
        %v547 = vadd.f32 0.0, %v546
        %v548 = vpop.f32.mrb[0].mxu0
        %v549 = vpop.f32.mrb[0].mxu0
        %v550 = vadd.f32 0.0, %v549
        %v551 = vpop.f32.mrb[0].mxu0
        %552 = vmatprep.mubr.bf16.mxu0 0
        %553 = vmatmul.mubr.bf16.gmra.mrb[0].mxu0 %v408
        %v554 = vpop.f32.mrb[0].mxu0
        %v555 = vadd.f32 0.0, %v554
        %v556 = vpop.f32.mrb[0].mxu0
        %v557 = vpop.f32.mrb[0].mxu0
        %v558 = vadd.f32 0.0, %v557
        %v559 = vpop.f32.mrb[0].mxu0
        %560 = vmatprep.mubr.bf16.mxu0 0
        %561 = vmatmul.mubr.bf16.gmra.mrb[0].mxu0 %v411
        %v562 = vpop.f32.mrb[0].mxu0
        %v563 = vadd.f32 0.0, %v562
        %v564 = vpop.f32.mrb[0].mxu0
        %v565 = vpop.f32.mrb[0].mxu0
        %v566 = vadd.f32 0.0, %v565
        %v567 = vpop.f32.mrb[0].mxu0
        %568 = vmatprep.mubr.bf16.mxu0 0
        %569 = vmatmul.mubr.bf16.gmra.mrb[0].mxu0 %v414
        %v570 = vpop.f32.mrb[0].mxu0
        %v571 = vpop.f32.mrb[0].mxu0
        %v572 = vpop.f32.mrb[0].mxu0
        %v573 = vpop.f32.mrb[0].mxu0
        %574 = vdwg.mxu0
        %vm605 = vcmask 1040384
        %v606 = vrot.slane %v451, 7
        %v607 = vrot.slane %v454, 7
        %v608 = vsel %vm605, %v606, %v607
        %v609 = vrot.slane %v459, 7
        %v610 = vsel %vm605, %v607, %v609
        %v611 = vrot.slane %v462, 7
        %v612 = vsel %vm605, %v609, %v611
        %v613 = vrot.slane %v467, 7
        %v614 = vsel %vm605, %v611, %v613
        %v615 = vrot.slane %v470, 7
        %v616 = vsel %vm605, %v613, %v615
        %v617 = vrot.slane %v475, 7
        %v618 = vsel %vm605, %v615, %v617
        %v619 = vrot.slane %v478, 7
        %v620 = vsel %vm605, %v617, %v619
        %v621 = vrot.slane %v483, 7
        %v622 = vsel %vm605, %v619, %v621
        %v623 = vrot.slane %v486, 7
        %v624 = vsel %vm605, %v621, %v623
        %v625 = vrot.slane %v491, 7
        %v626 = vsel %vm605, %v623, %v625
        %v627 = vrot.slane %v494, 7
        %v628 = vsel %vm605, %v625, %v627
        %v629 = vrot.slane %v499, 7
        %v630 = vsel %vm605, %v627, %v629
        %v631 = vrot.slane %v502, 7
        %v632 = vsel %vm605, %v629, %v631
        %v633 = vrot.slane %v507, 7
        %v634 = vsel %vm605, %v631, %v633
        %v635 = vrot.slane %v510, 7
        %v636 = vsel %vm605, %v633, %v635
        %v637 = vrot.slane %v515, 7
        %v638 = vsel %vm605, %v635, %v637
        %v639 = vrot.slane %v518, 7
        %v640 = vsel %vm605, %v637, %v639
        %v641 = vrot.slane %v523, 7
        %v642 = vsel %vm605, %v639, %v641
        %v643 = vrot.slane %v526, 7
        %v644 = vsel %vm605, %v641, %v643
        %v645 = vrot.slane %v531, 7
        %v646 = vsel %vm605, %v643, %v645
        %v647 = vrot.slane %v534, 7
        %v648 = vsel %vm605, %v645, %v647
        %v649 = vrot.slane %v539, 7
        %v650 = vsel %vm605, %v647, %v649
        %v651 = vrot.slane %v542, 7
        %v652 = vsel %vm605, %v649, %v651
        %v653 = vrot.slane %v547, 7
        %v654 = vsel %vm605, %v651, %v653
        %v655 = vrot.slane %v550, 7
        %v656 = vsel %vm605, %v653, %v655
        %v657 = vrot.slane %v555, 7
        %v658 = vsel %vm605, %v655, %v657
        %v659 = vrot.slane %v558, 7
        %v660 = vsel %vm605, %v657, %v659
        %v661 = vrot.slane %v563, 7
        %v662 = vsel %vm605, %v659, %v661
        %v663 = vrot.slane %v566, 7
        %v664 = vsel %vm605, %v661, %v663
        %v695 = vsel %vm605, 0.0, %v606
        %v696 = vld [vmem:[#allocation2] sm:$0xff]
        %v697 = vld [vmem:[#allocation2 + $0x8] sm:$0xff]
        %v698 = vld [vmem:[#allocation2 + $0x10] sm:$0xff]
        %v699 = vld [vmem:[#allocation2 + $0x18] sm:$0xff]
        %v700 = vld [vmem:[#allocation2 + $0x20] sm:$0xff]
        %v701 = vld [vmem:[#allocation2 + $0x28] sm:$0xff]
        %v702 = vld [vmem:[#allocation2 + $0x30] sm:$0xff]
        %v703 = vld [vmem:[#allocation2 + $0x38] sm:$0xff]
        %v704 = vld [vmem:[#allocation2 + $0x40] sm:$0xff]
        %v705 = vld [vmem:[#allocation2 + $0x48] sm:$0xff]
        %v706 = vld [vmem:[#allocation2 + $0x50] sm:$0xff]
        %v707 = vld [vmem:[#allocation2 + $0x58] sm:$0xff]
        %v708 = vld [vmem:[#allocation2 + $0x60] sm:$0xff]
        %v709 = vld [vmem:[#allocation2 + $0x68] sm:$0xff]
        %v710 = vld [vmem:[#allocation2 + $0x70] sm:$0xff]
        %v711 = vld [vmem:[#allocation2 + $0x78] sm:$0xff]
        %v712 = vld [vmem:[#allocation2 + $0x80] sm:$0xff]
        %v713 = vld [vmem:[#allocation2 + $0x88] sm:$0xff]
        %v714 = vld [vmem:[#allocation2 + $0x90] sm:$0xff]
        %v715 = vld [vmem:[#allocation2 + $0x98] sm:$0xff]
        %v716 = vld [vmem:[#allocation2 + $0xa0] sm:$0xff]
        %v717 = vld [vmem:[#allocation2 + $0xa8] sm:$0xff]
        %v718 = vld [vmem:[#allocation2 + $0xb0] sm:$0xff]
        %v719 = vld [vmem:[#allocation2 + $0xb8] sm:$0xff]
        %v720 = vld [vmem:[#allocation2 + $0xc0] sm:$0xff]
        %v721 = vld [vmem:[#allocation2 + $0xc8] sm:$0xff]
        %v722 = vld [vmem:[#allocation2 + $0xd0] sm:$0xff]
        %v723 = vld [vmem:[#allocation2 + $0xd8] sm:$0xff]
        %v724 = vld [vmem:[#allocation2 + $0xe0] sm:$0xff]
        %v725 = vld [vmem:[#allocation2 + $0xe8] sm:$0xff]
        %v726 = vld [vmem:[#allocation2 + $0xf0] sm:$0xff]
        %v727 = vld [vmem:[#allocation2 + $0xf8] sm:$0xff]
        %729 = vset.pattern.permute.xlu0 0
        %730 = vperm.xlu0 %729, %v696
        %v731 = vpop.permute.xlu0 %730
        %734 = vset.pattern.permute.xlu0 0
        %735 = vperm.xlu0 %734, %v697
        %v736 = vpop.permute.xlu0 %735
        %739 = vset.pattern.permute.xlu0 0
        %740 = vperm.xlu0 %739, %v698
        %v741 = vpop.permute.xlu0 %740
        %744 = vset.pattern.permute.xlu0 0
        %745 = vperm.xlu0 %744, %v699
        %v746 = vpop.permute.xlu0 %745
        %749 = vset.pattern.permute.xlu0 0
        %750 = vperm.xlu0 %749, %v700
        %v751 = vpop.permute.xlu0 %750
        %754 = vset.pattern.permute.xlu0 0
        %755 = vperm.xlu0 %754, %v701
        %v756 = vpop.permute.xlu0 %755
        %759 = vset.pattern.permute.xlu0 0
        %760 = vperm.xlu0 %759, %v702
        %v761 = vpop.permute.xlu0 %760
        %764 = vset.pattern.permute.xlu0 0
        %765 = vperm.xlu0 %764, %v703
        %v766 = vpop.permute.xlu0 %765
        %769 = vset.pattern.permute.xlu0 0
        %770 = vperm.xlu0 %769, %v704
        %v771 = vpop.permute.xlu0 %770
        %774 = vset.pattern.permute.xlu0 0
        %775 = vperm.xlu0 %774, %v705
        %v776 = vpop.permute.xlu0 %775
        %779 = vset.pattern.permute.xlu0 0
        %780 = vperm.xlu0 %779, %v706
        %v781 = vpop.permute.xlu0 %780
        %784 = vset.pattern.permute.xlu0 0
        %785 = vperm.xlu0 %784, %v707
        %v786 = vpop.permute.xlu0 %785
        %789 = vset.pattern.permute.xlu0 0
        %790 = vperm.xlu0 %789, %v708
        %v791 = vpop.permute.xlu0 %790
        %794 = vset.pattern.permute.xlu0 0
        %795 = vperm.xlu0 %794, %v709
        %v796 = vpop.permute.xlu0 %795
        %799 = vset.pattern.permute.xlu0 0
        %800 = vperm.xlu0 %799, %v710
        %v801 = vpop.permute.xlu0 %800
        %804 = vset.pattern.permute.xlu0 0
        %805 = vperm.xlu0 %804, %v711
        %v806 = vpop.permute.xlu0 %805
        %809 = vset.pattern.permute.xlu0 0
        %810 = vperm.xlu0 %809, %v712
        %v811 = vpop.permute.xlu0 %810
        %814 = vset.pattern.permute.xlu0 0
        %815 = vperm.xlu0 %814, %v713
        %v816 = vpop.permute.xlu0 %815
        %819 = vset.pattern.permute.xlu0 0
        %820 = vperm.xlu0 %819, %v714
        %v821 = vpop.permute.xlu0 %820
        %824 = vset.pattern.permute.xlu0 0
        %825 = vperm.xlu0 %824, %v715
        %v826 = vpop.permute.xlu0 %825
        %829 = vset.pattern.permute.xlu0 0
        %830 = vperm.xlu0 %829, %v716
        %v831 = vpop.permute.xlu0 %830
        %834 = vset.pattern.permute.xlu0 0
        %835 = vperm.xlu0 %834, %v717
        %v836 = vpop.permute.xlu0 %835
        %839 = vset.pattern.permute.xlu0 0
        %840 = vperm.xlu0 %839, %v718
        %v841 = vpop.permute.xlu0 %840
        %844 = vset.pattern.permute.xlu0 0
        %845 = vperm.xlu0 %844, %v719
        %v846 = vpop.permute.xlu0 %845
        %849 = vset.pattern.permute.xlu0 0
        %850 = vperm.xlu0 %849, %v720
        %v851 = vpop.permute.xlu0 %850
        %854 = vset.pattern.permute.xlu0 0
        %855 = vperm.xlu0 %854, %v721
        %v856 = vpop.permute.xlu0 %855
        %859 = vset.pattern.permute.xlu0 0
        %860 = vperm.xlu0 %859, %v722
        %v861 = vpop.permute.xlu0 %860
        %864 = vset.pattern.permute.xlu0 0
        %865 = vperm.xlu0 %864, %v723
        %v866 = vpop.permute.xlu0 %865
        %869 = vset.pattern.permute.xlu0 0
        %870 = vperm.xlu0 %869, %v724
        %v871 = vpop.permute.xlu0 %870
        %874 = vset.pattern.permute.xlu0 0
        %875 = vperm.xlu0 %874, %v725
        %v876 = vpop.permute.xlu0 %875
        %879 = vset.pattern.permute.xlu0 0
        %880 = vperm.xlu0 %879, %v726
        %v881 = vpop.permute.xlu0 %880
        %884 = vset.pattern.permute.xlu0 0
        %885 = vperm.xlu0 %884, %v727
        %v886 = vpop.permute.xlu0 %885
        %v888 = vmul.f32 %v731, 0.0
        %v889 = vmul.f32 %v736, 0.0
        %v890 = vmul.f32 %v695, %v741
        %v891 = vmul.f32 %v608, %v746
        %v892 = vmul.f32 %v610, %v751
        %v893 = vmul.f32 %v612, %v756
        %v894 = vmul.f32 %v614, %v761
        %v895 = vmul.f32 %v616, %v766
        %v896 = vmul.f32 %v618, %v771
        %v897 = vmul.f32 %v620, %v776
        %v898 = vmul.f32 %v622, %v781
        %v899 = vmul.f32 %v624, %v786
        %v900 = vmul.f32 %v626, %v791
        %v901 = vmul.f32 %v628, %v796
        %v902 = vmul.f32 %v630, %v801
        %v903 = vmul.f32 %v632, %v806
        %v904 = vmul.f32 %v634, %v811
        %v905 = vmul.f32 %v636, %v816
        %v906 = vmul.f32 %v638, %v821
        %v907 = vmul.f32 %v640, %v826
        %v908 = vmul.f32 %v642, %v831
        %v909 = vmul.f32 %v644, %v836
        %v910 = vmul.f32 %v646, %v841
        %v911 = vmul.f32 %v648, %v846
        %v912 = vmul.f32 %v650, %v851
        %v913 = vmul.f32 %v652, %v856
        %v914 = vmul.f32 %v654, %v861
        %v915 = vmul.f32 %v656, %v866
        %v916 = vmul.f32 %v658, %v871
        %v917 = vmul.f32 %v660, %v876
        %v918 = vmul.f32 %v662, %v881
        %v919 = vmul.f32 %v664, %v886
        %s920 = scalar_lea.vmem %s1, 16
        %v921 = vld [vmem:[%s920] sm:$0xf]
        %v922 = vld [vmem:[%s920 + $0x4] sm:$0xf]
        %v923 = vld [vmem:[%s920 + $0x8] sm:$0xf]
        %v924 = vld [vmem:[%s920 + $0xc] sm:$0xf]
        %v929 = vunpack.c.l.b16 %v921
        %v930 = vunpack.c.l.b16 %v922
        %v931 = vunpack.c.l.b16 %v923
        %v932 = vunpack.c.l.b16 %v924
        %v933 = vpack.c.b16 %v930, %v929
        %v934 = vpack.c.b16 %v932, %v931
        %937 = vmatprep.subr.bf16.mxu0 0
        %938 = vmatpush1.bf16.msra.mxu0 %v933
        %939 = vmatprep.subr.bf16.mxu0 0
        %940 = vmatpush1.bf16.msra.mxu0 %v934
        %941 = vmatprep.subr.bf16.mxu0 0
        %942 = vmatpush1.bf16.msra.mxu0 0
        %943 = vmatprep.subr.bf16.mxu0 0
        %944 = vmatpush1.bf16.msra.mxu0 0
        %945 = vmatprep.subr.bf16.mxu0 0
        %946 = vmatpush1.bf16.msra.mxu0 0
        %947 = vmatprep.subr.bf16.mxu0 0
        %948 = vmatpush1.bf16.msra.mxu0 0
        %949 = vmatprep.subr.bf16.mxu0 0
        %950 = vmatpush1.bf16.msra.mxu0 0
        %951 = vmatprep.subr.bf16.mxu0 0
        %952 = vmatpush1.bf16.msra.mxu0 0
        %953 = vmatprep.subr.bf16.mxu0 0
        %954 = vmatpush1.bf16.msra.mxu0 0
        %955 = vmatprep.subr.bf16.mxu0 0
        %956 = vmatpush1.bf16.msra.mxu0 0
        %957 = vmatprep.subr.bf16.mxu0 0
        %958 = vmatpush1.bf16.msra.mxu0 0
        %959 = vmatprep.subr.bf16.mxu0 0
        %960 = vmatpush1.bf16.msra.mxu0 0
        %961 = vmatprep.subr.bf16.mxu0 0
        %962 = vmatpush1.bf16.msra.mxu0 0
        %963 = vmatprep.subr.bf16.mxu0 0
        %964 = vmatpush1.bf16.msra.mxu0 0
        %965 = vmatprep.subr.bf16.mxu0 0
        %966 = vmatpush1.bf16.msra.mxu0 0
        %967 = vmatprep.subr.bf16.mxu0 0
        %968 = vmatpush1.bf16.msra.mxu0 0
        %969 = vmatprep.mubr.bf16.mxu0 0
        %970 = vmatmul.mubr.bf16.gmra.mrb[0].mxu0 %v369
        %v971 = vpop.f32.mrb[0].mxu0
        %v972 = vadd.f32 0.0, %v971
        %v973 = vpop.f32.mrb[0].mxu0
        %v974 = vpop.f32.mrb[0].mxu0
        %v975 = vadd.f32 0.0, %v974
        %v976 = vpop.f32.mrb[0].mxu0
        %977 = vmatprep.mubr.bf16.mxu0 0
        %978 = vmatmul.mubr.bf16.gmra.mrb[0].mxu0 %v372
        %v979 = vpop.f32.mrb[0].mxu0
        %v980 = vadd.f32 0.0, %v979
        %v981 = vpop.f32.mrb[0].mxu0
        %v982 = vpop.f32.mrb[0].mxu0
        %v983 = vadd.f32 0.0, %v982
        %v984 = vpop.f32.mrb[0].mxu0
        %985 = vmatprep.mubr.bf16.mxu0 0
        %986 = vmatmul.mubr.bf16.gmra.mrb[0].mxu0 %v375
        %v987 = vpop.f32.mrb[0].mxu0
        %v988 = vadd.f32 0.0, %v987
        %v989 = vpop.f32.mrb[0].mxu0
        %v990 = vpop.f32.mrb[0].mxu0
        %v991 = vadd.f32 0.0, %v990
        %v992 = vpop.f32.mrb[0].mxu0
        %993 = vmatprep.mubr.bf16.mxu0 0
        %994 = vmatmul.mubr.bf16.gmra.mrb[0].mxu0 %v378
        %v995 = vpop.f32.mrb[0].mxu0
        %v996 = vadd.f32 0.0, %v995
        %v997 = vpop.f32.mrb[0].mxu0
        %v998 = vpop.f32.mrb[0].mxu0
        %v999 = vadd.f32 0.0, %v998
        %v1000 = vpop.f32.mrb[0].mxu0
        %1001 = vmatprep.mubr.bf16.mxu0 0
        %1002 = vmatmul.mubr.bf16.gmra.mrb[0].mxu0 %v381
        %v1003 = vpop.f32.mrb[0].mxu0
        %v1004 = vadd.f32 0.0, %v1003
        %v1005 = vpop.f32.mrb[0].mxu0
        %v1006 = vpop.f32.mrb[0].mxu0
        %v1007 = vadd.f32 0.0, %v1006
        %v1008 = vpop.f32.mrb[0].mxu0
        %1009 = vmatprep.mubr.bf16.mxu0 0
        %1010 = vmatmul.mubr.bf16.gmra.mrb[0].mxu0 %v384
        %v1011 = vpop.f32.mrb[0].mxu0
        %v1012 = vadd.f32 0.0, %v1011
        %v1013 = vpop.f32.mrb[0].mxu0
        %v1014 = vpop.f32.mrb[0].mxu0
        %v1015 = vadd.f32 0.0, %v1014
        %v1016 = vpop.f32.mrb[0].mxu0
        %1017 = vmatprep.mubr.bf16.mxu0 0
        %1018 = vmatmul.mubr.bf16.gmra.mrb[0].mxu0 %v387
        %v1019 = vpop.f32.mrb[0].mxu0
        %v1020 = vadd.f32 0.0, %v1019
        %v1021 = vpop.f32.mrb[0].mxu0
        %v1022 = vpop.f32.mrb[0].mxu0
        %v1023 = vadd.f32 0.0, %v1022
        %v1024 = vpop.f32.mrb[0].mxu0
        %1025 = vmatprep.mubr.bf16.mxu0 0
        %1026 = vmatmul.mubr.bf16.gmra.mrb[0].mxu0 %v390
        %v1027 = vpop.f32.mrb[0].mxu0
        %v1028 = vadd.f32 0.0, %v1027
        %v1029 = vpop.f32.mrb[0].mxu0
        %v1030 = vpop.f32.mrb[0].mxu0
        %v1031 = vadd.f32 0.0, %v1030
        %v1032 = vpop.f32.mrb[0].mxu0
        %1033 = vmatprep.mubr.bf16.mxu0 0
        %1034 = vmatmul.mubr.bf16.gmra.mrb[0].mxu0 %v393
        %v1035 = vpop.f32.mrb[0].mxu0
        %v1036 = vadd.f32 0.0, %v1035
        %v1037 = vpop.f32.mrb[0].mxu0
        %v1038 = vpop.f32.mrb[0].mxu0
        %v1039 = vadd.f32 0.0, %v1038
        %v1040 = vpop.f32.mrb[0].mxu0
        %1041 = vmatprep.mubr.bf16.mxu0 0
        %1042 = vmatmul.mubr.bf16.gmra.mrb[0].mxu0 %v396
        %v1043 = vpop.f32.mrb[0].mxu0
        %v1044 = vadd.f32 0.0, %v1043
        %v1045 = vpop.f32.mrb[0].mxu0
        %v1046 = vpop.f32.mrb[0].mxu0
        %v1047 = vadd.f32 0.0, %v1046
        %v1048 = vpop.f32.mrb[0].mxu0
        %1049 = vmatprep.mubr.bf16.mxu0 0
        %1050 = vmatmul.mubr.bf16.gmra.mrb[0].mxu0 %v399
        %v1051 = vpop.f32.mrb[0].mxu0
        %v1052 = vadd.f32 0.0, %v1051
        %v1053 = vpop.f32.mrb[0].mxu0
        %v1054 = vpop.f32.mrb[0].mxu0
        %v1055 = vadd.f32 0.0, %v1054
        %v1056 = vpop.f32.mrb[0].mxu0
        %1057 = vmatprep.mubr.bf16.mxu0 0
        %1058 = vmatmul.mubr.bf16.gmra.mrb[0].mxu0 %v402
        %v1059 = vpop.f32.mrb[0].mxu0
        %v1060 = vadd.f32 0.0, %v1059
        %v1061 = vpop.f32.mrb[0].mxu0
        %v1062 = vpop.f32.mrb[0].mxu0
        %v1063 = vadd.f32 0.0, %v1062
        %v1064 = vpop.f32.mrb[0].mxu0
        %1065 = vmatprep.mubr.bf16.mxu0 0
        %1066 = vmatmul.mubr.bf16.gmra.mrb[0].mxu0 %v405
        %v1067 = vpop.f32.mrb[0].mxu0
        %v1068 = vadd.f32 0.0, %v1067
        %v1069 = vpop.f32.mrb[0].mxu0
        %v1070 = vpop.f32.mrb[0].mxu0
        %v1071 = vadd.f32 0.0, %v1070
        %v1072 = vpop.f32.mrb[0].mxu0
        %1073 = vmatprep.mubr.bf16.mxu0 0
        %1074 = vmatmul.mubr.bf16.gmra.mrb[0].mxu0 %v408
        %v1075 = vpop.f32.mrb[0].mxu0
        %v1076 = vadd.f32 0.0, %v1075
        %v1077 = vpop.f32.mrb[0].mxu0
        %v1078 = vpop.f32.mrb[0].mxu0
        %v1079 = vadd.f32 0.0, %v1078
        %v1080 = vpop.f32.mrb[0].mxu0
        %1081 = vmatprep.mubr.bf16.mxu0 0
        %1082 = vmatmul.mubr.bf16.gmra.mrb[0].mxu0 %v411
        %v1083 = vpop.f32.mrb[0].mxu0
        %v1084 = vadd.f32 0.0, %v1083
        %v1085 = vpop.f32.mrb[0].mxu0
        %v1086 = vpop.f32.mrb[0].mxu0
        %v1087 = vadd.f32 0.0, %v1086
        %v1088 = vpop.f32.mrb[0].mxu0
        %1089 = vmatprep.mubr.bf16.mxu0 0
        %1090 = vmatmul.mubr.bf16.gmra.mrb[0].mxu0 %v414
        %v1091 = vpop.f32.mrb[0].mxu0
        %v1092 = vpop.f32.mrb[0].mxu0
        %v1093 = vpop.f32.mrb[0].mxu0
        %v1094 = vpop.f32.mrb[0].mxu0
        %1095 = vdwg.mxu0
        %s1096 = scalar_lea.vmem [#allocation2], 256
        %v1097 = vld [vmem:[%s1096] sm:$0xff]
        %v1098 = vld [vmem:[%s1096 + $0x8] sm:$0xff]
        %v1099 = vld [vmem:[%s1096 + $0x10] sm:$0xff]
        %v1100 = vld [vmem:[%s1096 + $0x18] sm:$0xff]
        %v1101 = vld [vmem:[%s1096 + $0x20] sm:$0xff]
        %v1102 = vld [vmem:[%s1096 + $0x28] sm:$0xff]
        %v1103 = vld [vmem:[%s1096 + $0x30] sm:$0xff]
        %v1104 = vld [vmem:[%s1096 + $0x38] sm:$0xff]
        %v1105 = vld [vmem:[%s1096 + $0x40] sm:$0xff]
        %v1106 = vld [vmem:[%s1096 + $0x48] sm:$0xff]
        %v1107 = vld [vmem:[%s1096 + $0x50] sm:$0xff]
        %v1108 = vld [vmem:[%s1096 + $0x58] sm:$0xff]
        %v1109 = vld [vmem:[%s1096 + $0x60] sm:$0xff]
        %v1110 = vld [vmem:[%s1096 + $0x68] sm:$0xff]
        %v1111 = vld [vmem:[%s1096 + $0x70] sm:$0xff]
        %v1112 = vld [vmem:[%s1096 + $0x78] sm:$0xff]
        %v1113 = vld [vmem:[%s1096 + $0x80] sm:$0xff]
        %v1114 = vld [vmem:[%s1096 + $0x88] sm:$0xff]
        %v1115 = vld [vmem:[%s1096 + $0x90] sm:$0xff]
        %v1116 = vld [vmem:[%s1096 + $0x98] sm:$0xff]
        %v1117 = vld [vmem:[%s1096 + $0xa0] sm:$0xff]
        %v1118 = vld [vmem:[%s1096 + $0xa8] sm:$0xff]
        %v1119 = vld [vmem:[%s1096 + $0xb0] sm:$0xff]
        %v1120 = vld [vmem:[%s1096 + $0xb8] sm:$0xff]
        %v1121 = vld [vmem:[%s1096 + $0xc0] sm:$0xff]
        %v1122 = vld [vmem:[%s1096 + $0xc8] sm:$0xff]
        %v1123 = vld [vmem:[%s1096 + $0xd0] sm:$0xff]
        %v1124 = vld [vmem:[%s1096 + $0xd8] sm:$0xff]
        %v1125 = vld [vmem:[%s1096 + $0xe0] sm:$0xff]
        %v1126 = vld [vmem:[%s1096 + $0xe8] sm:$0xff]
        %v1127 = vld [vmem:[%s1096 + $0xf0] sm:$0xff]
        %v1128 = vld [vmem:[%s1096 + $0xf8] sm:$0xff]
        %1130 = vset.pattern.permute.xlu0 0
        %1131 = vperm.xlu0 %1130, %v1097
        %v1132 = vpop.permute.xlu0 %1131
        %1135 = vset.pattern.permute.xlu0 0
        %1136 = vperm.xlu0 %1135, %v1098
        %v1137 = vpop.permute.xlu0 %1136
        %1140 = vset.pattern.permute.xlu0 0
        %1141 = vperm.xlu0 %1140, %v1099
        %v1142 = vpop.permute.xlu0 %1141
        %1145 = vset.pattern.permute.xlu0 0
        %1146 = vperm.xlu0 %1145, %v1100
        %v1147 = vpop.permute.xlu0 %1146
        %1150 = vset.pattern.permute.xlu0 0
        %1151 = vperm.xlu0 %1150, %v1101
        %v1152 = vpop.permute.xlu0 %1151
        %1155 = vset.pattern.permute.xlu0 0
        %1156 = vperm.xlu0 %1155, %v1102
        %v1157 = vpop.permute.xlu0 %1156
        %1160 = vset.pattern.permute.xlu0 0
        %1161 = vperm.xlu0 %1160, %v1103
        %v1162 = vpop.permute.xlu0 %1161
        %1165 = vset.pattern.permute.xlu0 0
        %1166 = vperm.xlu0 %1165, %v1104
        %v1167 = vpop.permute.xlu0 %1166
        %1170 = vset.pattern.permute.xlu0 0
        %1171 = vperm.xlu0 %1170, %v1105
        %v1172 = vpop.permute.xlu0 %1171
        %1175 = vset.pattern.permute.xlu0 0
        %1176 = vperm.xlu0 %1175, %v1106
        %v1177 = vpop.permute.xlu0 %1176
        %1180 = vset.pattern.permute.xlu0 0
        %1181 = vperm.xlu0 %1180, %v1107
        %v1182 = vpop.permute.xlu0 %1181
        %1185 = vset.pattern.permute.xlu0 0
        %1186 = vperm.xlu0 %1185, %v1108
        %v1187 = vpop.permute.xlu0 %1186
        %1190 = vset.pattern.permute.xlu0 0
        %1191 = vperm.xlu0 %1190, %v1109
        %v1192 = vpop.permute.xlu0 %1191
        %1195 = vset.pattern.permute.xlu0 0
        %1196 = vperm.xlu0 %1195, %v1110
        %v1197 = vpop.permute.xlu0 %1196
        %1200 = vset.pattern.permute.xlu0 0
        %1201 = vperm.xlu0 %1200, %v1111
        %v1202 = vpop.permute.xlu0 %1201
        %1205 = vset.pattern.permute.xlu0 0
        %1206 = vperm.xlu0 %1205, %v1112
        %v1207 = vpop.permute.xlu0 %1206
        %1210 = vset.pattern.permute.xlu0 0
        %1211 = vperm.xlu0 %1210, %v1113
        %v1212 = vpop.permute.xlu0 %1211
        %1215 = vset.pattern.permute.xlu0 0
        %1216 = vperm.xlu0 %1215, %v1114
        %v1217 = vpop.permute.xlu0 %1216
        %1220 = vset.pattern.permute.xlu0 0
        %1221 = vperm.xlu0 %1220, %v1115
        %v1222 = vpop.permute.xlu0 %1221
        %1225 = vset.pattern.permute.xlu0 0
        %1226 = vperm.xlu0 %1225, %v1116
        %v1227 = vpop.permute.xlu0 %1226
        %1230 = vset.pattern.permute.xlu0 0
        %1231 = vperm.xlu0 %1230, %v1117
        %v1232 = vpop.permute.xlu0 %1231
        %1235 = vset.pattern.permute.xlu0 0
        %1236 = vperm.xlu0 %1235, %v1118
        %v1237 = vpop.permute.xlu0 %1236
        %1240 = vset.pattern.permute.xlu0 0
        %1241 = vperm.xlu0 %1240, %v1119
        %v1242 = vpop.permute.xlu0 %1241
        %1245 = vset.pattern.permute.xlu0 0
        %1246 = vperm.xlu0 %1245, %v1120
        %v1247 = vpop.permute.xlu0 %1246
        %1250 = vset.pattern.permute.xlu0 0
        %1251 = vperm.xlu0 %1250, %v1121
        %v1252 = vpop.permute.xlu0 %1251
        %1255 = vset.pattern.permute.xlu0 0
        %1256 = vperm.xlu0 %1255, %v1122
        %v1257 = vpop.permute.xlu0 %1256
        %1260 = vset.pattern.permute.xlu0 0
        %1261 = vperm.xlu0 %1260, %v1123
        %v1262 = vpop.permute.xlu0 %1261
        %1265 = vset.pattern.permute.xlu0 0
        %1266 = vperm.xlu0 %1265, %v1124
        %v1267 = vpop.permute.xlu0 %1266
        %1270 = vset.pattern.permute.xlu0 0
        %1271 = vperm.xlu0 %1270, %v1125
        %v1272 = vpop.permute.xlu0 %1271
        %1275 = vset.pattern.permute.xlu0 0
        %1276 = vperm.xlu0 %1275, %v1126
        %v1277 = vpop.permute.xlu0 %1276
        %1280 = vset.pattern.permute.xlu0 0
        %1281 = vperm.xlu0 %1280, %v1127
        %v1282 = vpop.permute.xlu0 %1281
        %1285 = vset.pattern.permute.xlu0 0
        %1286 = vperm.xlu0 %1285, %v1128
        %v1287 = vpop.permute.xlu0 %1286
        %v1289 = vmul.f32 %v1132, 0.0
        %v1290 = vmul.f32 %v1137, 0.0
        %v1291 = vmul.f32 %v972, %v1142
        %v1292 = vmul.f32 %v975, %v1147
        %v1293 = vmul.f32 %v980, %v1152
        %v1294 = vmul.f32 %v983, %v1157
        %v1295 = vmul.f32 %v988, %v1162
        %v1296 = vmul.f32 %v991, %v1167
        %v1297 = vmul.f32 %v996, %v1172
        %v1298 = vmul.f32 %v999, %v1177
        %v1299 = vmul.f32 %v1004, %v1182
        %v1300 = vmul.f32 %v1007, %v1187
        %v1301 = vmul.f32 %v1012, %v1192
        %v1302 = vmul.f32 %v1015, %v1197
        %v1303 = vmul.f32 %v1020, %v1202
        %v1304 = vmul.f32 %v1023, %v1207
        %v1305 = vmul.f32 %v1028, %v1212
        %v1306 = vmul.f32 %v1031, %v1217
        %v1307 = vmul.f32 %v1036, %v1222
        %v1308 = vmul.f32 %v1039, %v1227
        %v1309 = vmul.f32 %v1044, %v1232
        %v1310 = vmul.f32 %v1047, %v1237
        %v1311 = vmul.f32 %v1052, %v1242
        %v1312 = vmul.f32 %v1055, %v1247
        %v1313 = vmul.f32 %v1060, %v1252
        %v1314 = vmul.f32 %v1063, %v1257
        %v1315 = vmul.f32 %v1068, %v1262
        %v1316 = vmul.f32 %v1071, %v1267
        %v1317 = vmul.f32 %v1076, %v1272
        %v1318 = vmul.f32 %v1079, %v1277
        %v1319 = vmul.f32 %v1084, %v1282
        %v1320 = vmul.f32 %v1087, %v1287
        %v1321 = vadd.f32 %v888, %v1289
        %v1322 = vadd.f32 %v889, %v1290
        %v1323 = vadd.f32 %v890, %v1291
        %v1324 = vadd.f32 %v891, %v1292
        %v1325 = vadd.f32 %v892, %v1293
        %v1326 = vadd.f32 %v893, %v1294
        %v1327 = vadd.f32 %v894, %v1295
        %v1328 = vadd.f32 %v895, %v1296
        %v1329 = vadd.f32 %v896, %v1297
        %v1330 = vadd.f32 %v897, %v1298
        %v1331 = vadd.f32 %v898, %v1299
        %v1332 = vadd.f32 %v899, %v1300
        %v1333 = vadd.f32 %v900, %v1301
        %v1334 = vadd.f32 %v901, %v1302
        %v1335 = vadd.f32 %v902, %v1303
        %v1336 = vadd.f32 %v903, %v1304
        %v1337 = vadd.f32 %v904, %v1305
        %v1338 = vadd.f32 %v905, %v1306
        %v1339 = vadd.f32 %v906, %v1307
        %v1340 = vadd.f32 %v907, %v1308
        %v1341 = vadd.f32 %v908, %v1309
        %v1342 = vadd.f32 %v909, %v1310
        %v1343 = vadd.f32 %v910, %v1311
        %v1344 = vadd.f32 %v911, %v1312
        %v1345 = vadd.f32 %v912, %v1313
        %v1346 = vadd.f32 %v913, %v1314
        %v1347 = vadd.f32 %v914, %v1315
        %v1348 = vadd.f32 %v915, %v1316
        %v1349 = vadd.f32 %v916, %v1317
        %v1350 = vadd.f32 %v917, %v1318
        %v1351 = vadd.f32 %v918, %v1319
        %v1352 = vadd.f32 %v919, %v1320
        %s1353 = scalar_lea.vmem %s1, 32
        %v1354 = vld [vmem:[%s1353] sm:$0xf]
        %v1355 = vld [vmem:[%s1353 + $0x4] sm:$0xf]
        %v1356 = vld [vmem:[%s1353 + $0x8] sm:$0xf]
        %v1357 = vld [vmem:[%s1353 + $0xc] sm:$0xf]
        %v1362 = vunpack.c.l.b16 %v1354
        %v1363 = vunpack.c.l.b16 %v1355
        %v1364 = vunpack.c.l.b16 %v1356
        %v1365 = vunpack.c.l.b16 %v1357
        %v1366 = vpack.c.b16 %v1363, %v1362
        %v1367 = vpack.c.b16 %v1365, %v1364
        %1370 = vmatprep.subr.bf16.mxu0 0
        %1371 = vmatpush1.bf16.msra.mxu0 %v1366
        %1372 = vmatprep.subr.bf16.mxu0 0
        %1373 = vmatpush1.bf16.msra.mxu0 %v1367
        %1374 = vmatprep.subr.bf16.mxu0 0
        %1375 = vmatpush1.bf16.msra.mxu0 0
        %1376 = vmatprep.subr.bf16.mxu0 0
        %1377 = vmatpush1.bf16.msra.mxu0 0
        %1378 = vmatprep.subr.bf16.mxu0 0
        %1379 = vmatpush1.bf16.msra.mxu0 0
        %1380 = vmatprep.subr.bf16.mxu0 0
        %1381 = vmatpush1.bf16.msra.mxu0 0
        %1382 = vmatprep.subr.bf16.mxu0 0
        %1383 = vmatpush1.bf16.msra.mxu0 0
        %1384 = vmatprep.subr.bf16.mxu0 0
        %1385 = vmatpush1.bf16.msra.mxu0 0
        %1386 = vmatprep.subr.bf16.mxu0 0
        %1387 = vmatpush1.bf16.msra.mxu0 0
        %1388 = vmatprep.subr.bf16.mxu0 0
        %1389 = vmatpush1.bf16.msra.mxu0 0
        %1390 = vmatprep.subr.bf16.mxu0 0
        %1391 = vmatpush1.bf16.msra.mxu0 0
        %1392 = vmatprep.subr.bf16.mxu0 0
        %1393 = vmatpush1.bf16.msra.mxu0 0
        %1394 = vmatprep.subr.bf16.mxu0 0
        %1395 = vmatpush1.bf16.msra.mxu0 0
        %1396 = vmatprep.subr.bf16.mxu0 0
        %1397 = vmatpush1.bf16.msra.mxu0 0
        %1398 = vmatprep.subr.bf16.mxu0 0
        %1399 = vmatpush1.bf16.msra.mxu0 0
        %1400 = vmatprep.subr.bf16.mxu0 0
        %1401 = vmatpush1.bf16.msra.mxu0 0
        %1402 = vmatprep.mubr.bf16.mxu0 0
        %1403 = vmatmul.mubr.bf16.gmra.mrb[0].mxu0 %v369
        %v1404 = vpop.f32.mrb[0].mxu0
        %v1405 = vadd.f32 0.0, %v1404
        %v1406 = vpop.f32.mrb[0].mxu0
        %v1407 = vpop.f32.mrb[0].mxu0
        %v1408 = vadd.f32 0.0, %v1407
        %v1409 = vpop.f32.mrb[0].mxu0
        %1410 = vmatprep.mubr.bf16.mxu0 0
        %1411 = vmatmul.mubr.bf16.gmra.mrb[0].mxu0 %v372
        %v1412 = vpop.f32.mrb[0].mxu0
        %v1413 = vadd.f32 0.0, %v1412
        %v1414 = vpop.f32.mrb[0].mxu0
        %v1415 = vpop.f32.mrb[0].mxu0
        %v1416 = vadd.f32 0.0, %v1415
        %v1417 = vpop.f32.mrb[0].mxu0
        %1418 = vmatprep.mubr.bf16.mxu0 0
        %1419 = vmatmul.mubr.bf16.gmra.mrb[0].mxu0 %v375
        %v1420 = vpop.f32.mrb[0].mxu0
        %v1421 = vadd.f32 0.0, %v1420
        %v1422 = vpop.f32.mrb[0].mxu0
        %v1423 = vpop.f32.mrb[0].mxu0
        %v1424 = vadd.f32 0.0, %v1423
        %v1425 = vpop.f32.mrb[0].mxu0
        %1426 = vmatprep.mubr.bf16.mxu0 0
        %1427 = vmatmul.mubr.bf16.gmra.mrb[0].mxu0 %v378
        %v1428 = vpop.f32.mrb[0].mxu0
        %v1429 = vadd.f32 0.0, %v1428
        %v1430 = vpop.f32.mrb[0].mxu0
        %v1431 = vpop.f32.mrb[0].mxu0
        %v1432 = vadd.f32 0.0, %v1431
        %v1433 = vpop.f32.mrb[0].mxu0
        %1434 = vmatprep.mubr.bf16.mxu0 0
        %1435 = vmatmul.mubr.bf16.gmra.mrb[0].mxu0 %v381
        %v1436 = vpop.f32.mrb[0].mxu0
        %v1437 = vadd.f32 0.0, %v1436
        %v1438 = vpop.f32.mrb[0].mxu0
        %v1439 = vpop.f32.mrb[0].mxu0
        %v1440 = vadd.f32 0.0, %v1439
        %v1441 = vpop.f32.mrb[0].mxu0
        %1442 = vmatprep.mubr.bf16.mxu0 0
        %1443 = vmatmul.mubr.bf16.gmra.mrb[0].mxu0 %v384
        %v1444 = vpop.f32.mrb[0].mxu0
        %v1445 = vadd.f32 0.0, %v1444
        %v1446 = vpop.f32.mrb[0].mxu0
        %v1447 = vpop.f32.mrb[0].mxu0
        %v1448 = vadd.f32 0.0, %v1447
        %v1449 = vpop.f32.mrb[0].mxu0
        %1450 = vmatprep.mubr.bf16.mxu0 0
        %1451 = vmatmul.mubr.bf16.gmra.mrb[0].mxu0 %v387
        %v1452 = vpop.f32.mrb[0].mxu0
        %v1453 = vadd.f32 0.0, %v1452
        %v1454 = vpop.f32.mrb[0].mxu0
        %v1455 = vpop.f32.mrb[0].mxu0
        %v1456 = vadd.f32 0.0, %v1455
        %v1457 = vpop.f32.mrb[0].mxu0
        %1458 = vmatprep.mubr.bf16.mxu0 0
        %1459 = vmatmul.mubr.bf16.gmra.mrb[0].mxu0 %v390
        %v1460 = vpop.f32.mrb[0].mxu0
        %v1461 = vadd.f32 0.0, %v1460
        %v1462 = vpop.f32.mrb[0].mxu0
        %v1463 = vpop.f32.mrb[0].mxu0
        %v1464 = vadd.f32 0.0, %v1463
        %v1465 = vpop.f32.mrb[0].mxu0
        %1466 = vmatprep.mubr.bf16.mxu0 0
        %1467 = vmatmul.mubr.bf16.gmra.mrb[0].mxu0 %v393
        %v1468 = vpop.f32.mrb[0].mxu0
        %v1469 = vadd.f32 0.0, %v1468
        %v1470 = vpop.f32.mrb[0].mxu0
        %v1471 = vpop.f32.mrb[0].mxu0
        %v1472 = vadd.f32 0.0, %v1471
        %v1473 = vpop.f32.mrb[0].mxu0
        %1474 = vmatprep.mubr.bf16.mxu0 0
        %1475 = vmatmul.mubr.bf16.gmra.mrb[0].mxu0 %v396
        %v1476 = vpop.f32.mrb[0].mxu0
        %v1477 = vadd.f32 0.0, %v1476
        %v1478 = vpop.f32.mrb[0].mxu0
        %v1479 = vpop.f32.mrb[0].mxu0
        %v1480 = vadd.f32 0.0, %v1479
        %v1481 = vpop.f32.mrb[0].mxu0
        %1482 = vmatprep.mubr.bf16.mxu0 0
        %1483 = vmatmul.mubr.bf16.gmra.mrb[0].mxu0 %v399
        %v1484 = vpop.f32.mrb[0].mxu0
        %v1485 = vadd.f32 0.0, %v1484
        %v1486 = vpop.f32.mrb[0].mxu0
        %v1487 = vpop.f32.mrb[0].mxu0
        %v1488 = vadd.f32 0.0, %v1487
        %v1489 = vpop.f32.mrb[0].mxu0
        %1490 = vmatprep.mubr.bf16.mxu0 0
        %1491 = vmatmul.mubr.bf16.gmra.mrb[0].mxu0 %v402
        %v1492 = vpop.f32.mrb[0].mxu0
        %v1493 = vadd.f32 0.0, %v1492
        %v1494 = vpop.f32.mrb[0].mxu0
        %v1495 = vpop.f32.mrb[0].mxu0
        %v1496 = vadd.f32 0.0, %v1495
        %v1497 = vpop.f32.mrb[0].mxu0
        %1498 = vmatprep.mubr.bf16.mxu0 0
        %1499 = vmatmul.mubr.bf16.gmra.mrb[0].mxu0 %v405
        %v1500 = vpop.f32.mrb[0].mxu0
        %v1501 = vadd.f32 0.0, %v1500
        %v1502 = vpop.f32.mrb[0].mxu0
        %v1503 = vpop.f32.mrb[0].mxu0
        %v1504 = vadd.f32 0.0, %v1503
        %v1505 = vpop.f32.mrb[0].mxu0
        %1506 = vmatprep.mubr.bf16.mxu0 0
        %1507 = vmatmul.mubr.bf16.gmra.mrb[0].mxu0 %v408
        %v1508 = vpop.f32.mrb[0].mxu0
        %v1509 = vadd.f32 0.0, %v1508
        %v1510 = vpop.f32.mrb[0].mxu0
        %v1511 = vpop.f32.mrb[0].mxu0
        %v1512 = vadd.f32 0.0, %v1511
        %v1513 = vpop.f32.mrb[0].mxu0
        %1514 = vmatprep.mubr.bf16.mxu0 0
        %1515 = vmatmul.mubr.bf16.gmra.mrb[0].mxu0 %v411
        %v1516 = vpop.f32.mrb[0].mxu0
        %v1517 = vadd.f32 0.0, %v1516
        %v1518 = vpop.f32.mrb[0].mxu0
        %v1519 = vpop.f32.mrb[0].mxu0
        %v1520 = vadd.f32 0.0, %v1519
        %v1521 = vpop.f32.mrb[0].mxu0
        %1522 = vmatprep.mubr.bf16.mxu0 0
        %1523 = vmatmul.mubr.bf16.gmra.mrb[0].mxu0 %v414
        %v1524 = vpop.f32.mrb[0].mxu0
        %v1525 = vadd.f32 0.0, %v1524
        %v1526 = vpop.f32.mrb[0].mxu0
        %v1527 = vpop.f32.mrb[0].mxu0
        %v1528 = vpop.f32.mrb[0].mxu0
        %1529 = vdwg.mxu0
        %vm1561 = vcmask 1046528
        %v1562 = vrot.slane %v1405, 1
        %v1563 = vrot.slane %v1408, 1
        %v1564 = vsel %vm1561, %v1562, %v1563
        %v1565 = vrot.slane %v1413, 1
        %v1566 = vsel %vm1561, %v1563, %v1565
        %v1567 = vrot.slane %v1416, 1
        %v1568 = vsel %vm1561, %v1565, %v1567
        %v1569 = vrot.slane %v1421, 1
        %v1570 = vsel %vm1561, %v1567, %v1569
        %v1571 = vrot.slane %v1424, 1
        %v1572 = vsel %vm1561, %v1569, %v1571
        %v1573 = vrot.slane %v1429, 1
        %v1574 = vsel %vm1561, %v1571, %v1573
        %v1575 = vrot.slane %v1432, 1
        %v1576 = vsel %vm1561, %v1573, %v1575
        %v1577 = vrot.slane %v1437, 1
        %v1578 = vsel %vm1561, %v1575, %v1577
        %v1579 = vrot.slane %v1440, 1
        %v1580 = vsel %vm1561, %v1577, %v1579
        %v1581 = vrot.slane %v1445, 1
        %v1582 = vsel %vm1561, %v1579, %v1581
        %v1583 = vrot.slane %v1448, 1
        %v1584 = vsel %vm1561, %v1581, %v1583
        %v1585 = vrot.slane %v1453, 1
        %v1586 = vsel %vm1561, %v1583, %v1585
        %v1587 = vrot.slane %v1456, 1
        %v1588 = vsel %vm1561, %v1585, %v1587
        %v1589 = vrot.slane %v1461, 1
        %v1590 = vsel %vm1561, %v1587, %v1589
        %v1591 = vrot.slane %v1464, 1
        %v1592 = vsel %vm1561, %v1589, %v1591
        %v1593 = vrot.slane %v1469, 1
        %v1594 = vsel %vm1561, %v1591, %v1593
        %v1595 = vrot.slane %v1472, 1
        %v1596 = vsel %vm1561, %v1593, %v1595
        %v1597 = vrot.slane %v1477, 1
        %v1598 = vsel %vm1561, %v1595, %v1597
        %v1599 = vrot.slane %v1480, 1
        %v1600 = vsel %vm1561, %v1597, %v1599
        %v1601 = vrot.slane %v1485, 1
        %v1602 = vsel %vm1561, %v1599, %v1601
        %v1603 = vrot.slane %v1488, 1
        %v1604 = vsel %vm1561, %v1601, %v1603
        %v1605 = vrot.slane %v1493, 1
        %v1606 = vsel %vm1561, %v1603, %v1605
        %v1607 = vrot.slane %v1496, 1
        %v1608 = vsel %vm1561, %v1605, %v1607
        %v1609 = vrot.slane %v1501, 1
        %v1610 = vsel %vm1561, %v1607, %v1609
        %v1611 = vrot.slane %v1504, 1
        %v1612 = vsel %vm1561, %v1609, %v1611
        %v1613 = vrot.slane %v1509, 1
        %v1614 = vsel %vm1561, %v1611, %v1613
        %v1615 = vrot.slane %v1512, 1
        %v1616 = vsel %vm1561, %v1613, %v1615
        %v1617 = vrot.slane %v1517, 1
        %v1618 = vsel %vm1561, %v1615, %v1617
        %v1619 = vrot.slane %v1520, 1
        %v1620 = vsel %vm1561, %v1617, %v1619
        %v1621 = vrot.slane %v1525, 1
        %v1622 = vsel %vm1561, %v1619, %v1621
        %v1654 = vsel %vm1561, 0.0, %v1562
        %s1655 = scalar_lea.vmem [#allocation2], 512
        %v1656 = vld [vmem:[%s1655] sm:$0xff]
        %v1657 = vld [vmem:[%s1655 + $0x8] sm:$0xff]
        %v1658 = vld [vmem:[%s1655 + $0x10] sm:$0xff]
        %v1659 = vld [vmem:[%s1655 + $0x18] sm:$0xff]
        %v1660 = vld [vmem:[%s1655 + $0x20] sm:$0xff]
        %v1661 = vld [vmem:[%s1655 + $0x28] sm:$0xff]
        %v1662 = vld [vmem:[%s1655 + $0x30] sm:$0xff]
        %v1663 = vld [vmem:[%s1655 + $0x38] sm:$0xff]
        %v1664 = vld [vmem:[%s1655 + $0x40] sm:$0xff]
        %v1665 = vld [vmem:[%s1655 + $0x48] sm:$0xff]
        %v1666 = vld [vmem:[%s1655 + $0x50] sm:$0xff]
        %v1667 = vld [vmem:[%s1655 + $0x58] sm:$0xff]
        %v1668 = vld [vmem:[%s1655 + $0x60] sm:$0xff]
        %v1669 = vld [vmem:[%s1655 + $0x68] sm:$0xff]
        %v1670 = vld [vmem:[%s1655 + $0x70] sm:$0xff]
        %v1671 = vld [vmem:[%s1655 + $0x78] sm:$0xff]
        %v1672 = vld [vmem:[%s1655 + $0x80] sm:$0xff]
        %v1673 = vld [vmem:[%s1655 + $0x88] sm:$0xff]
        %v1674 = vld [vmem:[%s1655 + $0x90] sm:$0xff]
        %v1675 = vld [vmem:[%s1655 + $0x98] sm:$0xff]
        %v1676 = vld [vmem:[%s1655 + $0xa0] sm:$0xff]
        %v1677 = vld [vmem:[%s1655 + $0xa8] sm:$0xff]
        %v1678 = vld [vmem:[%s1655 + $0xb0] sm:$0xff]
        %v1679 = vld [vmem:[%s1655 + $0xb8] sm:$0xff]
        %v1680 = vld [vmem:[%s1655 + $0xc0] sm:$0xff]
        %v1681 = vld [vmem:[%s1655 + $0xc8] sm:$0xff]
        %v1682 = vld [vmem:[%s1655 + $0xd0] sm:$0xff]
        %v1683 = vld [vmem:[%s1655 + $0xd8] sm:$0xff]
        %v1684 = vld [vmem:[%s1655 + $0xe0] sm:$0xff]
        %v1685 = vld [vmem:[%s1655 + $0xe8] sm:$0xff]
        %v1686 = vld [vmem:[%s1655 + $0xf0] sm:$0xff]
        %v1687 = vld [vmem:[%s1655 + $0xf8] sm:$0xff]
        %1689 = vset.pattern.permute.xlu0 0
        %1690 = vperm.xlu0 %1689, %v1656
        %v1691 = vpop.permute.xlu0 %1690
        %1694 = vset.pattern.permute.xlu0 0
        %1695 = vperm.xlu0 %1694, %v1657
        %v1696 = vpop.permute.xlu0 %1695
        %1699 = vset.pattern.permute.xlu0 0
        %1700 = vperm.xlu0 %1699, %v1658
        %v1701 = vpop.permute.xlu0 %1700
        %1704 = vset.pattern.permute.xlu0 0
        %1705 = vperm.xlu0 %1704, %v1659
        %v1706 = vpop.permute.xlu0 %1705
        %1709 = vset.pattern.permute.xlu0 0
        %1710 = vperm.xlu0 %1709, %v1660
        %v1711 = vpop.permute.xlu0 %1710
        %1714 = vset.pattern.permute.xlu0 0
        %1715 = vperm.xlu0 %1714, %v1661
        %v1716 = vpop.permute.xlu0 %1715
        %1719 = vset.pattern.permute.xlu0 0
        %1720 = vperm.xlu0 %1719, %v1662
        %v1721 = vpop.permute.xlu0 %1720
        %1724 = vset.pattern.permute.xlu0 0
        %1725 = vperm.xlu0 %1724, %v1663
        %v1726 = vpop.permute.xlu0 %1725
        %1729 = vset.pattern.permute.xlu0 0
        %1730 = vperm.xlu0 %1729, %v1664
        %v1731 = vpop.permute.xlu0 %1730
        %1734 = vset.pattern.permute.xlu0 0
        %1735 = vperm.xlu0 %1734, %v1665
        %v1736 = vpop.permute.xlu0 %1735
        %1739 = vset.pattern.permute.xlu0 0
        %1740 = vperm.xlu0 %1739, %v1666
        %v1741 = vpop.permute.xlu0 %1740
        %1744 = vset.pattern.permute.xlu0 0
        %1745 = vperm.xlu0 %1744, %v1667
        %v1746 = vpop.permute.xlu0 %1745
        %1749 = vset.pattern.permute.xlu0 0
        %1750 = vperm.xlu0 %1749, %v1668
        %v1751 = vpop.permute.xlu0 %1750
        %1754 = vset.pattern.permute.xlu0 0
        %1755 = vperm.xlu0 %1754, %v1669
        %v1756 = vpop.permute.xlu0 %1755
        %1759 = vset.pattern.permute.xlu0 0
        %1760 = vperm.xlu0 %1759, %v1670
        %v1761 = vpop.permute.xlu0 %1760
        %1764 = vset.pattern.permute.xlu0 0
        %1765 = vperm.xlu0 %1764, %v1671
        %v1766 = vpop.permute.xlu0 %1765
        %1769 = vset.pattern.permute.xlu0 0
        %1770 = vperm.xlu0 %1769, %v1672
        %v1771 = vpop.permute.xlu0 %1770
        %1774 = vset.pattern.permute.xlu0 0
        %1775 = vperm.xlu0 %1774, %v1673
        %v1776 = vpop.permute.xlu0 %1775
        %1779 = vset.pattern.permute.xlu0 0
        %1780 = vperm.xlu0 %1779, %v1674
        %v1781 = vpop.permute.xlu0 %1780
        %1784 = vset.pattern.permute.xlu0 0
        %1785 = vperm.xlu0 %1784, %v1675
        %v1786 = vpop.permute.xlu0 %1785
        %1789 = vset.pattern.permute.xlu0 0
        %1790 = vperm.xlu0 %1789, %v1676
        %v1791 = vpop.permute.xlu0 %1790
        %1794 = vset.pattern.permute.xlu0 0
        %1795 = vperm.xlu0 %1794, %v1677
        %v1796 = vpop.permute.xlu0 %1795
        %1799 = vset.pattern.permute.xlu0 0
        %1800 = vperm.xlu0 %1799, %v1678
        %v1801 = vpop.permute.xlu0 %1800
        %1804 = vset.pattern.permute.xlu0 0
        %1805 = vperm.xlu0 %1804, %v1679
        %v1806 = vpop.permute.xlu0 %1805
        %1809 = vset.pattern.permute.xlu0 0
        %1810 = vperm.xlu0 %1809, %v1680
        %v1811 = vpop.permute.xlu0 %1810
        %1814 = vset.pattern.permute.xlu0 0
        %1815 = vperm.xlu0 %1814, %v1681
        %v1816 = vpop.permute.xlu0 %1815
        %1819 = vset.pattern.permute.xlu0 0
        %1820 = vperm.xlu0 %1819, %v1682
        %v1821 = vpop.permute.xlu0 %1820
        %1824 = vset.pattern.permute.xlu0 0
        %1825 = vperm.xlu0 %1824, %v1683
        %v1826 = vpop.permute.xlu0 %1825
        %1829 = vset.pattern.permute.xlu0 0
        %1830 = vperm.xlu0 %1829, %v1684
        %v1831 = vpop.permute.xlu0 %1830
        %1834 = vset.pattern.permute.xlu0 0
        %1835 = vperm.xlu0 %1834, %v1685
        %v1836 = vpop.permute.xlu0 %1835
        %1839 = vset.pattern.permute.xlu0 0
        %1840 = vperm.xlu0 %1839, %v1686
        %v1841 = vpop.permute.xlu0 %1840
        %1844 = vset.pattern.permute.xlu0 0
        %1845 = vperm.xlu0 %1844, %v1687
        %v1846 = vpop.permute.xlu0 %1845
        %v1848 = vmul.f32 %v1691, 0.0
        %v1849 = vmul.f32 %v1654, %v1696
        %v1850 = vmul.f32 %v1564, %v1701
        %v1851 = vmul.f32 %v1566, %v1706
        %v1852 = vmul.f32 %v1568, %v1711
        %v1853 = vmul.f32 %v1570, %v1716
        %v1854 = vmul.f32 %v1572, %v1721
        %v1855 = vmul.f32 %v1574, %v1726
        %v1856 = vmul.f32 %v1576, %v1731
        %v1857 = vmul.f32 %v1578, %v1736
        %v1858 = vmul.f32 %v1580, %v1741
        %v1859 = vmul.f32 %v1582, %v1746
        %v1860 = vmul.f32 %v1584, %v1751
        %v1861 = vmul.f32 %v1586, %v1756
        %v1862 = vmul.f32 %v1588, %v1761
        %v1863 = vmul.f32 %v1590, %v1766
        %v1864 = vmul.f32 %v1592, %v1771
        %v1865 = vmul.f32 %v1594, %v1776
        %v1866 = vmul.f32 %v1596, %v1781
        %v1867 = vmul.f32 %v1598, %v1786
        %v1868 = vmul.f32 %v1600, %v1791
        %v1869 = vmul.f32 %v1602, %v1796
        %v1870 = vmul.f32 %v1604, %v1801
        %v1871 = vmul.f32 %v1606, %v1806
        %v1872 = vmul.f32 %v1608, %v1811
        %v1873 = vmul.f32 %v1610, %v1816
        %v1874 = vmul.f32 %v1612, %v1821
        %v1875 = vmul.f32 %v1614, %v1826
        %v1876 = vmul.f32 %v1616, %v1831
        %v1877 = vmul.f32 %v1618, %v1836
        %v1878 = vmul.f32 %v1620, %v1841
        %v1879 = vmul.f32 %v1622, %v1846
        %v1880 = vadd.f32 %v1321, %v1848
        %v1881 = vadd.f32 %v1322, %v1849
        %v1882 = vadd.f32 %v1323, %v1850
        %v1883 = vadd.f32 %v1324, %v1851
        %v1884 = vadd.f32 %v1325, %v1852
        %v1885 = vadd.f32 %v1326, %v1853
        %v1886 = vadd.f32 %v1327, %v1854
        %v1887 = vadd.f32 %v1328, %v1855
        %v1888 = vadd.f32 %v1329, %v1856
        %v1889 = vadd.f32 %v1330, %v1857
        %v1890 = vadd.f32 %v1331, %v1858
        %v1891 = vadd.f32 %v1332, %v1859
        %v1892 = vadd.f32 %v1333, %v1860
        %v1893 = vadd.f32 %v1334, %v1861
        %v1894 = vadd.f32 %v1335, %v1862
        %v1895 = vadd.f32 %v1336, %v1863
        %v1896 = vadd.f32 %v1337, %v1864
        %v1897 = vadd.f32 %v1338, %v1865
        %v1898 = vadd.f32 %v1339, %v1866
        %v1899 = vadd.f32 %v1340, %v1867
        %v1900 = vadd.f32 %v1341, %v1868
        %v1901 = vadd.f32 %v1342, %v1869
        %v1902 = vadd.f32 %v1343, %v1870
        %v1903 = vadd.f32 %v1344, %v1871
        %v1904 = vadd.f32 %v1345, %v1872
        %v1905 = vadd.f32 %v1346, %v1873
        %v1906 = vadd.f32 %v1347, %v1874
        %v1907 = vadd.f32 %v1348, %v1875
        %v1908 = vadd.f32 %v1349, %v1876
        %v1909 = vadd.f32 %v1350, %v1877
        %v1910 = vadd.f32 %v1351, %v1878
        %v1911 = vadd.f32 %v1352, %v1879
        %s1912 = scalar_lea.vmem %s1, 48
        %v1913 = vld [vmem:[%s1912] sm:$0xf]
        %v1914 = vld [vmem:[%s1912 + $0x4] sm:$0xf]
        %v1915 = vld [vmem:[%s1912 + $0x8] sm:$0xf]
        %v1916 = vld [vmem:[%s1912 + $0xc] sm:$0xf]
        %v1921 = vunpack.c.l.b16 %v1913
        %v1922 = vunpack.c.l.b16 %v1914
        %v1923 = vunpack.c.l.b16 %v1915
        %v1924 = vunpack.c.l.b16 %v1916
        %v1925 = vpack.c.b16 %v1922, %v1921
        %v1926 = vpack.c.b16 %v1924, %v1923
        %1929 = vmatprep.subr.bf16.mxu0 0
        %1930 = vmatpush1.bf16.msra.mxu0 %v1925
        %1931 = vmatprep.subr.bf16.mxu0 0
        %1932 = vmatpush1.bf16.msra.mxu0 %v1926
        %1933 = vmatprep.subr.bf16.mxu0 0
        %1934 = vmatpush1.bf16.msra.mxu0 0
        %1935 = vmatprep.subr.bf16.mxu0 0
        %1936 = vmatpush1.bf16.msra.mxu0 0
        %1937 = vmatprep.subr.bf16.mxu0 0
        %1938 = vmatpush1.bf16.msra.mxu0 0
        %1939 = vmatprep.subr.bf16.mxu0 0
        %1940 = vmatpush1.bf16.msra.mxu0 0
        %1941 = vmatprep.subr.bf16.mxu0 0
        %1942 = vmatpush1.bf16.msra.mxu0 0
        %1943 = vmatprep.subr.bf16.mxu0 0
        %1944 = vmatpush1.bf16.msra.mxu0 0
        %1945 = vmatprep.subr.bf16.mxu0 0
        %1946 = vmatpush1.bf16.msra.mxu0 0
        %1947 = vmatprep.subr.bf16.mxu0 0
        %1948 = vmatpush1.bf16.msra.mxu0 0
        %1949 = vmatprep.subr.bf16.mxu0 0
        %1950 = vmatpush1.bf16.msra.mxu0 0
        %1951 = vmatprep.subr.bf16.mxu0 0
        %1952 = vmatpush1.bf16.msra.mxu0 0
        %1953 = vmatprep.subr.bf16.mxu0 0
        %1954 = vmatpush1.bf16.msra.mxu0 0
        %1955 = vmatprep.subr.bf16.mxu0 0
        %1956 = vmatpush1.bf16.msra.mxu0 0
        %1957 = vmatprep.subr.bf16.mxu0 0
        %1958 = vmatpush1.bf16.msra.mxu0 0
        %1959 = vmatprep.subr.bf16.mxu0 0
        %1960 = vmatpush1.bf16.msra.mxu0 0
        %1961 = vmatprep.mubr.bf16.mxu0 0
        %1962 = vmatmul.mubr.bf16.gmra.mrb[0].mxu0 %v369
        %v1963 = vpop.f32.mrb[0].mxu0
        %v1964 = vadd.f32 0.0, %v1963
        %v1965 = vpop.f32.mrb[0].mxu0
        %v1966 = vpop.f32.mrb[0].mxu0
        %v1967 = vadd.f32 0.0, %v1966
        %v1968 = vpop.f32.mrb[0].mxu0
        %1969 = vmatprep.mubr.bf16.mxu0 0
        %1970 = vmatmul.mubr.bf16.gmra.mrb[0].mxu0 %v372
        %v1971 = vpop.f32.mrb[0].mxu0
        %v1972 = vadd.f32 0.0, %v1971
        %v1973 = vpop.f32.mrb[0].mxu0
        %v1974 = vpop.f32.mrb[0].mxu0
        %v1975 = vadd.f32 0.0, %v1974
        %v1976 = vpop.f32.mrb[0].mxu0
        %1977 = vmatprep.mubr.bf16.mxu0 0
        %1978 = vmatmul.mubr.bf16.gmra.mrb[0].mxu0 %v375
        %v1979 = vpop.f32.mrb[0].mxu0
        %v1980 = vadd.f32 0.0, %v1979
        %v1981 = vpop.f32.mrb[0].mxu0
        %v1982 = vpop.f32.mrb[0].mxu0
        %v1983 = vadd.f32 0.0, %v1982
        %v1984 = vpop.f32.mrb[0].mxu0
        %1985 = vmatprep.mubr.bf16.mxu0 0
        %1986 = vmatmul.mubr.bf16.gmra.mrb[0].mxu0 %v378
        %v1987 = vpop.f32.mrb[0].mxu0
        %v1988 = vadd.f32 0.0, %v1987
        %v1989 = vpop.f32.mrb[0].mxu0
        %v1990 = vpop.f32.mrb[0].mxu0
        %v1991 = vadd.f32 0.0, %v1990
        %v1992 = vpop.f32.mrb[0].mxu0
        %1993 = vmatprep.mubr.bf16.mxu0 0
        %1994 = vmatmul.mubr.bf16.gmra.mrb[0].mxu0 %v381
        %v1995 = vpop.f32.mrb[0].mxu0
        %v1996 = vadd.f32 0.0, %v1995
        %v1997 = vpop.f32.mrb[0].mxu0
        %v1998 = vpop.f32.mrb[0].mxu0
        %v1999 = vadd.f32 0.0, %v1998
        %v2000 = vpop.f32.mrb[0].mxu0
        %2001 = vmatprep.mubr.bf16.mxu0 0
        %2002 = vmatmul.mubr.bf16.gmra.mrb[0].mxu0 %v384
        %v2003 = vpop.f32.mrb[0].mxu0
        %v2004 = vadd.f32 0.0, %v2003
        %v2005 = vpop.f32.mrb[0].mxu0
        %v2006 = vpop.f32.mrb[0].mxu0
        %v2007 = vadd.f32 0.0, %v2006
        %v2008 = vpop.f32.mrb[0].mxu0
        %2009 = vmatprep.mubr.bf16.mxu0 0
        %2010 = vmatmul.mubr.bf16.gmra.mrb[0].mxu0 %v387
        %v2011 = vpop.f32.mrb[0].mxu0
        %v2012 = vadd.f32 0.0, %v2011
        %v2013 = vpop.f32.mrb[0].mxu0
        %v2014 = vpop.f32.mrb[0].mxu0
        %v2015 = vadd.f32 0.0, %v2014
        %v2016 = vpop.f32.mrb[0].mxu0
        %2017 = vmatprep.mubr.bf16.mxu0 0
        %2018 = vmatmul.mubr.bf16.gmra.mrb[0].mxu0 %v390
        %v2019 = vpop.f32.mrb[0].mxu0
        %v2020 = vadd.f32 0.0, %v2019
        %v2021 = vpop.f32.mrb[0].mxu0
        %v2022 = vpop.f32.mrb[0].mxu0
        %v2023 = vadd.f32 0.0, %v2022
        %v2024 = vpop.f32.mrb[0].mxu0
        %2025 = vmatprep.mubr.bf16.mxu0 0
        %2026 = vmatmul.mubr.bf16.gmra.mrb[0].mxu0 %v393
        %v2027 = vpop.f32.mrb[0].mxu0
        %v2028 = vadd.f32 0.0, %v2027
        %v2029 = vpop.f32.mrb[0].mxu0
        %v2030 = vpop.f32.mrb[0].mxu0
        %v2031 = vadd.f32 0.0, %v2030
        %v2032 = vpop.f32.mrb[0].mxu0
        %2033 = vmatprep.mubr.bf16.mxu0 0
        %2034 = vmatmul.mubr.bf16.gmra.mrb[0].mxu0 %v396
        %v2035 = vpop.f32.mrb[0].mxu0
        %v2036 = vadd.f32 0.0, %v2035
        %v2037 = vpop.f32.mrb[0].mxu0
        %v2038 = vpop.f32.mrb[0].mxu0
        %v2039 = vadd.f32 0.0, %v2038
        %v2040 = vpop.f32.mrb[0].mxu0
        %2041 = vmatprep.mubr.bf16.mxu0 0
        %2042 = vmatmul.mubr.bf16.gmra.mrb[0].mxu0 %v399
        %v2043 = vpop.f32.mrb[0].mxu0
        %v2044 = vadd.f32 0.0, %v2043
        %v2045 = vpop.f32.mrb[0].mxu0
        %v2046 = vpop.f32.mrb[0].mxu0
        %v2047 = vadd.f32 0.0, %v2046
        %v2048 = vpop.f32.mrb[0].mxu0
        %2049 = vmatprep.mubr.bf16.mxu0 0
        %2050 = vmatmul.mubr.bf16.gmra.mrb[0].mxu0 %v402
        %v2051 = vpop.f32.mrb[0].mxu0
        %v2052 = vadd.f32 0.0, %v2051
        %v2053 = vpop.f32.mrb[0].mxu0
        %v2054 = vpop.f32.mrb[0].mxu0
        %v2055 = vadd.f32 0.0, %v2054
        %v2056 = vpop.f32.mrb[0].mxu0
        %2057 = vmatprep.mubr.bf16.mxu0 0
        %2058 = vmatmul.mubr.bf16.gmra.mrb[0].mxu0 %v405
        %v2059 = vpop.f32.mrb[0].mxu0
        %v2060 = vadd.f32 0.0, %v2059
        %v2061 = vpop.f32.mrb[0].mxu0
        %v2062 = vpop.f32.mrb[0].mxu0
        %v2063 = vadd.f32 0.0, %v2062
        %v2064 = vpop.f32.mrb[0].mxu0
        %2065 = vmatprep.mubr.bf16.mxu0 0
        %2066 = vmatmul.mubr.bf16.gmra.mrb[0].mxu0 %v408
        %v2067 = vpop.f32.mrb[0].mxu0
        %v2068 = vadd.f32 0.0, %v2067
        %v2069 = vpop.f32.mrb[0].mxu0
        %v2070 = vpop.f32.mrb[0].mxu0
        %v2071 = vadd.f32 0.0, %v2070
        %v2072 = vpop.f32.mrb[0].mxu0
        %2073 = vmatprep.mubr.bf16.mxu0 0
        %2074 = vmatmul.mubr.bf16.gmra.mrb[0].mxu0 %v411
        %v2075 = vpop.f32.mrb[0].mxu0
        %v2076 = vadd.f32 0.0, %v2075
        %v2077 = vpop.f32.mrb[0].mxu0
        %v2078 = vpop.f32.mrb[0].mxu0
        %v2079 = vadd.f32 0.0, %v2078
        %v2080 = vpop.f32.mrb[0].mxu0
        %2081 = vmatprep.mubr.bf16.mxu0 0
        %2082 = vmatmul.mubr.bf16.gmra.mrb[0].mxu0 %v414
        %v2083 = vpop.f32.mrb[0].mxu0
        %v2084 = vadd.f32 0.0, %v2083
        %v2085 = vpop.f32.mrb[0].mxu0
        %v2086 = vpop.f32.mrb[0].mxu0
        %v2087 = vadd.f32 0.0, %v2086
        %v2088 = vpop.f32.mrb[0].mxu0
        %2089 = vdwg.mxu0
        %v2122 = vrot.slane %v1964, 7
        %v2123 = vrot.slane %v1967, 7
        %v2124 = vsel %vm605, %v2122, %v2123
        %v2125 = vrot.slane %v1972, 7
        %v2126 = vsel %vm605, %v2123, %v2125
        %v2127 = vrot.slane %v1975, 7
        %v2128 = vsel %vm605, %v2125, %v2127
        %v2129 = vrot.slane %v1980, 7
        %v2130 = vsel %vm605, %v2127, %v2129
        %v2131 = vrot.slane %v1983, 7
        %v2132 = vsel %vm605, %v2129, %v2131
        %v2133 = vrot.slane %v1988, 7
        %v2134 = vsel %vm605, %v2131, %v2133
        %v2135 = vrot.slane %v1991, 7
        %v2136 = vsel %vm605, %v2133, %v2135
        %v2137 = vrot.slane %v1996, 7
        %v2138 = vsel %vm605, %v2135, %v2137
        %v2139 = vrot.slane %v1999, 7
        %v2140 = vsel %vm605, %v2137, %v2139
        %v2141 = vrot.slane %v2004, 7
        %v2142 = vsel %vm605, %v2139, %v2141
        %v2143 = vrot.slane %v2007, 7
        %v2144 = vsel %vm605, %v2141, %v2143
        %v2145 = vrot.slane %v2012, 7
        %v2146 = vsel %vm605, %v2143, %v2145
        %v2147 = vrot.slane %v2015, 7
        %v2148 = vsel %vm605, %v2145, %v2147
        %v2149 = vrot.slane %v2020, 7
        %v2150 = vsel %vm605, %v2147, %v2149
        %v2151 = vrot.slane %v2023, 7
        %v2152 = vsel %vm605, %v2149, %v2151
        %v2153 = vrot.slane %v2028, 7
        %v2154 = vsel %vm605, %v2151, %v2153
        %v2155 = vrot.slane %v2031, 7
        %v2156 = vsel %vm605, %v2153, %v2155
        %v2157 = vrot.slane %v2036, 7
        %v2158 = vsel %vm605, %v2155, %v2157
        %v2159 = vrot.slane %v2039, 7
        %v2160 = vsel %vm605, %v2157, %v2159
        %v2161 = vrot.slane %v2044, 7
        %v2162 = vsel %vm605, %v2159, %v2161
        %v2163 = vrot.slane %v2047, 7
        %v2164 = vsel %vm605, %v2161, %v2163
        %v2165 = vrot.slane %v2052, 7
        %v2166 = vsel %vm605, %v2163, %v2165
        %v2167 = vrot.slane %v2055, 7
        %v2168 = vsel %vm605, %v2165, %v2167
        %v2169 = vrot.slane %v2060, 7
        %v2170 = vsel %vm605, %v2167, %v2169
        %v2171 = vrot.slane %v2063, 7
        %v2172 = vsel %vm605, %v2169, %v2171
        %v2173 = vrot.slane %v2068, 7
        %v2174 = vsel %vm605, %v2171, %v2173
        %v2175 = vrot.slane %v2071, 7
        %v2176 = vsel %vm605, %v2173, %v2175
        %v2177 = vrot.slane %v2076, 7
        %v2178 = vsel %vm605, %v2175, %v2177
        %v2179 = vrot.slane %v2079, 7
        %v2180 = vsel %vm605, %v2177, %v2179
        %v2181 = vrot.slane %v2084, 7
        %v2182 = vsel %vm605, %v2179, %v2181
        %v2183 = vrot.slane %v2087, 7
        %v2184 = vsel %vm605, %v2181, %v2183
        %v2217 = vsel %vm605, 0.0, %v2122
        %s2218 = scalar_lea.vmem [#allocation2], 768
        %v2219 = vld [vmem:[%s2218] sm:$0xff]
        %v2220 = vld [vmem:[%s2218 + $0x8] sm:$0xff]
        %v2221 = vld [vmem:[%s2218 + $0x10] sm:$0xff]
        %v2222 = vld [vmem:[%s2218 + $0x18] sm:$0xff]
        %v2223 = vld [vmem:[%s2218 + $0x20] sm:$0xff]
        %v2224 = vld [vmem:[%s2218 + $0x28] sm:$0xff]
        %v2225 = vld [vmem:[%s2218 + $0x30] sm:$0xff]
        %v2226 = vld [vmem:[%s2218 + $0x38] sm:$0xff]
        %v2227 = vld [vmem:[%s2218 + $0x40] sm:$0xff]
        %v2228 = vld [vmem:[%s2218 + $0x48] sm:$0xff]
        %v2229 = vld [vmem:[%s2218 + $0x50] sm:$0xff]
        %v2230 = vld [vmem:[%s2218 + $0x58] sm:$0xff]
        %v2231 = vld [vmem:[%s2218 + $0x60] sm:$0xff]
        %v2232 = vld [vmem:[%s2218 + $0x68] sm:$0xff]
        %v2233 = vld [vmem:[%s2218 + $0x70] sm:$0xff]
        %v2234 = vld [vmem:[%s2218 + $0x78] sm:$0xff]
        %v2235 = vld [vmem:[%s2218 + $0x80] sm:$0xff]
        %v2236 = vld [vmem:[%s2218 + $0x88] sm:$0xff]
        %v2237 = vld [vmem:[%s2218 + $0x90] sm:$0xff]
        %v2238 = vld [vmem:[%s2218 + $0x98] sm:$0xff]
        %v2239 = vld [vmem:[%s2218 + $0xa0] sm:$0xff]
        %v2240 = vld [vmem:[%s2218 + $0xa8] sm:$0xff]
        %v2241 = vld [vmem:[%s2218 + $0xb0] sm:$0xff]
        %v2242 = vld [vmem:[%s2218 + $0xb8] sm:$0xff]
        %v2243 = vld [vmem:[%s2218 + $0xc0] sm:$0xff]
        %v2244 = vld [vmem:[%s2218 + $0xc8] sm:$0xff]
        %v2245 = vld [vmem:[%s2218 + $0xd0] sm:$0xff]
        %v2246 = vld [vmem:[%s2218 + $0xd8] sm:$0xff]
        %v2247 = vld [vmem:[%s2218 + $0xe0] sm:$0xff]
        %v2248 = vld [vmem:[%s2218 + $0xe8] sm:$0xff]
        %v2249 = vld [vmem:[%s2218 + $0xf0] sm:$0xff]
        %v2250 = vld [vmem:[%s2218 + $0xf8] sm:$0xff]
        %2252 = vset.pattern.permute.xlu0 0
        %2253 = vperm.xlu0 %2252, %v2219
        %v2254 = vpop.permute.xlu0 %2253
        %2257 = vset.pattern.permute.xlu0 0
        %2258 = vperm.xlu0 %2257, %v2220
        %v2259 = vpop.permute.xlu0 %2258
        %2262 = vset.pattern.permute.xlu0 0
        %2263 = vperm.xlu0 %2262, %v2221
        %v2264 = vpop.permute.xlu0 %2263
        %2267 = vset.pattern.permute.xlu0 0
        %2268 = vperm.xlu0 %2267, %v2222
        %v2269 = vpop.permute.xlu0 %2268
        %2272 = vset.pattern.permute.xlu0 0
        %2273 = vperm.xlu0 %2272, %v2223
        %v2274 = vpop.permute.xlu0 %2273
        %2277 = vset.pattern.permute.xlu0 0
        %2278 = vperm.xlu0 %2277, %v2224
        %v2279 = vpop.permute.xlu0 %2278
        %2282 = vset.pattern.permute.xlu0 0
        %2283 = vperm.xlu0 %2282, %v2225
        %v2284 = vpop.permute.xlu0 %2283
        %2287 = vset.pattern.permute.xlu0 0
        %2288 = vperm.xlu0 %2287, %v2226
        %v2289 = vpop.permute.xlu0 %2288
        %2292 = vset.pattern.permute.xlu0 0
        %2293 = vperm.xlu0 %2292, %v2227
        %v2294 = vpop.permute.xlu0 %2293
        %2297 = vset.pattern.permute.xlu0 0
        %2298 = vperm.xlu0 %2297, %v2228
        %v2299 = vpop.permute.xlu0 %2298
        %2302 = vset.pattern.permute.xlu0 0
        %2303 = vperm.xlu0 %2302, %v2229
        %v2304 = vpop.permute.xlu0 %2303
        %2307 = vset.pattern.permute.xlu0 0
        %2308 = vperm.xlu0 %2307, %v2230
        %v2309 = vpop.permute.xlu0 %2308
        %2312 = vset.pattern.permute.xlu0 0
        %2313 = vperm.xlu0 %2312, %v2231
        %v2314 = vpop.permute.xlu0 %2313
        %2317 = vset.pattern.permute.xlu0 0
        %2318 = vperm.xlu0 %2317, %v2232
        %v2319 = vpop.permute.xlu0 %2318
        %2322 = vset.pattern.permute.xlu0 0
        %2323 = vperm.xlu0 %2322, %v2233
        %v2324 = vpop.permute.xlu0 %2323
        %2327 = vset.pattern.permute.xlu0 0
        %2328 = vperm.xlu0 %2327, %v2234
        %v2329 = vpop.permute.xlu0 %2328
        %2332 = vset.pattern.permute.xlu0 0
        %2333 = vperm.xlu0 %2332, %v2235
        %v2334 = vpop.permute.xlu0 %2333
        %2337 = vset.pattern.permute.xlu0 0
        %2338 = vperm.xlu0 %2337, %v2236
        %v2339 = vpop.permute.xlu0 %2338
        %2342 = vset.pattern.permute.xlu0 0
        %2343 = vperm.xlu0 %2342, %v2237
        %v2344 = vpop.permute.xlu0 %2343
        %2347 = vset.pattern.permute.xlu0 0
        %2348 = vperm.xlu0 %2347, %v2238
        %v2349 = vpop.permute.xlu0 %2348
        %2352 = vset.pattern.permute.xlu0 0
        %2353 = vperm.xlu0 %2352, %v2239
        %v2354 = vpop.permute.xlu0 %2353
        %2357 = vset.pattern.permute.xlu0 0
        %2358 = vperm.xlu0 %2357, %v2240
        %v2359 = vpop.permute.xlu0 %2358
        %2362 = vset.pattern.permute.xlu0 0
        %2363 = vperm.xlu0 %2362, %v2241
        %v2364 = vpop.permute.xlu0 %2363
        %2367 = vset.pattern.permute.xlu0 0
        %2368 = vperm.xlu0 %2367, %v2242
        %v2369 = vpop.permute.xlu0 %2368
        %2372 = vset.pattern.permute.xlu0 0
        %2373 = vperm.xlu0 %2372, %v2243
        %v2374 = vpop.permute.xlu0 %2373
        %2377 = vset.pattern.permute.xlu0 0
        %2378 = vperm.xlu0 %2377, %v2244
        %v2379 = vpop.permute.xlu0 %2378
        %2382 = vset.pattern.permute.xlu0 0
        %2383 = vperm.xlu0 %2382, %v2245
        %v2384 = vpop.permute.xlu0 %2383
        %2387 = vset.pattern.permute.xlu0 0
        %2388 = vperm.xlu0 %2387, %v2246
        %v2389 = vpop.permute.xlu0 %2388
        %2392 = vset.pattern.permute.xlu0 0
        %2393 = vperm.xlu0 %2392, %v2247
        %v2394 = vpop.permute.xlu0 %2393
        %2397 = vset.pattern.permute.xlu0 0
        %2398 = vperm.xlu0 %2397, %v2248
        %v2399 = vpop.permute.xlu0 %2398
        %2402 = vset.pattern.permute.xlu0 0
        %2403 = vperm.xlu0 %2402, %v2249
        %v2404 = vpop.permute.xlu0 %2403
        %2407 = vset.pattern.permute.xlu0 0
        %2408 = vperm.xlu0 %2407, %v2250
        %v2409 = vpop.permute.xlu0 %2408
        %v2411 = vmul.f32 %v2217, %v2254
        %v2412 = vmul.f32 %v2124, %v2259
        %v2413 = vmul.f32 %v2126, %v2264
        %v2414 = vmul.f32 %v2128, %v2269
        %v2415 = vmul.f32 %v2130, %v2274
        %v2416 = vmul.f32 %v2132, %v2279
        %v2417 = vmul.f32 %v2134, %v2284
        %v2418 = vmul.f32 %v2136, %v2289
        %v2419 = vmul.f32 %v2138, %v2294
        %v2420 = vmul.f32 %v2140, %v2299
        %v2421 = vmul.f32 %v2142, %v2304
        %v2422 = vmul.f32 %v2144, %v2309
        %v2423 = vmul.f32 %v2146, %v2314
        %v2424 = vmul.f32 %v2148, %v2319
        %v2425 = vmul.f32 %v2150, %v2324
        %v2426 = vmul.f32 %v2152, %v2329
        %v2427 = vmul.f32 %v2154, %v2334
        %v2428 = vmul.f32 %v2156, %v2339
        %v2429 = vmul.f32 %v2158, %v2344
        %v2430 = vmul.f32 %v2160, %v2349
        %v2431 = vmul.f32 %v2162, %v2354
        %v2432 = vmul.f32 %v2164, %v2359
        %v2433 = vmul.f32 %v2166, %v2364
        %v2434 = vmul.f32 %v2168, %v2369
        %v2435 = vmul.f32 %v2170, %v2374
        %v2436 = vmul.f32 %v2172, %v2379
        %v2437 = vmul.f32 %v2174, %v2384
        %v2438 = vmul.f32 %v2176, %v2389
        %v2439 = vmul.f32 %v2178, %v2394
        %v2440 = vmul.f32 %v2180, %v2399
        %v2441 = vmul.f32 %v2182, %v2404
        %v2442 = vmul.f32 %v2184, %v2409
        %v2443 = vadd.f32 %v1880, %v2411
        %v2444 = vadd.f32 %v1881, %v2412
        %v2445 = vadd.f32 %v1882, %v2413
        %v2446 = vadd.f32 %v1883, %v2414
        %v2447 = vadd.f32 %v1884, %v2415
        %v2448 = vadd.f32 %v1885, %v2416
        %v2449 = vadd.f32 %v1886, %v2417
        %v2450 = vadd.f32 %v1887, %v2418
        %v2451 = vadd.f32 %v1888, %v2419
        %v2452 = vadd.f32 %v1889, %v2420
        %v2453 = vadd.f32 %v1890, %v2421
        %v2454 = vadd.f32 %v1891, %v2422
        %v2455 = vadd.f32 %v1892, %v2423
        %v2456 = vadd.f32 %v1893, %v2424
        %v2457 = vadd.f32 %v1894, %v2425
        %v2458 = vadd.f32 %v1895, %v2426
        %v2459 = vadd.f32 %v1896, %v2427
        %v2460 = vadd.f32 %v1897, %v2428
        %v2461 = vadd.f32 %v1898, %v2429
        %v2462 = vadd.f32 %v1899, %v2430
        %v2463 = vadd.f32 %v1900, %v2431
        %v2464 = vadd.f32 %v1901, %v2432
        %v2465 = vadd.f32 %v1902, %v2433
        %v2466 = vadd.f32 %v1903, %v2434
        %v2467 = vadd.f32 %v1904, %v2435
        %v2468 = vadd.f32 %v1905, %v2436
        %v2469 = vadd.f32 %v1906, %v2437
        %v2470 = vadd.f32 %v1907, %v2438
        %v2471 = vadd.f32 %v1908, %v2439
        %v2472 = vadd.f32 %v1909, %v2440
        %v2473 = vadd.f32 %v1910, %v2441
        %v2474 = vadd.f32 %v1911, %v2442
        %s2475 = scalar_lea.vmem %s1, 64
        %v2476 = vld [vmem:[%s2475] sm:$0xf]
        %v2477 = vld [vmem:[%s2475 + $0x4] sm:$0xf]
        %v2478 = vld [vmem:[%s2475 + $0x8] sm:$0xf]
        %v2479 = vld [vmem:[%s2475 + $0xc] sm:$0xf]
        %v2484 = vunpack.c.l.b16 %v2476
        %v2485 = vunpack.c.l.b16 %v2477
        %v2486 = vunpack.c.l.b16 %v2478
        %v2487 = vunpack.c.l.b16 %v2479
        %v2488 = vpack.c.b16 %v2485, %v2484
        %v2489 = vpack.c.b16 %v2487, %v2486
        %2492 = vmatprep.subr.bf16.mxu0 0
        %2493 = vmatpush1.bf16.msra.mxu0 %v2488
        %2494 = vmatprep.subr.bf16.mxu0 0
        %2495 = vmatpush1.bf16.msra.mxu0 %v2489
        %2496 = vmatprep.subr.bf16.mxu0 0
        %2497 = vmatpush1.bf16.msra.mxu0 0
        %2498 = vmatprep.subr.bf16.mxu0 0
        %2499 = vmatpush1.bf16.msra.mxu0 0
        %2500 = vmatprep.subr.bf16.mxu0 0
        %2501 = vmatpush1.bf16.msra.mxu0 0
        %2502 = vmatprep.subr.bf16.mxu0 0
        %2503 = vmatpush1.bf16.msra.mxu0 0
        %2504 = vmatprep.subr.bf16.mxu0 0
        %2505 = vmatpush1.bf16.msra.mxu0 0
        %2506 = vmatprep.subr.bf16.mxu0 0
        %2507 = vmatpush1.bf16.msra.mxu0 0
        %2508 = vmatprep.subr.bf16.mxu0 0
        %2509 = vmatpush1.bf16.msra.mxu0 0
        %2510 = vmatprep.subr.bf16.mxu0 0
        %2511 = vmatpush1.bf16.msra.mxu0 0
        %2512 = vmatprep.subr.bf16.mxu0 0
        %2513 = vmatpush1.bf16.msra.mxu0 0
        %2514 = vmatprep.subr.bf16.mxu0 0
        %2515 = vmatpush1.bf16.msra.mxu0 0
        %2516 = vmatprep.subr.bf16.mxu0 0
        %2517 = vmatpush1.bf16.msra.mxu0 0
        %2518 = vmatprep.subr.bf16.mxu0 0
        %2519 = vmatpush1.bf16.msra.mxu0 0
        %2520 = vmatprep.subr.bf16.mxu0 0
        %2521 = vmatpush1.bf16.msra.mxu0 0
        %2522 = vmatprep.subr.bf16.mxu0 0
        %2523 = vmatpush1.bf16.msra.mxu0 0
        %2524 = vmatprep.mubr.bf16.mxu0 0
        %2525 = vmatmul.mubr.bf16.gmra.mrb[0].mxu0 %v369
        %v2526 = vpop.f32.mrb[0].mxu0
        %v2527 = vadd.f32 0.0, %v2526
        %v2528 = vpop.f32.mrb[0].mxu0
        %v2529 = vpop.f32.mrb[0].mxu0
        %v2530 = vadd.f32 0.0, %v2529
        %v2531 = vpop.f32.mrb[0].mxu0
        %2532 = vmatprep.mubr.bf16.mxu0 0
        %2533 = vmatmul.mubr.bf16.gmra.mrb[0].mxu0 %v372
        %v2534 = vpop.f32.mrb[0].mxu0
        %v2535 = vadd.f32 0.0, %v2534
        %v2536 = vpop.f32.mrb[0].mxu0
        %v2537 = vpop.f32.mrb[0].mxu0
        %v2538 = vadd.f32 0.0, %v2537
        %v2539 = vpop.f32.mrb[0].mxu0
        %2540 = vmatprep.mubr.bf16.mxu0 0
        %2541 = vmatmul.mubr.bf16.gmra.mrb[0].mxu0 %v375
        %v2542 = vpop.f32.mrb[0].mxu0
        %v2543 = vadd.f32 0.0, %v2542
        %v2544 = vpop.f32.mrb[0].mxu0
        %v2545 = vpop.f32.mrb[0].mxu0
        %v2546 = vadd.f32 0.0, %v2545
        %v2547 = vpop.f32.mrb[0].mxu0
        %2548 = vmatprep.mubr.bf16.mxu0 0
        %2549 = vmatmul.mubr.bf16.gmra.mrb[0].mxu0 %v378
        %v2550 = vpop.f32.mrb[0].mxu0
        %v2551 = vadd.f32 0.0, %v2550
        %v2552 = vpop.f32.mrb[0].mxu0
        %v2553 = vpop.f32.mrb[0].mxu0
        %v2554 = vadd.f32 0.0, %v2553
        %v2555 = vpop.f32.mrb[0].mxu0
        %2556 = vmatprep.mubr.bf16.mxu0 0
        %2557 = vmatmul.mubr.bf16.gmra.mrb[0].mxu0 %v381
        %v2558 = vpop.f32.mrb[0].mxu0
        %v2559 = vadd.f32 0.0, %v2558
        %v2560 = vpop.f32.mrb[0].mxu0
        %v2561 = vpop.f32.mrb[0].mxu0
        %v2562 = vadd.f32 0.0, %v2561
        %v2563 = vpop.f32.mrb[0].mxu0
        %2564 = vmatprep.mubr.bf16.mxu0 0
        %2565 = vmatmul.mubr.bf16.gmra.mrb[0].mxu0 %v384
        %v2566 = vpop.f32.mrb[0].mxu0
        %v2567 = vadd.f32 0.0, %v2566
        %v2568 = vpop.f32.mrb[0].mxu0
        %v2569 = vpop.f32.mrb[0].mxu0
        %v2570 = vadd.f32 0.0, %v2569
        %v2571 = vpop.f32.mrb[0].mxu0
        %2572 = vmatprep.mubr.bf16.mxu0 0
        %2573 = vmatmul.mubr.bf16.gmra.mrb[0].mxu0 %v387
        %v2574 = vpop.f32.mrb[0].mxu0
        %v2575 = vadd.f32 0.0, %v2574
        %v2576 = vpop.f32.mrb[0].mxu0
        %v2577 = vpop.f32.mrb[0].mxu0
        %v2578 = vadd.f32 0.0, %v2577
        %v2579 = vpop.f32.mrb[0].mxu0
        %2580 = vmatprep.mubr.bf16.mxu0 0
        %2581 = vmatmul.mubr.bf16.gmra.mrb[0].mxu0 %v390
        %v2582 = vpop.f32.mrb[0].mxu0
        %v2583 = vadd.f32 0.0, %v2582
        %v2584 = vpop.f32.mrb[0].mxu0
        %v2585 = vpop.f32.mrb[0].mxu0
        %v2586 = vadd.f32 0.0, %v2585
        %v2587 = vpop.f32.mrb[0].mxu0
        %2588 = vmatprep.mubr.bf16.mxu0 0
        %2589 = vmatmul.mubr.bf16.gmra.mrb[0].mxu0 %v393
        %v2590 = vpop.f32.mrb[0].mxu0
        %v2591 = vadd.f32 0.0, %v2590
        %v2592 = vpop.f32.mrb[0].mxu0
        %v2593 = vpop.f32.mrb[0].mxu0
        %v2594 = vadd.f32 0.0, %v2593
        %v2595 = vpop.f32.mrb[0].mxu0
        %2596 = vmatprep.mubr.bf16.mxu0 0
        %2597 = vmatmul.mubr.bf16.gmra.mrb[0].mxu0 %v396
        %v2598 = vpop.f32.mrb[0].mxu0
        %v2599 = vadd.f32 0.0, %v2598
        %v2600 = vpop.f32.mrb[0].mxu0
        %v2601 = vpop.f32.mrb[0].mxu0
        %v2602 = vadd.f32 0.0, %v2601
        %v2603 = vpop.f32.mrb[0].mxu0
        %2604 = vmatprep.mubr.bf16.mxu0 0
        %2605 = vmatmul.mubr.bf16.gmra.mrb[0].mxu0 %v399
        %v2606 = vpop.f32.mrb[0].mxu0
        %v2607 = vadd.f32 0.0, %v2606
        %v2608 = vpop.f32.mrb[0].mxu0
        %v2609 = vpop.f32.mrb[0].mxu0
        %v2610 = vadd.f32 0.0, %v2609
        %v2611 = vpop.f32.mrb[0].mxu0
        %2612 = vmatprep.mubr.bf16.mxu0 0
        %2613 = vmatmul.mubr.bf16.gmra.mrb[0].mxu0 %v402
        %v2614 = vpop.f32.mrb[0].mxu0
        %v2615 = vadd.f32 0.0, %v2614
        %v2616 = vpop.f32.mrb[0].mxu0
        %v2617 = vpop.f32.mrb[0].mxu0
        %v2618 = vadd.f32 0.0, %v2617
        %v2619 = vpop.f32.mrb[0].mxu0
        %2620 = vmatprep.mubr.bf16.mxu0 0
        %2621 = vmatmul.mubr.bf16.gmra.mrb[0].mxu0 %v405
        %v2622 = vpop.f32.mrb[0].mxu0
        %v2623 = vadd.f32 0.0, %v2622
        %v2624 = vpop.f32.mrb[0].mxu0
        %v2625 = vpop.f32.mrb[0].mxu0
        %v2626 = vadd.f32 0.0, %v2625
        %v2627 = vpop.f32.mrb[0].mxu0
        %2628 = vmatprep.mubr.bf16.mxu0 0
        %2629 = vmatmul.mubr.bf16.gmra.mrb[0].mxu0 %v408
        %v2630 = vpop.f32.mrb[0].mxu0
        %v2631 = vadd.f32 0.0, %v2630
        %v2632 = vpop.f32.mrb[0].mxu0
        %v2633 = vpop.f32.mrb[0].mxu0
        %v2634 = vadd.f32 0.0, %v2633
        %v2635 = vpop.f32.mrb[0].mxu0
        %2636 = vmatprep.mubr.bf16.mxu0 0
        %2637 = vmatmul.mubr.bf16.gmra.mrb[0].mxu0 %v411
        %v2638 = vpop.f32.mrb[0].mxu0
        %v2639 = vadd.f32 0.0, %v2638
        %v2640 = vpop.f32.mrb[0].mxu0
        %v2641 = vpop.f32.mrb[0].mxu0
        %v2642 = vadd.f32 0.0, %v2641
        %v2643 = vpop.f32.mrb[0].mxu0
        %2644 = vmatprep.mubr.bf16.mxu0 0
        %2645 = vmatmul.mubr.bf16.gmra.mrb[0].mxu0 %v414
        %v2646 = vpop.f32.mrb[0].mxu0
        %v2647 = vadd.f32 0.0, %v2646
        %v2648 = vpop.f32.mrb[0].mxu0
        %v2649 = vpop.f32.mrb[0].mxu0
        %v2650 = vadd.f32 0.0, %v2649
        %v2651 = vpop.f32.mrb[0].mxu0
        %2652 = vdwg.mxu0
        %v2653 = vadd.f32 %v2443, %v2527
        %v2654 = vadd.f32 %v2444, %v2530
        %v2655 = vadd.f32 %v2445, %v2535
        %v2656 = vadd.f32 %v2446, %v2538
        %v2657 = vadd.f32 %v2447, %v2543
        %v2658 = vadd.f32 %v2448, %v2546
        %v2659 = vadd.f32 %v2449, %v2551
        %v2660 = vadd.f32 %v2450, %v2554
        %v2661 = vadd.f32 %v2451, %v2559
        %v2662 = vadd.f32 %v2452, %v2562
        %v2663 = vadd.f32 %v2453, %v2567
        %v2664 = vadd.f32 %v2454, %v2570
        %v2665 = vadd.f32 %v2455, %v2575
        %v2666 = vadd.f32 %v2456, %v2578
        %v2667 = vadd.f32 %v2457, %v2583
        %v2668 = vadd.f32 %v2458, %v2586
        %v2669 = vadd.f32 %v2459, %v2591
        %v2670 = vadd.f32 %v2460, %v2594
        %v2671 = vadd.f32 %v2461, %v2599
        %v2672 = vadd.f32 %v2462, %v2602
        %v2673 = vadd.f32 %v2463, %v2607
        %v2674 = vadd.f32 %v2464, %v2610
        %v2675 = vadd.f32 %v2465, %v2615
        %v2676 = vadd.f32 %v2466, %v2618
        %v2677 = vadd.f32 %v2467, %v2623
        %v2678 = vadd.f32 %v2468, %v2626
        %v2679 = vadd.f32 %v2469, %v2631
        %v2680 = vadd.f32 %v2470, %v2634
        %v2681 = vadd.f32 %v2471, %v2639
        %v2682 = vadd.f32 %v2472, %v2642
        %v2683 = vadd.f32 %v2473, %v2647
        %v2684 = vadd.f32 %v2474, %v2650
        %s2685 = scalar_lea.vmem %s1, 80
        %v2686 = vld [vmem:[%s2685] sm:$0xf]
        %v2687 = vld [vmem:[%s2685 + $0x4] sm:$0xf]
        %v2688 = vld [vmem:[%s2685 + $0x8] sm:$0xf]
        %v2689 = vld [vmem:[%s2685 + $0xc] sm:$0xf]
        %v2694 = vunpack.c.l.b16 %v2686
        %v2695 = vunpack.c.l.b16 %v2687
        %v2696 = vunpack.c.l.b16 %v2688
        %v2697 = vunpack.c.l.b16 %v2689
        %v2698 = vpack.c.b16 %v2695, %v2694
        %v2699 = vpack.c.b16 %v2697, %v2696
        %2702 = vmatprep.subr.bf16.mxu0 0
        %2703 = vmatpush1.bf16.msra.mxu0 %v2698
        %2704 = vmatprep.subr.bf16.mxu0 0
        %2705 = vmatpush1.bf16.msra.mxu0 %v2699
        %2706 = vmatprep.subr.bf16.mxu0 0
        %2707 = vmatpush1.bf16.msra.mxu0 0
        %2708 = vmatprep.subr.bf16.mxu0 0
        %2709 = vmatpush1.bf16.msra.mxu0 0
        %2710 = vmatprep.subr.bf16.mxu0 0
        %2711 = vmatpush1.bf16.msra.mxu0 0
        %2712 = vmatprep.subr.bf16.mxu0 0
        %2713 = vmatpush1.bf16.msra.mxu0 0
        %2714 = vmatprep.subr.bf16.mxu0 0
        %2715 = vmatpush1.bf16.msra.mxu0 0
        %2716 = vmatprep.subr.bf16.mxu0 0
        %2717 = vmatpush1.bf16.msra.mxu0 0
        %2718 = vmatprep.subr.bf16.mxu0 0
        %2719 = vmatpush1.bf16.msra.mxu0 0
        %2720 = vmatprep.subr.bf16.mxu0 0
        %2721 = vmatpush1.bf16.msra.mxu0 0
        %2722 = vmatprep.subr.bf16.mxu0 0
        %2723 = vmatpush1.bf16.msra.mxu0 0
        %2724 = vmatprep.subr.bf16.mxu0 0
        %2725 = vmatpush1.bf16.msra.mxu0 0
        %2726 = vmatprep.subr.bf16.mxu0 0
        %2727 = vmatpush1.bf16.msra.mxu0 0
        %2728 = vmatprep.subr.bf16.mxu0 0
        %2729 = vmatpush1.bf16.msra.mxu0 0
        %2730 = vmatprep.subr.bf16.mxu0 0
        %2731 = vmatpush1.bf16.msra.mxu0 0
        %2732 = vmatprep.subr.bf16.mxu0 0
        %2733 = vmatpush1.bf16.msra.mxu0 0
        %2734 = vmatprep.mubr.bf16.mxu0 0
        %2735 = vmatmul.mubr.bf16.gmra.mrb[0].mxu0 %v369
        %v2736 = vpop.f32.mrb[0].mxu0
        %v2737 = vadd.f32 0.0, %v2736
        %v2738 = vpop.f32.mrb[0].mxu0
        %v2739 = vpop.f32.mrb[0].mxu0
        %v2740 = vadd.f32 0.0, %v2739
        %v2741 = vpop.f32.mrb[0].mxu0
        %2742 = vmatprep.mubr.bf16.mxu0 0
        %2743 = vmatmul.mubr.bf16.gmra.mrb[0].mxu0 %v372
        %v2744 = vpop.f32.mrb[0].mxu0
        %v2745 = vadd.f32 0.0, %v2744
        %v2746 = vpop.f32.mrb[0].mxu0
        %v2747 = vpop.f32.mrb[0].mxu0
        %v2748 = vadd.f32 0.0, %v2747
        %v2749 = vpop.f32.mrb[0].mxu0
        %2750 = vmatprep.mubr.bf16.mxu0 0
        %2751 = vmatmul.mubr.bf16.gmra.mrb[0].mxu0 %v375
        %v2752 = vpop.f32.mrb[0].mxu0
        %v2753 = vadd.f32 0.0, %v2752
        %v2754 = vpop.f32.mrb[0].mxu0
        %v2755 = vpop.f32.mrb[0].mxu0
        %v2756 = vadd.f32 0.0, %v2755
        %v2757 = vpop.f32.mrb[0].mxu0
        %2758 = vmatprep.mubr.bf16.mxu0 0
        %2759 = vmatmul.mubr.bf16.gmra.mrb[0].mxu0 %v378
        %v2760 = vpop.f32.mrb[0].mxu0
        %v2761 = vadd.f32 0.0, %v2760
        %v2762 = vpop.f32.mrb[0].mxu0
        %v2763 = vpop.f32.mrb[0].mxu0
        %v2764 = vadd.f32 0.0, %v2763
        %v2765 = vpop.f32.mrb[0].mxu0
        %2766 = vmatprep.mubr.bf16.mxu0 0
        %2767 = vmatmul.mubr.bf16.gmra.mrb[0].mxu0 %v381
        %v2768 = vpop.f32.mrb[0].mxu0
        %v2769 = vadd.f32 0.0, %v2768
        %v2770 = vpop.f32.mrb[0].mxu0
        %v2771 = vpop.f32.mrb[0].mxu0
        %v2772 = vadd.f32 0.0, %v2771
        %v2773 = vpop.f32.mrb[0].mxu0
        %2774 = vmatprep.mubr.bf16.mxu0 0
        %2775 = vmatmul.mubr.bf16.gmra.mrb[0].mxu0 %v384
        %v2776 = vpop.f32.mrb[0].mxu0
        %v2777 = vadd.f32 0.0, %v2776
        %v2778 = vpop.f32.mrb[0].mxu0
        %v2779 = vpop.f32.mrb[0].mxu0
        %v2780 = vadd.f32 0.0, %v2779
        %v2781 = vpop.f32.mrb[0].mxu0
        %2782 = vmatprep.mubr.bf16.mxu0 0
        %2783 = vmatmul.mubr.bf16.gmra.mrb[0].mxu0 %v387
        %v2784 = vpop.f32.mrb[0].mxu0
        %v2785 = vadd.f32 0.0, %v2784
        %v2786 = vpop.f32.mrb[0].mxu0
        %v2787 = vpop.f32.mrb[0].mxu0
        %v2788 = vadd.f32 0.0, %v2787
        %v2789 = vpop.f32.mrb[0].mxu0
        %2790 = vmatprep.mubr.bf16.mxu0 0
        %2791 = vmatmul.mubr.bf16.gmra.mrb[0].mxu0 %v390
        %v2792 = vpop.f32.mrb[0].mxu0
        %v2793 = vadd.f32 0.0, %v2792
        %v2794 = vpop.f32.mrb[0].mxu0
        %v2795 = vpop.f32.mrb[0].mxu0
        %v2796 = vadd.f32 0.0, %v2795
        %v2797 = vpop.f32.mrb[0].mxu0
        %2798 = vmatprep.mubr.bf16.mxu0 0
        %2799 = vmatmul.mubr.bf16.gmra.mrb[0].mxu0 %v393
        %v2800 = vpop.f32.mrb[0].mxu0
        %v2801 = vadd.f32 0.0, %v2800
        %v2802 = vpop.f32.mrb[0].mxu0
        %v2803 = vpop.f32.mrb[0].mxu0
        %v2804 = vadd.f32 0.0, %v2803
        %v2805 = vpop.f32.mrb[0].mxu0
        %2806 = vmatprep.mubr.bf16.mxu0 0
        %2807 = vmatmul.mubr.bf16.gmra.mrb[0].mxu0 %v396
        %v2808 = vpop.f32.mrb[0].mxu0
        %v2809 = vadd.f32 0.0, %v2808
        %v2810 = vpop.f32.mrb[0].mxu0
        %v2811 = vpop.f32.mrb[0].mxu0
        %v2812 = vadd.f32 0.0, %v2811
        %v2813 = vpop.f32.mrb[0].mxu0
        %2814 = vmatprep.mubr.bf16.mxu0 0
        %2815 = vmatmul.mubr.bf16.gmra.mrb[0].mxu0 %v399
        %v2816 = vpop.f32.mrb[0].mxu0
        %v2817 = vadd.f32 0.0, %v2816
        %v2818 = vpop.f32.mrb[0].mxu0
        %v2819 = vpop.f32.mrb[0].mxu0
        %v2820 = vadd.f32 0.0, %v2819
        %v2821 = vpop.f32.mrb[0].mxu0
        %2822 = vmatprep.mubr.bf16.mxu0 0
        %2823 = vmatmul.mubr.bf16.gmra.mrb[0].mxu0 %v402
        %v2824 = vpop.f32.mrb[0].mxu0
        %v2825 = vadd.f32 0.0, %v2824
        %v2826 = vpop.f32.mrb[0].mxu0
        %v2827 = vpop.f32.mrb[0].mxu0
        %v2828 = vadd.f32 0.0, %v2827
        %v2829 = vpop.f32.mrb[0].mxu0
        %2830 = vmatprep.mubr.bf16.mxu0 0
        %2831 = vmatmul.mubr.bf16.gmra.mrb[0].mxu0 %v405
        %v2832 = vpop.f32.mrb[0].mxu0
        %v2833 = vadd.f32 0.0, %v2832
        %v2834 = vpop.f32.mrb[0].mxu0
        %v2835 = vpop.f32.mrb[0].mxu0
        %v2836 = vadd.f32 0.0, %v2835
        %v2837 = vpop.f32.mrb[0].mxu0
        %2838 = vmatprep.mubr.bf16.mxu0 0
        %2839 = vmatmul.mubr.bf16.gmra.mrb[0].mxu0 %v408
        %v2840 = vpop.f32.mrb[0].mxu0
        %v2841 = vadd.f32 0.0, %v2840
        %v2842 = vpop.f32.mrb[0].mxu0
        %v2843 = vpop.f32.mrb[0].mxu0
        %v2844 = vadd.f32 0.0, %v2843
        %v2845 = vpop.f32.mrb[0].mxu0
        %2846 = vmatprep.mubr.bf16.mxu0 0
        %2847 = vmatmul.mubr.bf16.gmra.mrb[0].mxu0 %v411
        %v2848 = vpop.f32.mrb[0].mxu0
        %v2849 = vadd.f32 0.0, %v2848
        %v2850 = vpop.f32.mrb[0].mxu0
        %v2851 = vpop.f32.mrb[0].mxu0
        %v2852 = vadd.f32 0.0, %v2851
        %v2853 = vpop.f32.mrb[0].mxu0
        %2854 = vmatprep.mubr.bf16.mxu0 0
        %2855 = vmatmul.mubr.bf16.gmra.mrb[0].mxu0 %v414
        %v2856 = vpop.f32.mrb[0].mxu0
        %v2857 = vadd.f32 0.0, %v2856
        %v2858 = vpop.f32.mrb[0].mxu0
        %v2859 = vpop.f32.mrb[0].mxu0
        %v2860 = vadd.f32 0.0, %v2859
        %v2861 = vpop.f32.mrb[0].mxu0
        %2862 = vdwg.mxu0
        %v2895 = vrot.slane %v2737, 1
        %v2896 = vrot.slane %v2740, 1
        %v2897 = vsel %vm1561, %v2895, %v2896
        %v2898 = vrot.slane %v2745, 1
        %v2899 = vsel %vm1561, %v2896, %v2898
        %v2900 = vrot.slane %v2748, 1
        %v2901 = vsel %vm1561, %v2898, %v2900
        %v2902 = vrot.slane %v2753, 1
        %v2903 = vsel %vm1561, %v2900, %v2902
        %v2904 = vrot.slane %v2756, 1
        %v2905 = vsel %vm1561, %v2902, %v2904
        %v2906 = vrot.slane %v2761, 1
        %v2907 = vsel %vm1561, %v2904, %v2906
        %v2908 = vrot.slane %v2764, 1
        %v2909 = vsel %vm1561, %v2906, %v2908
        %v2910 = vrot.slane %v2769, 1
        %v2911 = vsel %vm1561, %v2908, %v2910
        %v2912 = vrot.slane %v2772, 1
        %v2913 = vsel %vm1561, %v2910, %v2912
        %v2914 = vrot.slane %v2777, 1
        %v2915 = vsel %vm1561, %v2912, %v2914
        %v2916 = vrot.slane %v2780, 1
        %v2917 = vsel %vm1561, %v2914, %v2916
        %v2918 = vrot.slane %v2785, 1
        %v2919 = vsel %vm1561, %v2916, %v2918
        %v2920 = vrot.slane %v2788, 1
        %v2921 = vsel %vm1561, %v2918, %v2920
        %v2922 = vrot.slane %v2793, 1
        %v2923 = vsel %vm1561, %v2920, %v2922
        %v2924 = vrot.slane %v2796, 1
        %v2925 = vsel %vm1561, %v2922, %v2924
        %v2926 = vrot.slane %v2801, 1
        %v2927 = vsel %vm1561, %v2924, %v2926
        %v2928 = vrot.slane %v2804, 1
        %v2929 = vsel %vm1561, %v2926, %v2928
        %v2930 = vrot.slane %v2809, 1
        %v2931 = vsel %vm1561, %v2928, %v2930
        %v2932 = vrot.slane %v2812, 1
        %v2933 = vsel %vm1561, %v2930, %v2932
        %v2934 = vrot.slane %v2817, 1
        %v2935 = vsel %vm1561, %v2932, %v2934
        %v2936 = vrot.slane %v2820, 1
        %v2937 = vsel %vm1561, %v2934, %v2936
        %v2938 = vrot.slane %v2825, 1
        %v2939 = vsel %vm1561, %v2936, %v2938
        %v2940 = vrot.slane %v2828, 1
        %v2941 = vsel %vm1561, %v2938, %v2940
        %v2942 = vrot.slane %v2833, 1
        %v2943 = vsel %vm1561, %v2940, %v2942
        %v2944 = vrot.slane %v2836, 1
        %v2945 = vsel %vm1561, %v2942, %v2944
        %v2946 = vrot.slane %v2841, 1
        %v2947 = vsel %vm1561, %v2944, %v2946
        %v2948 = vrot.slane %v2844, 1
        %v2949 = vsel %vm1561, %v2946, %v2948
        %v2950 = vrot.slane %v2849, 1
        %v2951 = vsel %vm1561, %v2948, %v2950
        %v2952 = vrot.slane %v2852, 1
        %v2953 = vsel %vm1561, %v2950, %v2952
        %v2954 = vrot.slane %v2857, 1
        %v2955 = vsel %vm1561, %v2952, %v2954
        %v2956 = vrot.slane %v2860, 1
        %v2957 = vsel %vm1561, %v2954, %v2956
        %v2990 = vsel %vm1561, %v2956, 0.0
        %s2991 = scalar_lea.vmem [#allocation2], 1280
        %v2992 = vld [vmem:[%s2991] sm:$0xff]
        %v2993 = vld [vmem:[%s2991 + $0x8] sm:$0xff]
        %v2994 = vld [vmem:[%s2991 + $0x10] sm:$0xff]
        %v2995 = vld [vmem:[%s2991 + $0x18] sm:$0xff]
        %v2996 = vld [vmem:[%s2991 + $0x20] sm:$0xff]
        %v2997 = vld [vmem:[%s2991 + $0x28] sm:$0xff]
        %v2998 = vld [vmem:[%s2991 + $0x30] sm:$0xff]
        %v2999 = vld [vmem:[%s2991 + $0x38] sm:$0xff]
        %v3000 = vld [vmem:[%s2991 + $0x40] sm:$0xff]
        %v3001 = vld [vmem:[%s2991 + $0x48] sm:$0xff]
        %v3002 = vld [vmem:[%s2991 + $0x50] sm:$0xff]
        %v3003 = vld [vmem:[%s2991 + $0x58] sm:$0xff]
        %v3004 = vld [vmem:[%s2991 + $0x60] sm:$0xff]
        %v3005 = vld [vmem:[%s2991 + $0x68] sm:$0xff]
        %v3006 = vld [vmem:[%s2991 + $0x70] sm:$0xff]
        %v3007 = vld [vmem:[%s2991 + $0x78] sm:$0xff]
        %v3008 = vld [vmem:[%s2991 + $0x80] sm:$0xff]
        %v3009 = vld [vmem:[%s2991 + $0x88] sm:$0xff]
        %v3010 = vld [vmem:[%s2991 + $0x90] sm:$0xff]
        %v3011 = vld [vmem:[%s2991 + $0x98] sm:$0xff]
        %v3012 = vld [vmem:[%s2991 + $0xa0] sm:$0xff]
        %v3013 = vld [vmem:[%s2991 + $0xa8] sm:$0xff]
        %v3014 = vld [vmem:[%s2991 + $0xb0] sm:$0xff]
        %v3015 = vld [vmem:[%s2991 + $0xb8] sm:$0xff]
        %v3016 = vld [vmem:[%s2991 + $0xc0] sm:$0xff]
        %v3017 = vld [vmem:[%s2991 + $0xc8] sm:$0xff]
        %v3018 = vld [vmem:[%s2991 + $0xd0] sm:$0xff]
        %v3019 = vld [vmem:[%s2991 + $0xd8] sm:$0xff]
        %v3020 = vld [vmem:[%s2991 + $0xe0] sm:$0xff]
        %v3021 = vld [vmem:[%s2991 + $0xe8] sm:$0xff]
        %v3022 = vld [vmem:[%s2991 + $0xf0] sm:$0xff]
        %v3023 = vld [vmem:[%s2991 + $0xf8] sm:$0xff]
        %3025 = vset.pattern.permute.xlu0 0
        %3026 = vperm.xlu0 %3025, %v2992
        %v3027 = vpop.permute.xlu0 %3026
        %3030 = vset.pattern.permute.xlu0 0
        %3031 = vperm.xlu0 %3030, %v2993
        %v3032 = vpop.permute.xlu0 %3031
        %3035 = vset.pattern.permute.xlu0 0
        %3036 = vperm.xlu0 %3035, %v2994
        %v3037 = vpop.permute.xlu0 %3036
        %3040 = vset.pattern.permute.xlu0 0
        %3041 = vperm.xlu0 %3040, %v2995
        %v3042 = vpop.permute.xlu0 %3041
        %3045 = vset.pattern.permute.xlu0 0
        %3046 = vperm.xlu0 %3045, %v2996
        %v3047 = vpop.permute.xlu0 %3046
        %3050 = vset.pattern.permute.xlu0 0
        %3051 = vperm.xlu0 %3050, %v2997
        %v3052 = vpop.permute.xlu0 %3051
        %3055 = vset.pattern.permute.xlu0 0
        %3056 = vperm.xlu0 %3055, %v2998
        %v3057 = vpop.permute.xlu0 %3056
        %3060 = vset.pattern.permute.xlu0 0
        %3061 = vperm.xlu0 %3060, %v2999
        %v3062 = vpop.permute.xlu0 %3061
        %3065 = vset.pattern.permute.xlu0 0
        %3066 = vperm.xlu0 %3065, %v3000
        %v3067 = vpop.permute.xlu0 %3066
        %3070 = vset.pattern.permute.xlu0 0
        %3071 = vperm.xlu0 %3070, %v3001
        %v3072 = vpop.permute.xlu0 %3071
        %3075 = vset.pattern.permute.xlu0 0
        %3076 = vperm.xlu0 %3075, %v3002
        %v3077 = vpop.permute.xlu0 %3076
        %3080 = vset.pattern.permute.xlu0 0
        %3081 = vperm.xlu0 %3080, %v3003
        %v3082 = vpop.permute.xlu0 %3081
        %3085 = vset.pattern.permute.xlu0 0
        %3086 = vperm.xlu0 %3085, %v3004
        %v3087 = vpop.permute.xlu0 %3086
        %3090 = vset.pattern.permute.xlu0 0
        %3091 = vperm.xlu0 %3090, %v3005
        %v3092 = vpop.permute.xlu0 %3091
        %3095 = vset.pattern.permute.xlu0 0
        %3096 = vperm.xlu0 %3095, %v3006
        %v3097 = vpop.permute.xlu0 %3096
        %3100 = vset.pattern.permute.xlu0 0
        %3101 = vperm.xlu0 %3100, %v3007
        %v3102 = vpop.permute.xlu0 %3101
        %3105 = vset.pattern.permute.xlu0 0
        %3106 = vperm.xlu0 %3105, %v3008
        %v3107 = vpop.permute.xlu0 %3106
        %3110 = vset.pattern.permute.xlu0 0
        %3111 = vperm.xlu0 %3110, %v3009
        %v3112 = vpop.permute.xlu0 %3111
        %3115 = vset.pattern.permute.xlu0 0
        %3116 = vperm.xlu0 %3115, %v3010
        %v3117 = vpop.permute.xlu0 %3116
        %3120 = vset.pattern.permute.xlu0 0
        %3121 = vperm.xlu0 %3120, %v3011
        %v3122 = vpop.permute.xlu0 %3121
        %3125 = vset.pattern.permute.xlu0 0
        %3126 = vperm.xlu0 %3125, %v3012
        %v3127 = vpop.permute.xlu0 %3126
        %3130 = vset.pattern.permute.xlu0 0
        %3131 = vperm.xlu0 %3130, %v3013
        %v3132 = vpop.permute.xlu0 %3131
        %3135 = vset.pattern.permute.xlu0 0
        %3136 = vperm.xlu0 %3135, %v3014
        %v3137 = vpop.permute.xlu0 %3136
        %3140 = vset.pattern.permute.xlu0 0
        %3141 = vperm.xlu0 %3140, %v3015
        %v3142 = vpop.permute.xlu0 %3141
        %3145 = vset.pattern.permute.xlu0 0
        %3146 = vperm.xlu0 %3145, %v3016
        %v3147 = vpop.permute.xlu0 %3146
        %3150 = vset.pattern.permute.xlu0 0
        %3151 = vperm.xlu0 %3150, %v3017
        %v3152 = vpop.permute.xlu0 %3151
        %3155 = vset.pattern.permute.xlu0 0
        %3156 = vperm.xlu0 %3155, %v3018
        %v3157 = vpop.permute.xlu0 %3156
        %3160 = vset.pattern.permute.xlu0 0
        %3161 = vperm.xlu0 %3160, %v3019
        %v3162 = vpop.permute.xlu0 %3161
        %3165 = vset.pattern.permute.xlu0 0
        %3166 = vperm.xlu0 %3165, %v3020
        %v3167 = vpop.permute.xlu0 %3166
        %3170 = vset.pattern.permute.xlu0 0
        %3171 = vperm.xlu0 %3170, %v3021
        %v3172 = vpop.permute.xlu0 %3171
        %3175 = vset.pattern.permute.xlu0 0
        %3176 = vperm.xlu0 %3175, %v3022
        %v3177 = vpop.permute.xlu0 %3176
        %3180 = vset.pattern.permute.xlu0 0
        %3181 = vperm.xlu0 %3180, %v3023
        %v3182 = vpop.permute.xlu0 %3181
        %v3184 = vmul.f32 %v2897, %v3027
        %v3185 = vmul.f32 %v2899, %v3032
        %v3186 = vmul.f32 %v2901, %v3037
        %v3187 = vmul.f32 %v2903, %v3042
        %v3188 = vmul.f32 %v2905, %v3047
        %v3189 = vmul.f32 %v2907, %v3052
        %v3190 = vmul.f32 %v2909, %v3057
        %v3191 = vmul.f32 %v2911, %v3062
        %v3192 = vmul.f32 %v2913, %v3067
        %v3193 = vmul.f32 %v2915, %v3072
        %v3194 = vmul.f32 %v2917, %v3077
        %v3195 = vmul.f32 %v2919, %v3082
        %v3196 = vmul.f32 %v2921, %v3087
        %v3197 = vmul.f32 %v2923, %v3092
        %v3198 = vmul.f32 %v2925, %v3097
        %v3199 = vmul.f32 %v2927, %v3102
        %v3200 = vmul.f32 %v2929, %v3107
        %v3201 = vmul.f32 %v2931, %v3112
        %v3202 = vmul.f32 %v2933, %v3117
        %v3203 = vmul.f32 %v2935, %v3122
        %v3204 = vmul.f32 %v2937, %v3127
        %v3205 = vmul.f32 %v2939, %v3132
        %v3206 = vmul.f32 %v2941, %v3137
        %v3207 = vmul.f32 %v2943, %v3142
        %v3208 = vmul.f32 %v2945, %v3147
        %v3209 = vmul.f32 %v2947, %v3152
        %v3210 = vmul.f32 %v2949, %v3157
        %v3211 = vmul.f32 %v2951, %v3162
        %v3212 = vmul.f32 %v2953, %v3167
        %v3213 = vmul.f32 %v2955, %v3172
        %v3214 = vmul.f32 %v2957, %v3177
        %v3215 = vmul.f32 %v2990, %v3182
        %v3216 = vadd.f32 %v2653, %v3184
        %v3217 = vadd.f32 %v2654, %v3185
        %v3218 = vadd.f32 %v2655, %v3186
        %v3219 = vadd.f32 %v2656, %v3187
        %v3220 = vadd.f32 %v2657, %v3188
        %v3221 = vadd.f32 %v2658, %v3189
        %v3222 = vadd.f32 %v2659, %v3190
        %v3223 = vadd.f32 %v2660, %v3191
        %v3224 = vadd.f32 %v2661, %v3192
        %v3225 = vadd.f32 %v2662, %v3193
        %v3226 = vadd.f32 %v2663, %v3194
        %v3227 = vadd.f32 %v2664, %v3195
        %v3228 = vadd.f32 %v2665, %v3196
        %v3229 = vadd.f32 %v2666, %v3197
        %v3230 = vadd.f32 %v2667, %v3198
        %v3231 = vadd.f32 %v2668, %v3199
        %v3232 = vadd.f32 %v2669, %v3200
        %v3233 = vadd.f32 %v2670, %v3201
        %v3234 = vadd.f32 %v2671, %v3202
        %v3235 = vadd.f32 %v2672, %v3203
        %v3236 = vadd.f32 %v2673, %v3204
        %v3237 = vadd.f32 %v2674, %v3205
        %v3238 = vadd.f32 %v2675, %v3206
        %v3239 = vadd.f32 %v2676, %v3207
        %v3240 = vadd.f32 %v2677, %v3208
        %v3241 = vadd.f32 %v2678, %v3209
        %v3242 = vadd.f32 %v2679, %v3210
        %v3243 = vadd.f32 %v2680, %v3211
        %v3244 = vadd.f32 %v2681, %v3212
        %v3245 = vadd.f32 %v2682, %v3213
        %v3246 = vadd.f32 %v2683, %v3214
        %v3247 = vadd.f32 %v2684, %v3215
        %s3248 = scalar_lea.vmem %s1, 96
        %v3249 = vld [vmem:[%s3248] sm:$0xf]
        %v3250 = vld [vmem:[%s3248 + $0x4] sm:$0xf]
        %v3251 = vld [vmem:[%s3248 + $0x8] sm:$0xf]
        %v3252 = vld [vmem:[%s3248 + $0xc] sm:$0xf]
        %v3257 = vunpack.c.l.b16 %v3249
        %v3258 = vunpack.c.l.b16 %v3250
        %v3259 = vunpack.c.l.b16 %v3251
        %v3260 = vunpack.c.l.b16 %v3252
        %v3261 = vpack.c.b16 %v3258, %v3257
        %v3262 = vpack.c.b16 %v3260, %v3259
        %3265 = vmatprep.subr.bf16.mxu0 0
        %3266 = vmatpush1.bf16.msra.mxu0 %v3261
        %3267 = vmatprep.subr.bf16.mxu0 0
        %3268 = vmatpush1.bf16.msra.mxu0 %v3262
        %3269 = vmatprep.subr.bf16.mxu0 0
        %3270 = vmatpush1.bf16.msra.mxu0 0
        %3271 = vmatprep.subr.bf16.mxu0 0
        %3272 = vmatpush1.bf16.msra.mxu0 0
        %3273 = vmatprep.subr.bf16.mxu0 0
        %3274 = vmatpush1.bf16.msra.mxu0 0
        %3275 = vmatprep.subr.bf16.mxu0 0
        %3276 = vmatpush1.bf16.msra.mxu0 0
        %3277 = vmatprep.subr.bf16.mxu0 0
        %3278 = vmatpush1.bf16.msra.mxu0 0
        %3279 = vmatprep.subr.bf16.mxu0 0
        %3280 = vmatpush1.bf16.msra.mxu0 0
        %3281 = vmatprep.subr.bf16.mxu0 0
        %3282 = vmatpush1.bf16.msra.mxu0 0
        %3283 = vmatprep.subr.bf16.mxu0 0
        %3284 = vmatpush1.bf16.msra.mxu0 0
        %3285 = vmatprep.subr.bf16.mxu0 0
        %3286 = vmatpush1.bf16.msra.mxu0 0
        %3287 = vmatprep.subr.bf16.mxu0 0
        %3288 = vmatpush1.bf16.msra.mxu0 0
        %3289 = vmatprep.subr.bf16.mxu0 0
        %3290 = vmatpush1.bf16.msra.mxu0 0
        %3291 = vmatprep.subr.bf16.mxu0 0
        %3292 = vmatpush1.bf16.msra.mxu0 0
        %3293 = vmatprep.subr.bf16.mxu0 0
        %3294 = vmatpush1.bf16.msra.mxu0 0
        %3295 = vmatprep.subr.bf16.mxu0 0
        %3296 = vmatpush1.bf16.msra.mxu0 0
        %3297 = vmatprep.mubr.bf16.mxu0 0
        %3298 = vmatmul.mubr.bf16.gmra.mrb[0].mxu0 %v369
        %v3299 = vpop.f32.mrb[0].mxu0
        %v3300 = vpop.f32.mrb[0].mxu0
        %v3301 = vpop.f32.mrb[0].mxu0
        %v3302 = vadd.f32 0.0, %v3301
        %v3303 = vpop.f32.mrb[0].mxu0
        %3304 = vmatprep.mubr.bf16.mxu0 0
        %3305 = vmatmul.mubr.bf16.gmra.mrb[0].mxu0 %v372
        %v3306 = vpop.f32.mrb[0].mxu0
        %v3307 = vadd.f32 0.0, %v3306
        %v3308 = vpop.f32.mrb[0].mxu0
        %v3309 = vpop.f32.mrb[0].mxu0
        %v3310 = vadd.f32 0.0, %v3309
        %v3311 = vpop.f32.mrb[0].mxu0
        %3312 = vmatprep.mubr.bf16.mxu0 0
        %3313 = vmatmul.mubr.bf16.gmra.mrb[0].mxu0 %v375
        %v3314 = vpop.f32.mrb[0].mxu0
        %v3315 = vadd.f32 0.0, %v3314
        %v3316 = vpop.f32.mrb[0].mxu0
        %v3317 = vpop.f32.mrb[0].mxu0
        %v3318 = vadd.f32 0.0, %v3317
        %v3319 = vpop.f32.mrb[0].mxu0
        %3320 = vmatprep.mubr.bf16.mxu0 0
        %3321 = vmatmul.mubr.bf16.gmra.mrb[0].mxu0 %v378
        %v3322 = vpop.f32.mrb[0].mxu0
        %v3323 = vadd.f32 0.0, %v3322
        %v3324 = vpop.f32.mrb[0].mxu0
        %v3325 = vpop.f32.mrb[0].mxu0
        %v3326 = vadd.f32 0.0, %v3325
        %v3327 = vpop.f32.mrb[0].mxu0
        %3328 = vmatprep.mubr.bf16.mxu0 0
        %3329 = vmatmul.mubr.bf16.gmra.mrb[0].mxu0 %v381
        %v3330 = vpop.f32.mrb[0].mxu0
        %v3331 = vadd.f32 0.0, %v3330
        %v3332 = vpop.f32.mrb[0].mxu0
        %v3333 = vpop.f32.mrb[0].mxu0
        %v3334 = vadd.f32 0.0, %v3333
        %v3335 = vpop.f32.mrb[0].mxu0
        %3336 = vmatprep.mubr.bf16.mxu0 0
        %3337 = vmatmul.mubr.bf16.gmra.mrb[0].mxu0 %v384
        %v3338 = vpop.f32.mrb[0].mxu0
        %v3339 = vadd.f32 0.0, %v3338
        %v3340 = vpop.f32.mrb[0].mxu0
        %v3341 = vpop.f32.mrb[0].mxu0
        %v3342 = vadd.f32 0.0, %v3341
        %v3343 = vpop.f32.mrb[0].mxu0
        %3344 = vmatprep.mubr.bf16.mxu0 0
        %3345 = vmatmul.mubr.bf16.gmra.mrb[0].mxu0 %v387
        %v3346 = vpop.f32.mrb[0].mxu0
        %v3347 = vadd.f32 0.0, %v3346
        %v3348 = vpop.f32.mrb[0].mxu0
        %v3349 = vpop.f32.mrb[0].mxu0
        %v3350 = vadd.f32 0.0, %v3349
        %v3351 = vpop.f32.mrb[0].mxu0
        %3352 = vmatprep.mubr.bf16.mxu0 0
        %3353 = vmatmul.mubr.bf16.gmra.mrb[0].mxu0 %v390
        %v3354 = vpop.f32.mrb[0].mxu0
        %v3355 = vadd.f32 0.0, %v3354
        %v3356 = vpop.f32.mrb[0].mxu0
        %v3357 = vpop.f32.mrb[0].mxu0
        %v3358 = vadd.f32 0.0, %v3357
        %v3359 = vpop.f32.mrb[0].mxu0
        %3360 = vmatprep.mubr.bf16.mxu0 0
        %3361 = vmatmul.mubr.bf16.gmra.mrb[0].mxu0 %v393
        %v3362 = vpop.f32.mrb[0].mxu0
        %v3363 = vadd.f32 0.0, %v3362
        %v3364 = vpop.f32.mrb[0].mxu0
        %v3365 = vpop.f32.mrb[0].mxu0
        %v3366 = vadd.f32 0.0, %v3365
        %v3367 = vpop.f32.mrb[0].mxu0
        %3368 = vmatprep.mubr.bf16.mxu0 0
        %3369 = vmatmul.mubr.bf16.gmra.mrb[0].mxu0 %v396
        %v3370 = vpop.f32.mrb[0].mxu0
        %v3371 = vadd.f32 0.0, %v3370
        %v3372 = vpop.f32.mrb[0].mxu0
        %v3373 = vpop.f32.mrb[0].mxu0
        %v3374 = vadd.f32 0.0, %v3373
        %v3375 = vpop.f32.mrb[0].mxu0
        %3376 = vmatprep.mubr.bf16.mxu0 0
        %3377 = vmatmul.mubr.bf16.gmra.mrb[0].mxu0 %v399
        %v3378 = vpop.f32.mrb[0].mxu0
        %v3379 = vadd.f32 0.0, %v3378
        %v3380 = vpop.f32.mrb[0].mxu0
        %v3381 = vpop.f32.mrb[0].mxu0
        %v3382 = vadd.f32 0.0, %v3381
        %v3383 = vpop.f32.mrb[0].mxu0
        %3384 = vmatprep.mubr.bf16.mxu0 0
        %3385 = vmatmul.mubr.bf16.gmra.mrb[0].mxu0 %v402
        %v3386 = vpop.f32.mrb[0].mxu0
        %v3387 = vadd.f32 0.0, %v3386
        %v3388 = vpop.f32.mrb[0].mxu0
        %v3389 = vpop.f32.mrb[0].mxu0
        %v3390 = vadd.f32 0.0, %v3389
        %v3391 = vpop.f32.mrb[0].mxu0
        %3392 = vmatprep.mubr.bf16.mxu0 0
        %3393 = vmatmul.mubr.bf16.gmra.mrb[0].mxu0 %v405
        %v3394 = vpop.f32.mrb[0].mxu0
        %v3395 = vadd.f32 0.0, %v3394
        %v3396 = vpop.f32.mrb[0].mxu0
        %v3397 = vpop.f32.mrb[0].mxu0
        %v3398 = vadd.f32 0.0, %v3397
        %v3399 = vpop.f32.mrb[0].mxu0
        %3400 = vmatprep.mubr.bf16.mxu0 0
        %3401 = vmatmul.mubr.bf16.gmra.mrb[0].mxu0 %v408
        %v3402 = vpop.f32.mrb[0].mxu0
        %v3403 = vadd.f32 0.0, %v3402
        %v3404 = vpop.f32.mrb[0].mxu0
        %v3405 = vpop.f32.mrb[0].mxu0
        %v3406 = vadd.f32 0.0, %v3405
        %v3407 = vpop.f32.mrb[0].mxu0
        %3408 = vmatprep.mubr.bf16.mxu0 0
        %3409 = vmatmul.mubr.bf16.gmra.mrb[0].mxu0 %v411
        %v3410 = vpop.f32.mrb[0].mxu0
        %v3411 = vadd.f32 0.0, %v3410
        %v3412 = vpop.f32.mrb[0].mxu0
        %v3413 = vpop.f32.mrb[0].mxu0
        %v3414 = vadd.f32 0.0, %v3413
        %v3415 = vpop.f32.mrb[0].mxu0
        %3416 = vmatprep.mubr.bf16.mxu0 0
        %3417 = vmatmul.mubr.bf16.gmra.mrb[0].mxu0 %v414
        %v3418 = vpop.f32.mrb[0].mxu0
        %v3419 = vadd.f32 0.0, %v3418
        %v3420 = vpop.f32.mrb[0].mxu0
        %v3421 = vpop.f32.mrb[0].mxu0
        %v3422 = vadd.f32 0.0, %v3421
        %v3423 = vpop.f32.mrb[0].mxu0
        %3424 = vdwg.mxu0
        %v3456 = vrot.slane %v3302, 7
        %v3457 = vrot.slane %v3307, 7
        %v3458 = vsel %vm605, %v3456, %v3457
        %v3459 = vrot.slane %v3310, 7
        %v3460 = vsel %vm605, %v3457, %v3459
        %v3461 = vrot.slane %v3315, 7
        %v3462 = vsel %vm605, %v3459, %v3461
        %v3463 = vrot.slane %v3318, 7
        %v3464 = vsel %vm605, %v3461, %v3463
        %v3465 = vrot.slane %v3323, 7
        %v3466 = vsel %vm605, %v3463, %v3465
        %v3467 = vrot.slane %v3326, 7
        %v3468 = vsel %vm605, %v3465, %v3467
        %v3469 = vrot.slane %v3331, 7
        %v3470 = vsel %vm605, %v3467, %v3469
        %v3471 = vrot.slane %v3334, 7
        %v3472 = vsel %vm605, %v3469, %v3471
        %v3473 = vrot.slane %v3339, 7
        %v3474 = vsel %vm605, %v3471, %v3473
        %v3475 = vrot.slane %v3342, 7
        %v3476 = vsel %vm605, %v3473, %v3475
        %v3477 = vrot.slane %v3347, 7
        %v3478 = vsel %vm605, %v3475, %v3477
        %v3479 = vrot.slane %v3350, 7
        %v3480 = vsel %vm605, %v3477, %v3479
        %v3481 = vrot.slane %v3355, 7
        %v3482 = vsel %vm605, %v3479, %v3481
        %v3483 = vrot.slane %v3358, 7
        %v3484 = vsel %vm605, %v3481, %v3483
        %v3485 = vrot.slane %v3363, 7
        %v3486 = vsel %vm605, %v3483, %v3485
        %v3487 = vrot.slane %v3366, 7
        %v3488 = vsel %vm605, %v3485, %v3487
        %v3489 = vrot.slane %v3371, 7
        %v3490 = vsel %vm605, %v3487, %v3489
        %v3491 = vrot.slane %v3374, 7
        %v3492 = vsel %vm605, %v3489, %v3491
        %v3493 = vrot.slane %v3379, 7
        %v3494 = vsel %vm605, %v3491, %v3493
        %v3495 = vrot.slane %v3382, 7
        %v3496 = vsel %vm605, %v3493, %v3495
        %v3497 = vrot.slane %v3387, 7
        %v3498 = vsel %vm605, %v3495, %v3497
        %v3499 = vrot.slane %v3390, 7
        %v3500 = vsel %vm605, %v3497, %v3499
        %v3501 = vrot.slane %v3395, 7
        %v3502 = vsel %vm605, %v3499, %v3501
        %v3503 = vrot.slane %v3398, 7
        %v3504 = vsel %vm605, %v3501, %v3503
        %v3505 = vrot.slane %v3403, 7
        %v3506 = vsel %vm605, %v3503, %v3505
        %v3507 = vrot.slane %v3406, 7
        %v3508 = vsel %vm605, %v3505, %v3507
        %v3509 = vrot.slane %v3411, 7
        %v3510 = vsel %vm605, %v3507, %v3509
        %v3511 = vrot.slane %v3414, 7
        %v3512 = vsel %vm605, %v3509, %v3511
        %v3513 = vrot.slane %v3419, 7
        %v3514 = vsel %vm605, %v3511, %v3513
        %v3515 = vrot.slane %v3422, 7
        %v3516 = vsel %vm605, %v3513, %v3515
        %v3548 = vsel %vm605, %v3515, 0.0
        %s3549 = scalar_lea.vmem [#allocation2], 1536
        %v3550 = vld [vmem:[%s3549] sm:$0xff]
        %v3551 = vld [vmem:[%s3549 + $0x8] sm:$0xff]
        %v3552 = vld [vmem:[%s3549 + $0x10] sm:$0xff]
        %v3553 = vld [vmem:[%s3549 + $0x18] sm:$0xff]
        %v3554 = vld [vmem:[%s3549 + $0x20] sm:$0xff]
        %v3555 = vld [vmem:[%s3549 + $0x28] sm:$0xff]
        %v3556 = vld [vmem:[%s3549 + $0x30] sm:$0xff]
        %v3557 = vld [vmem:[%s3549 + $0x38] sm:$0xff]
        %v3558 = vld [vmem:[%s3549 + $0x40] sm:$0xff]
        %v3559 = vld [vmem:[%s3549 + $0x48] sm:$0xff]
        %v3560 = vld [vmem:[%s3549 + $0x50] sm:$0xff]
        %v3561 = vld [vmem:[%s3549 + $0x58] sm:$0xff]
        %v3562 = vld [vmem:[%s3549 + $0x60] sm:$0xff]
        %v3563 = vld [vmem:[%s3549 + $0x68] sm:$0xff]
        %v3564 = vld [vmem:[%s3549 + $0x70] sm:$0xff]
        %v3565 = vld [vmem:[%s3549 + $0x78] sm:$0xff]
        %v3566 = vld [vmem:[%s3549 + $0x80] sm:$0xff]
        %v3567 = vld [vmem:[%s3549 + $0x88] sm:$0xff]
        %v3568 = vld [vmem:[%s3549 + $0x90] sm:$0xff]
        %v3569 = vld [vmem:[%s3549 + $0x98] sm:$0xff]
        %v3570 = vld [vmem:[%s3549 + $0xa0] sm:$0xff]
        %v3571 = vld [vmem:[%s3549 + $0xa8] sm:$0xff]
        %v3572 = vld [vmem:[%s3549 + $0xb0] sm:$0xff]
        %v3573 = vld [vmem:[%s3549 + $0xb8] sm:$0xff]
        %v3574 = vld [vmem:[%s3549 + $0xc0] sm:$0xff]
        %v3575 = vld [vmem:[%s3549 + $0xc8] sm:$0xff]
        %v3576 = vld [vmem:[%s3549 + $0xd0] sm:$0xff]
        %v3577 = vld [vmem:[%s3549 + $0xd8] sm:$0xff]
        %v3578 = vld [vmem:[%s3549 + $0xe0] sm:$0xff]
        %v3579 = vld [vmem:[%s3549 + $0xe8] sm:$0xff]
        %v3580 = vld [vmem:[%s3549 + $0xf0] sm:$0xff]
        %v3581 = vld [vmem:[%s3549 + $0xf8] sm:$0xff]
        %3583 = vset.pattern.permute.xlu0 0
        %3584 = vperm.xlu0 %3583, %v3550
        %v3585 = vpop.permute.xlu0 %3584
        %3588 = vset.pattern.permute.xlu0 0
        %3589 = vperm.xlu0 %3588, %v3551
        %v3590 = vpop.permute.xlu0 %3589
        %3593 = vset.pattern.permute.xlu0 0
        %3594 = vperm.xlu0 %3593, %v3552
        %v3595 = vpop.permute.xlu0 %3594
        %3598 = vset.pattern.permute.xlu0 0
        %3599 = vperm.xlu0 %3598, %v3553
        %v3600 = vpop.permute.xlu0 %3599
        %3603 = vset.pattern.permute.xlu0 0
        %3604 = vperm.xlu0 %3603, %v3554
        %v3605 = vpop.permute.xlu0 %3604
        %3608 = vset.pattern.permute.xlu0 0
        %3609 = vperm.xlu0 %3608, %v3555
        %v3610 = vpop.permute.xlu0 %3609
        %3613 = vset.pattern.permute.xlu0 0
        %3614 = vperm.xlu0 %3613, %v3556
        %v3615 = vpop.permute.xlu0 %3614
        %3618 = vset.pattern.permute.xlu0 0
        %3619 = vperm.xlu0 %3618, %v3557
        %v3620 = vpop.permute.xlu0 %3619
        %3623 = vset.pattern.permute.xlu0 0
        %3624 = vperm.xlu0 %3623, %v3558
        %v3625 = vpop.permute.xlu0 %3624
        %3628 = vset.pattern.permute.xlu0 0
        %3629 = vperm.xlu0 %3628, %v3559
        %v3630 = vpop.permute.xlu0 %3629
        %3633 = vset.pattern.permute.xlu0 0
        %3634 = vperm.xlu0 %3633, %v3560
        %v3635 = vpop.permute.xlu0 %3634
        %3638 = vset.pattern.permute.xlu0 0
        %3639 = vperm.xlu0 %3638, %v3561
        %v3640 = vpop.permute.xlu0 %3639
        %3643 = vset.pattern.permute.xlu0 0
        %3644 = vperm.xlu0 %3643, %v3562
        %v3645 = vpop.permute.xlu0 %3644
        %3648 = vset.pattern.permute.xlu0 0
        %3649 = vperm.xlu0 %3648, %v3563
        %v3650 = vpop.permute.xlu0 %3649
        %3653 = vset.pattern.permute.xlu0 0
        %3654 = vperm.xlu0 %3653, %v3564
        %v3655 = vpop.permute.xlu0 %3654
        %3658 = vset.pattern.permute.xlu0 0
        %3659 = vperm.xlu0 %3658, %v3565
        %v3660 = vpop.permute.xlu0 %3659
        %3663 = vset.pattern.permute.xlu0 0
        %3664 = vperm.xlu0 %3663, %v3566
        %v3665 = vpop.permute.xlu0 %3664
        %3668 = vset.pattern.permute.xlu0 0
        %3669 = vperm.xlu0 %3668, %v3567
        %v3670 = vpop.permute.xlu0 %3669
        %3673 = vset.pattern.permute.xlu0 0
        %3674 = vperm.xlu0 %3673, %v3568
        %v3675 = vpop.permute.xlu0 %3674
        %3678 = vset.pattern.permute.xlu0 0
        %3679 = vperm.xlu0 %3678, %v3569
        %v3680 = vpop.permute.xlu0 %3679
        %3683 = vset.pattern.permute.xlu0 0
        %3684 = vperm.xlu0 %3683, %v3570
        %v3685 = vpop.permute.xlu0 %3684
        %3688 = vset.pattern.permute.xlu0 0
        %3689 = vperm.xlu0 %3688, %v3571
        %v3690 = vpop.permute.xlu0 %3689
        %3693 = vset.pattern.permute.xlu0 0
        %3694 = vperm.xlu0 %3693, %v3572
        %v3695 = vpop.permute.xlu0 %3694
        %3698 = vset.pattern.permute.xlu0 0
        %3699 = vperm.xlu0 %3698, %v3573
        %v3700 = vpop.permute.xlu0 %3699
        %3703 = vset.pattern.permute.xlu0 0
        %3704 = vperm.xlu0 %3703, %v3574
        %v3705 = vpop.permute.xlu0 %3704
        %3708 = vset.pattern.permute.xlu0 0
        %3709 = vperm.xlu0 %3708, %v3575
        %v3710 = vpop.permute.xlu0 %3709
        %3713 = vset.pattern.permute.xlu0 0
        %3714 = vperm.xlu0 %3713, %v3576
        %v3715 = vpop.permute.xlu0 %3714
        %3718 = vset.pattern.permute.xlu0 0
        %3719 = vperm.xlu0 %3718, %v3577
        %v3720 = vpop.permute.xlu0 %3719
        %3723 = vset.pattern.permute.xlu0 0
        %3724 = vperm.xlu0 %3723, %v3578
        %v3725 = vpop.permute.xlu0 %3724
        %3728 = vset.pattern.permute.xlu0 0
        %3729 = vperm.xlu0 %3728, %v3579
        %v3730 = vpop.permute.xlu0 %3729
        %3733 = vset.pattern.permute.xlu0 0
        %3734 = vperm.xlu0 %3733, %v3580
        %v3735 = vpop.permute.xlu0 %3734
        %3738 = vset.pattern.permute.xlu0 0
        %3739 = vperm.xlu0 %3738, %v3581
        %v3740 = vpop.permute.xlu0 %3739
        %v3742 = vmul.f32 %v3458, %v3585
        %v3743 = vmul.f32 %v3460, %v3590
        %v3744 = vmul.f32 %v3462, %v3595
        %v3745 = vmul.f32 %v3464, %v3600
        %v3746 = vmul.f32 %v3466, %v3605
        %v3747 = vmul.f32 %v3468, %v3610
        %v3748 = vmul.f32 %v3470, %v3615
        %v3749 = vmul.f32 %v3472, %v3620
        %v3750 = vmul.f32 %v3474, %v3625
        %v3751 = vmul.f32 %v3476, %v3630
        %v3752 = vmul.f32 %v3478, %v3635
        %v3753 = vmul.f32 %v3480, %v3640
        %v3754 = vmul.f32 %v3482, %v3645
        %v3755 = vmul.f32 %v3484, %v3650
        %v3756 = vmul.f32 %v3486, %v3655
        %v3757 = vmul.f32 %v3488, %v3660
        %v3758 = vmul.f32 %v3490, %v3665
        %v3759 = vmul.f32 %v3492, %v3670
        %v3760 = vmul.f32 %v3494, %v3675
        %v3761 = vmul.f32 %v3496, %v3680
        %v3762 = vmul.f32 %v3498, %v3685
        %v3763 = vmul.f32 %v3500, %v3690
        %v3764 = vmul.f32 %v3502, %v3695
        %v3765 = vmul.f32 %v3504, %v3700
        %v3766 = vmul.f32 %v3506, %v3705
        %v3767 = vmul.f32 %v3508, %v3710
        %v3768 = vmul.f32 %v3510, %v3715
        %v3769 = vmul.f32 %v3512, %v3720
        %v3770 = vmul.f32 %v3514, %v3725
        %v3771 = vmul.f32 %v3516, %v3730
        %v3772 = vmul.f32 %v3548, %v3735
        %v3773 = vmul.f32 %v3740, 0.0
        %v3774 = vadd.f32 %v3216, %v3742
        %v3775 = vadd.f32 %v3217, %v3743
        %v3776 = vadd.f32 %v3218, %v3744
        %v3777 = vadd.f32 %v3219, %v3745
        %v3778 = vadd.f32 %v3220, %v3746
        %v3779 = vadd.f32 %v3221, %v3747
        %v3780 = vadd.f32 %v3222, %v3748
        %v3781 = vadd.f32 %v3223, %v3749
        %v3782 = vadd.f32 %v3224, %v3750
        %v3783 = vadd.f32 %v3225, %v3751
        %v3784 = vadd.f32 %v3226, %v3752
        %v3785 = vadd.f32 %v3227, %v3753
        %v3786 = vadd.f32 %v3228, %v3754
        %v3787 = vadd.f32 %v3229, %v3755
        %v3788 = vadd.f32 %v3230, %v3756
        %v3789 = vadd.f32 %v3231, %v3757
        %v3790 = vadd.f32 %v3232, %v3758
        %v3791 = vadd.f32 %v3233, %v3759
        %v3792 = vadd.f32 %v3234, %v3760
        %v3793 = vadd.f32 %v3235, %v3761
        %v3794 = vadd.f32 %v3236, %v3762
        %v3795 = vadd.f32 %v3237, %v3763
        %v3796 = vadd.f32 %v3238, %v3764
        %v3797 = vadd.f32 %v3239, %v3765
        %v3798 = vadd.f32 %v3240, %v3766
        %v3799 = vadd.f32 %v3241, %v3767
        %v3800 = vadd.f32 %v3242, %v3768
        %v3801 = vadd.f32 %v3243, %v3769
        %v3802 = vadd.f32 %v3244, %v3770
        %v3803 = vadd.f32 %v3245, %v3771
        %v3804 = vadd.f32 %v3246, %v3772
        %v3805 = vadd.f32 %v3247, %v3773
        %s3806 = scalar_lea.vmem %s1, 112
        %v3807 = vld [vmem:[%s3806] sm:$0xf]
        %v3808 = vld [vmem:[%s3806 + $0x4] sm:$0xf]
        %v3809 = vld [vmem:[%s3806 + $0x8] sm:$0xf]
        %v3810 = vld [vmem:[%s3806 + $0xc] sm:$0xf]
        %v3815 = vunpack.c.l.b16 %v3807
        %v3816 = vunpack.c.l.b16 %v3808
        %v3817 = vunpack.c.l.b16 %v3809
        %v3818 = vunpack.c.l.b16 %v3810
        %v3819 = vpack.c.b16 %v3816, %v3815
        %v3820 = vpack.c.b16 %v3818, %v3817
        %3823 = vmatprep.subr.bf16.mxu0 0
        %3824 = vmatpush1.bf16.msra.mxu0 %v3819
        %3825 = vmatprep.subr.bf16.mxu0 0
        %3826 = vmatpush1.bf16.msra.mxu0 %v3820
        %3827 = vmatprep.subr.bf16.mxu0 0
        %3828 = vmatpush1.bf16.msra.mxu0 0
        %3829 = vmatprep.subr.bf16.mxu0 0
        %3830 = vmatpush1.bf16.msra.mxu0 0
        %3831 = vmatprep.subr.bf16.mxu0 0
        %3832 = vmatpush1.bf16.msra.mxu0 0
        %3833 = vmatprep.subr.bf16.mxu0 0
        %3834 = vmatpush1.bf16.msra.mxu0 0
        %3835 = vmatprep.subr.bf16.mxu0 0
        %3836 = vmatpush1.bf16.msra.mxu0 0
        %3837 = vmatprep.subr.bf16.mxu0 0
        %3838 = vmatpush1.bf16.msra.mxu0 0
        %3839 = vmatprep.subr.bf16.mxu0 0
        %3840 = vmatpush1.bf16.msra.mxu0 0
        %3841 = vmatprep.subr.bf16.mxu0 0
        %3842 = vmatpush1.bf16.msra.mxu0 0
        %3843 = vmatprep.subr.bf16.mxu0 0
        %3844 = vmatpush1.bf16.msra.mxu0 0
        %3845 = vmatprep.subr.bf16.mxu0 0
        %3846 = vmatpush1.bf16.msra.mxu0 0
        %3847 = vmatprep.subr.bf16.mxu0 0
        %3848 = vmatpush1.bf16.msra.mxu0 0
        %3849 = vmatprep.subr.bf16.mxu0 0
        %3850 = vmatpush1.bf16.msra.mxu0 0
        %3851 = vmatprep.subr.bf16.mxu0 0
        %3852 = vmatpush1.bf16.msra.mxu0 0
        %3853 = vmatprep.subr.bf16.mxu0 0
        %3854 = vmatpush1.bf16.msra.mxu0 0
        %3855 = vmatprep.mubr.bf16.mxu0 0
        %3856 = vmatmul.mubr.bf16.gmra.mrb[0].mxu0 %v369
        %v3857 = vpop.f32.mrb[0].mxu0
        %v3858 = vpop.f32.mrb[0].mxu0
        %v3859 = vpop.f32.mrb[0].mxu0
        %v3860 = vpop.f32.mrb[0].mxu0
        %3861 = vmatprep.mubr.bf16.mxu0 0
        %3862 = vmatmul.mubr.bf16.gmra.mrb[0].mxu0 %v372
        %v3863 = vpop.f32.mrb[0].mxu0
        %v3864 = vadd.f32 0.0, %v3863
        %v3865 = vpop.f32.mrb[0].mxu0
        %v3866 = vpop.f32.mrb[0].mxu0
        %v3867 = vadd.f32 0.0, %v3866
        %v3868 = vpop.f32.mrb[0].mxu0
        %3869 = vmatprep.mubr.bf16.mxu0 0
        %3870 = vmatmul.mubr.bf16.gmra.mrb[0].mxu0 %v375
        %v3871 = vpop.f32.mrb[0].mxu0
        %v3872 = vadd.f32 0.0, %v3871
        %v3873 = vpop.f32.mrb[0].mxu0
        %v3874 = vpop.f32.mrb[0].mxu0
        %v3875 = vadd.f32 0.0, %v3874
        %v3876 = vpop.f32.mrb[0].mxu0
        %3877 = vmatprep.mubr.bf16.mxu0 0
        %3878 = vmatmul.mubr.bf16.gmra.mrb[0].mxu0 %v378
        %v3879 = vpop.f32.mrb[0].mxu0
        %v3880 = vadd.f32 0.0, %v3879
        %v3881 = vpop.f32.mrb[0].mxu0
        %v3882 = vpop.f32.mrb[0].mxu0
        %v3883 = vadd.f32 0.0, %v3882
        %v3884 = vpop.f32.mrb[0].mxu0
        %3885 = vmatprep.mubr.bf16.mxu0 0
        %3886 = vmatmul.mubr.bf16.gmra.mrb[0].mxu0 %v381
        %v3887 = vpop.f32.mrb[0].mxu0
        %v3888 = vadd.f32 0.0, %v3887
        %v3889 = vpop.f32.mrb[0].mxu0
        %v3890 = vpop.f32.mrb[0].mxu0
        %v3891 = vadd.f32 0.0, %v3890
        %v3892 = vpop.f32.mrb[0].mxu0
        %3893 = vmatprep.mubr.bf16.mxu0 0
        %3894 = vmatmul.mubr.bf16.gmra.mrb[0].mxu0 %v384
        %v3895 = vpop.f32.mrb[0].mxu0
        %v3896 = vadd.f32 0.0, %v3895
        %v3897 = vpop.f32.mrb[0].mxu0
        %v3898 = vpop.f32.mrb[0].mxu0
        %v3899 = vadd.f32 0.0, %v3898
        %v3900 = vpop.f32.mrb[0].mxu0
        %3901 = vmatprep.mubr.bf16.mxu0 0
        %3902 = vmatmul.mubr.bf16.gmra.mrb[0].mxu0 %v387
        %v3903 = vpop.f32.mrb[0].mxu0
        %v3904 = vadd.f32 0.0, %v3903
        %v3905 = vpop.f32.mrb[0].mxu0
        %v3906 = vpop.f32.mrb[0].mxu0
        %v3907 = vadd.f32 0.0, %v3906
        %v3908 = vpop.f32.mrb[0].mxu0
        %3909 = vmatprep.mubr.bf16.mxu0 0
        %3910 = vmatmul.mubr.bf16.gmra.mrb[0].mxu0 %v390
        %v3911 = vpop.f32.mrb[0].mxu0
        %v3912 = vadd.f32 0.0, %v3911
        %v3913 = vpop.f32.mrb[0].mxu0
        %v3914 = vpop.f32.mrb[0].mxu0
        %v3915 = vadd.f32 0.0, %v3914
        %v3916 = vpop.f32.mrb[0].mxu0
        %3917 = vmatprep.mubr.bf16.mxu0 0
        %3918 = vmatmul.mubr.bf16.gmra.mrb[0].mxu0 %v393
        %v3919 = vpop.f32.mrb[0].mxu0
        %v3920 = vadd.f32 0.0, %v3919
        %v3921 = vpop.f32.mrb[0].mxu0
        %v3922 = vpop.f32.mrb[0].mxu0
        %v3923 = vadd.f32 0.0, %v3922
        %v3924 = vpop.f32.mrb[0].mxu0
        %3925 = vmatprep.mubr.bf16.mxu0 0
        %3926 = vmatmul.mubr.bf16.gmra.mrb[0].mxu0 %v396
        %v3927 = vpop.f32.mrb[0].mxu0
        %v3928 = vadd.f32 0.0, %v3927
        %v3929 = vpop.f32.mrb[0].mxu0
        %v3930 = vpop.f32.mrb[0].mxu0
        %v3931 = vadd.f32 0.0, %v3930
        %v3932 = vpop.f32.mrb[0].mxu0
        %3933 = vmatprep.mubr.bf16.mxu0 0
        %3934 = vmatmul.mubr.bf16.gmra.mrb[0].mxu0 %v399
        %v3935 = vpop.f32.mrb[0].mxu0
        %v3936 = vadd.f32 0.0, %v3935
        %v3937 = vpop.f32.mrb[0].mxu0
        %v3938 = vpop.f32.mrb[0].mxu0
        %v3939 = vadd.f32 0.0, %v3938
        %v3940 = vpop.f32.mrb[0].mxu0
        %3941 = vmatprep.mubr.bf16.mxu0 0
        %3942 = vmatmul.mubr.bf16.gmra.mrb[0].mxu0 %v402
        %v3943 = vpop.f32.mrb[0].mxu0
        %v3944 = vadd.f32 0.0, %v3943
        %v3945 = vpop.f32.mrb[0].mxu0
        %v3946 = vpop.f32.mrb[0].mxu0
        %v3947 = vadd.f32 0.0, %v3946
        %v3948 = vpop.f32.mrb[0].mxu0
        %3949 = vmatprep.mubr.bf16.mxu0 0
        %3950 = vmatmul.mubr.bf16.gmra.mrb[0].mxu0 %v405
        %v3951 = vpop.f32.mrb[0].mxu0
        %v3952 = vadd.f32 0.0, %v3951
        %v3953 = vpop.f32.mrb[0].mxu0
        %v3954 = vpop.f32.mrb[0].mxu0
        %v3955 = vadd.f32 0.0, %v3954
        %v3956 = vpop.f32.mrb[0].mxu0
        %3957 = vmatprep.mubr.bf16.mxu0 0
        %3958 = vmatmul.mubr.bf16.gmra.mrb[0].mxu0 %v408
        %v3959 = vpop.f32.mrb[0].mxu0
        %v3960 = vadd.f32 0.0, %v3959
        %v3961 = vpop.f32.mrb[0].mxu0
        %v3962 = vpop.f32.mrb[0].mxu0
        %v3963 = vadd.f32 0.0, %v3962
        %v3964 = vpop.f32.mrb[0].mxu0
        %3965 = vmatprep.mubr.bf16.mxu0 0
        %3966 = vmatmul.mubr.bf16.gmra.mrb[0].mxu0 %v411
        %v3967 = vpop.f32.mrb[0].mxu0
        %v3968 = vadd.f32 0.0, %v3967
        %v3969 = vpop.f32.mrb[0].mxu0
        %v3970 = vpop.f32.mrb[0].mxu0
        %v3971 = vadd.f32 0.0, %v3970
        %v3972 = vpop.f32.mrb[0].mxu0
        %3973 = vmatprep.mubr.bf16.mxu0 0
        %3974 = vmatmul.mubr.bf16.gmra.mrb[0].mxu0 %v414
        %v3975 = vpop.f32.mrb[0].mxu0
        %v3976 = vadd.f32 0.0, %v3975
        %v3977 = vpop.f32.mrb[0].mxu0
        %v3978 = vpop.f32.mrb[0].mxu0
        %v3979 = vadd.f32 0.0, %v3978
        %v3980 = vpop.f32.mrb[0].mxu0
        %3981 = vdwg.mxu0
        %s3982 = scalar_lea.vmem [#allocation2], 1792
        %v3983 = vld [vmem:[%s3982] sm:$0xff]
        %v3984 = vld [vmem:[%s3982 + $0x8] sm:$0xff]
        %v3985 = vld [vmem:[%s3982 + $0x10] sm:$0xff]
        %v3986 = vld [vmem:[%s3982 + $0x18] sm:$0xff]
        %v3987 = vld [vmem:[%s3982 + $0x20] sm:$0xff]
        %v3988 = vld [vmem:[%s3982 + $0x28] sm:$0xff]
        %v3989 = vld [vmem:[%s3982 + $0x30] sm:$0xff]
        %v3990 = vld [vmem:[%s3982 + $0x38] sm:$0xff]
        %v3991 = vld [vmem:[%s3982 + $0x40] sm:$0xff]
        %v3992 = vld [vmem:[%s3982 + $0x48] sm:$0xff]
        %v3993 = vld [vmem:[%s3982 + $0x50] sm:$0xff]
        %v3994 = vld [vmem:[%s3982 + $0x58] sm:$0xff]
        %v3995 = vld [vmem:[%s3982 + $0x60] sm:$0xff]
        %v3996 = vld [vmem:[%s3982 + $0x68] sm:$0xff]
        %v3997 = vld [vmem:[%s3982 + $0x70] sm:$0xff]
        %v3998 = vld [vmem:[%s3982 + $0x78] sm:$0xff]
        %v3999 = vld [vmem:[%s3982 + $0x80] sm:$0xff]
        %v4000 = vld [vmem:[%s3982 + $0x88] sm:$0xff]
        %v4001 = vld [vmem:[%s3982 + $0x90] sm:$0xff]
        %v4002 = vld [vmem:[%s3982 + $0x98] sm:$0xff]
        %v4003 = vld [vmem:[%s3982 + $0xa0] sm:$0xff]
        %v4004 = vld [vmem:[%s3982 + $0xa8] sm:$0xff]
        %v4005 = vld [vmem:[%s3982 + $0xb0] sm:$0xff]
        %v4006 = vld [vmem:[%s3982 + $0xb8] sm:$0xff]
        %v4007 = vld [vmem:[%s3982 + $0xc0] sm:$0xff]
        %v4008 = vld [vmem:[%s3982 + $0xc8] sm:$0xff]
        %v4009 = vld [vmem:[%s3982 + $0xd0] sm:$0xff]
        %v4010 = vld [vmem:[%s3982 + $0xd8] sm:$0xff]
        %v4011 = vld [vmem:[%s3982 + $0xe0] sm:$0xff]
        %v4012 = vld [vmem:[%s3982 + $0xe8] sm:$0xff]
        %v4013 = vld [vmem:[%s3982 + $0xf0] sm:$0xff]
        %v4014 = vld [vmem:[%s3982 + $0xf8] sm:$0xff]
        %4016 = vset.pattern.permute.xlu0 0
        %4017 = vperm.xlu0 %4016, %v3983
        %v4018 = vpop.permute.xlu0 %4017
        %4021 = vset.pattern.permute.xlu0 0
        %4022 = vperm.xlu0 %4021, %v3984
        %v4023 = vpop.permute.xlu0 %4022
        %4026 = vset.pattern.permute.xlu0 0
        %4027 = vperm.xlu0 %4026, %v3985
        %v4028 = vpop.permute.xlu0 %4027
        %4031 = vset.pattern.permute.xlu0 0
        %4032 = vperm.xlu0 %4031, %v3986
        %v4033 = vpop.permute.xlu0 %4032
        %4036 = vset.pattern.permute.xlu0 0
        %4037 = vperm.xlu0 %4036, %v3987
        %v4038 = vpop.permute.xlu0 %4037
        %4041 = vset.pattern.permute.xlu0 0
        %4042 = vperm.xlu0 %4041, %v3988
        %v4043 = vpop.permute.xlu0 %4042
        %4046 = vset.pattern.permute.xlu0 0
        %4047 = vperm.xlu0 %4046, %v3989
        %v4048 = vpop.permute.xlu0 %4047
        %4051 = vset.pattern.permute.xlu0 0
        %4052 = vperm.xlu0 %4051, %v3990
        %v4053 = vpop.permute.xlu0 %4052
        %4056 = vset.pattern.permute.xlu0 0
        %4057 = vperm.xlu0 %4056, %v3991
        %v4058 = vpop.permute.xlu0 %4057
        %4061 = vset.pattern.permute.xlu0 0
        %4062 = vperm.xlu0 %4061, %v3992
        %v4063 = vpop.permute.xlu0 %4062
        %4066 = vset.pattern.permute.xlu0 0
        %4067 = vperm.xlu0 %4066, %v3993
        %v4068 = vpop.permute.xlu0 %4067
        %4071 = vset.pattern.permute.xlu0 0
        %4072 = vperm.xlu0 %4071, %v3994
        %v4073 = vpop.permute.xlu0 %4072
        %4076 = vset.pattern.permute.xlu0 0
        %4077 = vperm.xlu0 %4076, %v3995
        %v4078 = vpop.permute.xlu0 %4077
        %4081 = vset.pattern.permute.xlu0 0
        %4082 = vperm.xlu0 %4081, %v3996
        %v4083 = vpop.permute.xlu0 %4082
        %4086 = vset.pattern.permute.xlu0 0
        %4087 = vperm.xlu0 %4086, %v3997
        %v4088 = vpop.permute.xlu0 %4087
        %4091 = vset.pattern.permute.xlu0 0
        %4092 = vperm.xlu0 %4091, %v3998
        %v4093 = vpop.permute.xlu0 %4092
        %4096 = vset.pattern.permute.xlu0 0
        %4097 = vperm.xlu0 %4096, %v3999
        %v4098 = vpop.permute.xlu0 %4097
        %4101 = vset.pattern.permute.xlu0 0
        %4102 = vperm.xlu0 %4101, %v4000
        %v4103 = vpop.permute.xlu0 %4102
        %4106 = vset.pattern.permute.xlu0 0
        %4107 = vperm.xlu0 %4106, %v4001
        %v4108 = vpop.permute.xlu0 %4107
        %4111 = vset.pattern.permute.xlu0 0
        %4112 = vperm.xlu0 %4111, %v4002
        %v4113 = vpop.permute.xlu0 %4112
        %4116 = vset.pattern.permute.xlu0 0
        %4117 = vperm.xlu0 %4116, %v4003
        %v4118 = vpop.permute.xlu0 %4117
        %4121 = vset.pattern.permute.xlu0 0
        %4122 = vperm.xlu0 %4121, %v4004
        %v4123 = vpop.permute.xlu0 %4122
        %4126 = vset.pattern.permute.xlu0 0
        %4127 = vperm.xlu0 %4126, %v4005
        %v4128 = vpop.permute.xlu0 %4127
        %4131 = vset.pattern.permute.xlu0 0
        %4132 = vperm.xlu0 %4131, %v4006
        %v4133 = vpop.permute.xlu0 %4132
        %4136 = vset.pattern.permute.xlu0 0
        %4137 = vperm.xlu0 %4136, %v4007
        %v4138 = vpop.permute.xlu0 %4137
        %4141 = vset.pattern.permute.xlu0 0
        %4142 = vperm.xlu0 %4141, %v4008
        %v4143 = vpop.permute.xlu0 %4142
        %4146 = vset.pattern.permute.xlu0 0
        %4147 = vperm.xlu0 %4146, %v4009
        %v4148 = vpop.permute.xlu0 %4147
        %4151 = vset.pattern.permute.xlu0 0
        %4152 = vperm.xlu0 %4151, %v4010
        %v4153 = vpop.permute.xlu0 %4152
        %4156 = vset.pattern.permute.xlu0 0
        %4157 = vperm.xlu0 %4156, %v4011
        %v4158 = vpop.permute.xlu0 %4157
        %4161 = vset.pattern.permute.xlu0 0
        %4162 = vperm.xlu0 %4161, %v4012
        %v4163 = vpop.permute.xlu0 %4162
        %4166 = vset.pattern.permute.xlu0 0
        %4167 = vperm.xlu0 %4166, %v4013
        %v4168 = vpop.permute.xlu0 %4167
        %4171 = vset.pattern.permute.xlu0 0
        %4172 = vperm.xlu0 %4171, %v4014
        %v4173 = vpop.permute.xlu0 %4172
        %v4175 = vmul.f32 %v3864, %v4018
        %v4176 = vmul.f32 %v3867, %v4023
        %v4177 = vmul.f32 %v3872, %v4028
        %v4178 = vmul.f32 %v3875, %v4033
        %v4179 = vmul.f32 %v3880, %v4038
        %v4180 = vmul.f32 %v3883, %v4043
        %v4181 = vmul.f32 %v3888, %v4048
        %v4182 = vmul.f32 %v3891, %v4053
        %v4183 = vmul.f32 %v3896, %v4058
        %v4184 = vmul.f32 %v3899, %v4063
        %v4185 = vmul.f32 %v3904, %v4068
        %v4186 = vmul.f32 %v3907, %v4073
        %v4187 = vmul.f32 %v3912, %v4078
        %v4188 = vmul.f32 %v3915, %v4083
        %v4189 = vmul.f32 %v3920, %v4088
        %v4190 = vmul.f32 %v3923, %v4093
        %v4191 = vmul.f32 %v3928, %v4098
        %v4192 = vmul.f32 %v3931, %v4103
        %v4193 = vmul.f32 %v3936, %v4108
        %v4194 = vmul.f32 %v3939, %v4113
        %v4195 = vmul.f32 %v3944, %v4118
        %v4196 = vmul.f32 %v3947, %v4123
        %v4197 = vmul.f32 %v3952, %v4128
        %v4198 = vmul.f32 %v3955, %v4133
        %v4199 = vmul.f32 %v3960, %v4138
        %v4200 = vmul.f32 %v3963, %v4143
        %v4201 = vmul.f32 %v3968, %v4148
        %v4202 = vmul.f32 %v3971, %v4153
        %v4203 = vmul.f32 %v3976, %v4158
        %v4204 = vmul.f32 %v3979, %v4163
        %v4205 = vmul.f32 %v4168, 0.0
        %v4206 = vmul.f32 %v4173, 0.0
        %v4207 = vadd.f32 %v3774, %v4175
        %v4208 = vadd.f32 %v3775, %v4176
        %v4209 = vadd.f32 %v3776, %v4177
        %v4210 = vadd.f32 %v3777, %v4178
        %v4211 = vadd.f32 %v3778, %v4179
        %v4212 = vadd.f32 %v3779, %v4180
        %v4213 = vadd.f32 %v3780, %v4181
        %v4214 = vadd.f32 %v3781, %v4182
        %v4215 = vadd.f32 %v3782, %v4183
        %v4216 = vadd.f32 %v3783, %v4184
        %v4217 = vadd.f32 %v3784, %v4185
        %v4218 = vadd.f32 %v3785, %v4186
        %v4219 = vadd.f32 %v3786, %v4187
        %v4220 = vadd.f32 %v3787, %v4188
        %v4221 = vadd.f32 %v3788, %v4189
        %v4222 = vadd.f32 %v3789, %v4190
        %v4223 = vadd.f32 %v3790, %v4191
        %v4224 = vadd.f32 %v3791, %v4192
        %v4225 = vadd.f32 %v3792, %v4193
        %v4226 = vadd.f32 %v3793, %v4194
        %v4227 = vadd.f32 %v3794, %v4195
        %v4228 = vadd.f32 %v3795, %v4196
        %v4229 = vadd.f32 %v3796, %v4197
        %v4230 = vadd.f32 %v3797, %v4198
        %v4231 = vadd.f32 %v3798, %v4199
        %v4232 = vadd.f32 %v3799, %v4200
        %v4233 = vadd.f32 %v3800, %v4201
        %v4234 = vadd.f32 %v3801, %v4202
        %v4235 = vadd.f32 %v3802, %v4203
        %v4236 = vadd.f32 %v3803, %v4204
        %v4237 = vadd.f32 %v3804, %v4205
        %v4238 = vadd.f32 %v3805, %v4206
        %s4239 = scalar_lea.vmem %s1, 128
        %v4240 = vld [vmem:[%s4239] sm:$0xf]
        %v4241 = vld [vmem:[%s4239 + $0x4] sm:$0xf]
        %v4242 = vld [vmem:[%s4239 + $0x8] sm:$0xf]
        %v4243 = vld [vmem:[%s4239 + $0xc] sm:$0xf]
        %v4248 = vunpack.c.l.b16 %v4240
        %v4249 = vunpack.c.l.b16 %v4241
        %v4250 = vunpack.c.l.b16 %v4242
        %v4251 = vunpack.c.l.b16 %v4243
        %v4252 = vpack.c.b16 %v4249, %v4248
        %v4253 = vpack.c.b16 %v4251, %v4250
        %4256 = vmatprep.subr.bf16.mxu0 0
        %4257 = vmatpush1.bf16.msra.mxu0 %v4252
        %4258 = vmatprep.subr.bf16.mxu0 0
        %4259 = vmatpush1.bf16.msra.mxu0 %v4253
        %4260 = vmatprep.subr.bf16.mxu0 0
        %4261 = vmatpush1.bf16.msra.mxu0 0
        %4262 = vmatprep.subr.bf16.mxu0 0
        %4263 = vmatpush1.bf16.msra.mxu0 0
        %4264 = vmatprep.subr.bf16.mxu0 0
        %4265 = vmatpush1.bf16.msra.mxu0 0
        %4266 = vmatprep.subr.bf16.mxu0 0
        %4267 = vmatpush1.bf16.msra.mxu0 0
        %4268 = vmatprep.subr.bf16.mxu0 0
        %4269 = vmatpush1.bf16.msra.mxu0 0
        %4270 = vmatprep.subr.bf16.mxu0 0
        %4271 = vmatpush1.bf16.msra.mxu0 0
        %4272 = vmatprep.subr.bf16.mxu0 0
        %4273 = vmatpush1.bf16.msra.mxu0 0
        %4274 = vmatprep.subr.bf16.mxu0 0
        %4275 = vmatpush1.bf16.msra.mxu0 0
        %4276 = vmatprep.subr.bf16.mxu0 0
        %4277 = vmatpush1.bf16.msra.mxu0 0
        %4278 = vmatprep.subr.bf16.mxu0 0
        %4279 = vmatpush1.bf16.msra.mxu0 0
        %4280 = vmatprep.subr.bf16.mxu0 0
        %4281 = vmatpush1.bf16.msra.mxu0 0
        %4282 = vmatprep.subr.bf16.mxu0 0
        %4283 = vmatpush1.bf16.msra.mxu0 0
        %4284 = vmatprep.subr.bf16.mxu0 0
        %4285 = vmatpush1.bf16.msra.mxu0 0
        %4286 = vmatprep.subr.bf16.mxu0 0
        %4287 = vmatpush1.bf16.msra.mxu0 0
        %4288 = vmatprep.mubr.bf16.mxu0 0
        %4289 = vmatmul.mubr.bf16.gmra.mrb[0].mxu0 %v369
        %v4290 = vpop.f32.mrb[0].mxu0
        %v4291 = vpop.f32.mrb[0].mxu0
        %v4292 = vpop.f32.mrb[0].mxu0
        %v4293 = vpop.f32.mrb[0].mxu0
        %4294 = vmatprep.mubr.bf16.mxu0 0
        %4295 = vmatmul.mubr.bf16.gmra.mrb[0].mxu0 %v372
        %v4296 = vpop.f32.mrb[0].mxu0
        %v4297 = vadd.f32 0.0, %v4296
        %v4298 = vpop.f32.mrb[0].mxu0
        %v4299 = vpop.f32.mrb[0].mxu0
        %v4300 = vadd.f32 0.0, %v4299
        %v4301 = vpop.f32.mrb[0].mxu0
        %4302 = vmatprep.mubr.bf16.mxu0 0
        %4303 = vmatmul.mubr.bf16.gmra.mrb[0].mxu0 %v375
        %v4304 = vpop.f32.mrb[0].mxu0
        %v4305 = vadd.f32 0.0, %v4304
        %v4306 = vpop.f32.mrb[0].mxu0
        %v4307 = vpop.f32.mrb[0].mxu0
        %v4308 = vadd.f32 0.0, %v4307
        %v4309 = vpop.f32.mrb[0].mxu0
        %4310 = vmatprep.mubr.bf16.mxu0 0
        %4311 = vmatmul.mubr.bf16.gmra.mrb[0].mxu0 %v378
        %v4312 = vpop.f32.mrb[0].mxu0
        %v4313 = vadd.f32 0.0, %v4312
        %v4314 = vpop.f32.mrb[0].mxu0
        %v4315 = vpop.f32.mrb[0].mxu0
        %v4316 = vadd.f32 0.0, %v4315
        %v4317 = vpop.f32.mrb[0].mxu0
        %4318 = vmatprep.mubr.bf16.mxu0 0
        %4319 = vmatmul.mubr.bf16.gmra.mrb[0].mxu0 %v381
        %v4320 = vpop.f32.mrb[0].mxu0
        %v4321 = vadd.f32 0.0, %v4320
        %v4322 = vpop.f32.mrb[0].mxu0
        %v4323 = vpop.f32.mrb[0].mxu0
        %v4324 = vadd.f32 0.0, %v4323
        %v4325 = vpop.f32.mrb[0].mxu0
        %4326 = vmatprep.mubr.bf16.mxu0 0
        %4327 = vmatmul.mubr.bf16.gmra.mrb[0].mxu0 %v384
        %v4328 = vpop.f32.mrb[0].mxu0
        %v4329 = vadd.f32 0.0, %v4328
        %v4330 = vpop.f32.mrb[0].mxu0
        %v4331 = vpop.f32.mrb[0].mxu0
        %v4332 = vadd.f32 0.0, %v4331
        %v4333 = vpop.f32.mrb[0].mxu0
        %4334 = vmatprep.mubr.bf16.mxu0 0
        %4335 = vmatmul.mubr.bf16.gmra.mrb[0].mxu0 %v387
        %v4336 = vpop.f32.mrb[0].mxu0
        %v4337 = vadd.f32 0.0, %v4336
        %v4338 = vpop.f32.mrb[0].mxu0
        %v4339 = vpop.f32.mrb[0].mxu0
        %v4340 = vadd.f32 0.0, %v4339
        %v4341 = vpop.f32.mrb[0].mxu0
        %4342 = vmatprep.mubr.bf16.mxu0 0
        %4343 = vmatmul.mubr.bf16.gmra.mrb[0].mxu0 %v390
        %v4344 = vpop.f32.mrb[0].mxu0
        %v4345 = vadd.f32 0.0, %v4344
        %v4346 = vpop.f32.mrb[0].mxu0
        %v4347 = vpop.f32.mrb[0].mxu0
        %v4348 = vadd.f32 0.0, %v4347
        %v4349 = vpop.f32.mrb[0].mxu0
        %4350 = vmatprep.mubr.bf16.mxu0 0
        %4351 = vmatmul.mubr.bf16.gmra.mrb[0].mxu0 %v393
        %v4352 = vpop.f32.mrb[0].mxu0
        %v4353 = vadd.f32 0.0, %v4352
        %v4354 = vpop.f32.mrb[0].mxu0
        %v4355 = vpop.f32.mrb[0].mxu0
        %v4356 = vadd.f32 0.0, %v4355
        %v4357 = vpop.f32.mrb[0].mxu0
        %4358 = vmatprep.mubr.bf16.mxu0 0
        %4359 = vmatmul.mubr.bf16.gmra.mrb[0].mxu0 %v396
        %v4360 = vpop.f32.mrb[0].mxu0
        %v4361 = vadd.f32 0.0, %v4360
        %v4362 = vpop.f32.mrb[0].mxu0
        %v4363 = vpop.f32.mrb[0].mxu0
        %v4364 = vadd.f32 0.0, %v4363
        %v4365 = vpop.f32.mrb[0].mxu0
        %4366 = vmatprep.mubr.bf16.mxu0 0
        %4367 = vmatmul.mubr.bf16.gmra.mrb[0].mxu0 %v399
        %v4368 = vpop.f32.mrb[0].mxu0
        %v4369 = vadd.f32 0.0, %v4368
        %v4370 = vpop.f32.mrb[0].mxu0
        %v4371 = vpop.f32.mrb[0].mxu0
        %v4372 = vadd.f32 0.0, %v4371
        %v4373 = vpop.f32.mrb[0].mxu0
        %4374 = vmatprep.mubr.bf16.mxu0 0
        %4375 = vmatmul.mubr.bf16.gmra.mrb[0].mxu0 %v402
        %v4376 = vpop.f32.mrb[0].mxu0
        %v4377 = vadd.f32 0.0, %v4376
        %v4378 = vpop.f32.mrb[0].mxu0
        %v4379 = vpop.f32.mrb[0].mxu0
        %v4380 = vadd.f32 0.0, %v4379
        %v4381 = vpop.f32.mrb[0].mxu0
        %4382 = vmatprep.mubr.bf16.mxu0 0
        %4383 = vmatmul.mubr.bf16.gmra.mrb[0].mxu0 %v405
        %v4384 = vpop.f32.mrb[0].mxu0
        %v4385 = vadd.f32 0.0, %v4384
        %v4386 = vpop.f32.mrb[0].mxu0
        %v4387 = vpop.f32.mrb[0].mxu0
        %v4388 = vadd.f32 0.0, %v4387
        %v4389 = vpop.f32.mrb[0].mxu0
        %4390 = vmatprep.mubr.bf16.mxu0 0
        %4391 = vmatmul.mubr.bf16.gmra.mrb[0].mxu0 %v408
        %v4392 = vpop.f32.mrb[0].mxu0
        %v4393 = vadd.f32 0.0, %v4392
        %v4394 = vpop.f32.mrb[0].mxu0
        %v4395 = vpop.f32.mrb[0].mxu0
        %v4396 = vadd.f32 0.0, %v4395
        %v4397 = vpop.f32.mrb[0].mxu0
        %4398 = vmatprep.mubr.bf16.mxu0 0
        %4399 = vmatmul.mubr.bf16.gmra.mrb[0].mxu0 %v411
        %v4400 = vpop.f32.mrb[0].mxu0
        %v4401 = vadd.f32 0.0, %v4400
        %v4402 = vpop.f32.mrb[0].mxu0
        %v4403 = vpop.f32.mrb[0].mxu0
        %v4404 = vadd.f32 0.0, %v4403
        %v4405 = vpop.f32.mrb[0].mxu0
        %4406 = vmatprep.mubr.bf16.mxu0 0
        %4407 = vmatmul.mubr.bf16.gmra.mrb[0].mxu0 %v414
        %v4408 = vpop.f32.mrb[0].mxu0
        %v4409 = vadd.f32 0.0, %v4408
        %v4410 = vpop.f32.mrb[0].mxu0
        %v4411 = vpop.f32.mrb[0].mxu0
        %v4412 = vadd.f32 0.0, %v4411
        %v4413 = vpop.f32.mrb[0].mxu0
        %4414 = vdwg.mxu0
        %v4445 = vrot.slane %v4297, 1
        %v4446 = vrot.slane %v4300, 1
        %v4447 = vsel %vm1561, %v4445, %v4446
        %v4448 = vrot.slane %v4305, 1
        %v4449 = vsel %vm1561, %v4446, %v4448
        %v4450 = vrot.slane %v4308, 1
        %v4451 = vsel %vm1561, %v4448, %v4450
        %v4452 = vrot.slane %v4313, 1
        %v4453 = vsel %vm1561, %v4450, %v4452
        %v4454 = vrot.slane %v4316, 1
        %v4455 = vsel %vm1561, %v4452, %v4454
        %v4456 = vrot.slane %v4321, 1
        %v4457 = vsel %vm1561, %v4454, %v4456
        %v4458 = vrot.slane %v4324, 1
        %v4459 = vsel %vm1561, %v4456, %v4458
        %v4460 = vrot.slane %v4329, 1
        %v4461 = vsel %vm1561, %v4458, %v4460
        %v4462 = vrot.slane %v4332, 1
        %v4463 = vsel %vm1561, %v4460, %v4462
        %v4464 = vrot.slane %v4337, 1
        %v4465 = vsel %vm1561, %v4462, %v4464
        %v4466 = vrot.slane %v4340, 1
        %v4467 = vsel %vm1561, %v4464, %v4466
        %v4468 = vrot.slane %v4345, 1
        %v4469 = vsel %vm1561, %v4466, %v4468
        %v4470 = vrot.slane %v4348, 1
        %v4471 = vsel %vm1561, %v4468, %v4470
        %v4472 = vrot.slane %v4353, 1
        %v4473 = vsel %vm1561, %v4470, %v4472
        %v4474 = vrot.slane %v4356, 1
        %v4475 = vsel %vm1561, %v4472, %v4474
        %v4476 = vrot.slane %v4361, 1
        %v4477 = vsel %vm1561, %v4474, %v4476
        %v4478 = vrot.slane %v4364, 1
        %v4479 = vsel %vm1561, %v4476, %v4478
        %v4480 = vrot.slane %v4369, 1
        %v4481 = vsel %vm1561, %v4478, %v4480
        %v4482 = vrot.slane %v4372, 1
        %v4483 = vsel %vm1561, %v4480, %v4482
        %v4484 = vrot.slane %v4377, 1
        %v4485 = vsel %vm1561, %v4482, %v4484
        %v4486 = vrot.slane %v4380, 1
        %v4487 = vsel %vm1561, %v4484, %v4486
        %v4488 = vrot.slane %v4385, 1
        %v4489 = vsel %vm1561, %v4486, %v4488
        %v4490 = vrot.slane %v4388, 1
        %v4491 = vsel %vm1561, %v4488, %v4490
        %v4492 = vrot.slane %v4393, 1
        %v4493 = vsel %vm1561, %v4490, %v4492
        %v4494 = vrot.slane %v4396, 1
        %v4495 = vsel %vm1561, %v4492, %v4494
        %v4496 = vrot.slane %v4401, 1
        %v4497 = vsel %vm1561, %v4494, %v4496
        %v4498 = vrot.slane %v4404, 1
        %v4499 = vsel %vm1561, %v4496, %v4498
        %v4500 = vrot.slane %v4409, 1
        %v4501 = vsel %vm1561, %v4498, %v4500
        %v4502 = vrot.slane %v4412, 1
        %v4503 = vsel %vm1561, %v4500, %v4502
        %v4534 = vsel %vm1561, %v4502, 0.0
        %s4535 = scalar_lea.vmem [#allocation2], 2048
        %v4536 = vld [vmem:[%s4535] sm:$0xff]
        %v4537 = vld [vmem:[%s4535 + $0x8] sm:$0xff]
        %v4538 = vld [vmem:[%s4535 + $0x10] sm:$0xff]
        %v4539 = vld [vmem:[%s4535 + $0x18] sm:$0xff]
        %v4540 = vld [vmem:[%s4535 + $0x20] sm:$0xff]
        %v4541 = vld [vmem:[%s4535 + $0x28] sm:$0xff]
        %v4542 = vld [vmem:[%s4535 + $0x30] sm:$0xff]
        %v4543 = vld [vmem:[%s4535 + $0x38] sm:$0xff]
        %v4544 = vld [vmem:[%s4535 + $0x40] sm:$0xff]
        %v4545 = vld [vmem:[%s4535 + $0x48] sm:$0xff]
        %v4546 = vld [vmem:[%s4535 + $0x50] sm:$0xff]
        %v4547 = vld [vmem:[%s4535 + $0x58] sm:$0xff]
        %v4548 = vld [vmem:[%s4535 + $0x60] sm:$0xff]
        %v4549 = vld [vmem:[%s4535 + $0x68] sm:$0xff]
        %v4550 = vld [vmem:[%s4535 + $0x70] sm:$0xff]
        %v4551 = vld [vmem:[%s4535 + $0x78] sm:$0xff]
        %v4552 = vld [vmem:[%s4535 + $0x80] sm:$0xff]
        %v4553 = vld [vmem:[%s4535 + $0x88] sm:$0xff]
        %v4554 = vld [vmem:[%s4535 + $0x90] sm:$0xff]
        %v4555 = vld [vmem:[%s4535 + $0x98] sm:$0xff]
        %v4556 = vld [vmem:[%s4535 + $0xa0] sm:$0xff]
        %v4557 = vld [vmem:[%s4535 + $0xa8] sm:$0xff]
        %v4558 = vld [vmem:[%s4535 + $0xb0] sm:$0xff]
        %v4559 = vld [vmem:[%s4535 + $0xb8] sm:$0xff]
        %v4560 = vld [vmem:[%s4535 + $0xc0] sm:$0xff]
        %v4561 = vld [vmem:[%s4535 + $0xc8] sm:$0xff]
        %v4562 = vld [vmem:[%s4535 + $0xd0] sm:$0xff]
        %v4563 = vld [vmem:[%s4535 + $0xd8] sm:$0xff]
        %v4564 = vld [vmem:[%s4535 + $0xe0] sm:$0xff]
        %v4565 = vld [vmem:[%s4535 + $0xe8] sm:$0xff]
        %v4566 = vld [vmem:[%s4535 + $0xf0] sm:$0xff]
        %v4567 = vld [vmem:[%s4535 + $0xf8] sm:$0xff]
        %4569 = vset.pattern.permute.xlu0 0
        %4570 = vperm.xlu0 %4569, %v4536
        %v4571 = vpop.permute.xlu0 %4570
        %4574 = vset.pattern.permute.xlu0 0
        %4575 = vperm.xlu0 %4574, %v4537
        %v4576 = vpop.permute.xlu0 %4575
        %4579 = vset.pattern.permute.xlu0 0
        %4580 = vperm.xlu0 %4579, %v4538
        %v4581 = vpop.permute.xlu0 %4580
        %4584 = vset.pattern.permute.xlu0 0
        %4585 = vperm.xlu0 %4584, %v4539
        %v4586 = vpop.permute.xlu0 %4585
        %4589 = vset.pattern.permute.xlu0 0
        %4590 = vperm.xlu0 %4589, %v4540
        %v4591 = vpop.permute.xlu0 %4590
        %4594 = vset.pattern.permute.xlu0 0
        %4595 = vperm.xlu0 %4594, %v4541
        %v4596 = vpop.permute.xlu0 %4595
        %4599 = vset.pattern.permute.xlu0 0
        %4600 = vperm.xlu0 %4599, %v4542
        %v4601 = vpop.permute.xlu0 %4600
        %4604 = vset.pattern.permute.xlu0 0
        %4605 = vperm.xlu0 %4604, %v4543
        %v4606 = vpop.permute.xlu0 %4605
        %4609 = vset.pattern.permute.xlu0 0
        %4610 = vperm.xlu0 %4609, %v4544
        %v4611 = vpop.permute.xlu0 %4610
        %4614 = vset.pattern.permute.xlu0 0
        %4615 = vperm.xlu0 %4614, %v4545
        %v4616 = vpop.permute.xlu0 %4615
        %4619 = vset.pattern.permute.xlu0 0
        %4620 = vperm.xlu0 %4619, %v4546
        %v4621 = vpop.permute.xlu0 %4620
        %4624 = vset.pattern.permute.xlu0 0
        %4625 = vperm.xlu0 %4624, %v4547
        %v4626 = vpop.permute.xlu0 %4625
        %4629 = vset.pattern.permute.xlu0 0
        %4630 = vperm.xlu0 %4629, %v4548
        %v4631 = vpop.permute.xlu0 %4630
        %4634 = vset.pattern.permute.xlu0 0
        %4635 = vperm.xlu0 %4634, %v4549
        %v4636 = vpop.permute.xlu0 %4635
        %4639 = vset.pattern.permute.xlu0 0
        %4640 = vperm.xlu0 %4639, %v4550
        %v4641 = vpop.permute.xlu0 %4640
        %4644 = vset.pattern.permute.xlu0 0
        %4645 = vperm.xlu0 %4644, %v4551
        %v4646 = vpop.permute.xlu0 %4645
        %4649 = vset.pattern.permute.xlu0 0
        %4650 = vperm.xlu0 %4649, %v4552
        %v4651 = vpop.permute.xlu0 %4650
        %4654 = vset.pattern.permute.xlu0 0
        %4655 = vperm.xlu0 %4654, %v4553
        %v4656 = vpop.permute.xlu0 %4655
        %4659 = vset.pattern.permute.xlu0 0
        %4660 = vperm.xlu0 %4659, %v4554
        %v4661 = vpop.permute.xlu0 %4660
        %4664 = vset.pattern.permute.xlu0 0
        %4665 = vperm.xlu0 %4664, %v4555
        %v4666 = vpop.permute.xlu0 %4665
        %4669 = vset.pattern.permute.xlu0 0
        %4670 = vperm.xlu0 %4669, %v4556
        %v4671 = vpop.permute.xlu0 %4670
        %4674 = vset.pattern.permute.xlu0 0
        %4675 = vperm.xlu0 %4674, %v4557
        %v4676 = vpop.permute.xlu0 %4675
        %4679 = vset.pattern.permute.xlu0 0
        %4680 = vperm.xlu0 %4679, %v4558
        %v4681 = vpop.permute.xlu0 %4680
        %4684 = vset.pattern.permute.xlu0 0
        %4685 = vperm.xlu0 %4684, %v4559
        %v4686 = vpop.permute.xlu0 %4685
        %4689 = vset.pattern.permute.xlu0 0
        %4690 = vperm.xlu0 %4689, %v4560
        %v4691 = vpop.permute.xlu0 %4690
        %4694 = vset.pattern.permute.xlu0 0
        %4695 = vperm.xlu0 %4694, %v4561
        %v4696 = vpop.permute.xlu0 %4695
        %4699 = vset.pattern.permute.xlu0 0
        %4700 = vperm.xlu0 %4699, %v4562
        %v4701 = vpop.permute.xlu0 %4700
        %4704 = vset.pattern.permute.xlu0 0
        %4705 = vperm.xlu0 %4704, %v4563
        %v4706 = vpop.permute.xlu0 %4705
        %4709 = vset.pattern.permute.xlu0 0
        %4710 = vperm.xlu0 %4709, %v4564
        %v4711 = vpop.permute.xlu0 %4710
        %4714 = vset.pattern.permute.xlu0 0
        %4715 = vperm.xlu0 %4714, %v4565
        %v4716 = vpop.permute.xlu0 %4715
        %4719 = vset.pattern.permute.xlu0 0
        %4720 = vperm.xlu0 %4719, %v4566
        %v4721 = vpop.permute.xlu0 %4720
        %4724 = vset.pattern.permute.xlu0 0
        %4725 = vperm.xlu0 %4724, %v4567
        %v4726 = vpop.permute.xlu0 %4725
        %v4728 = vmul.f32 %v4447, %v4571
        %v4729 = vmul.f32 %v4449, %v4576
        %v4730 = vmul.f32 %v4451, %v4581
        %v4731 = vmul.f32 %v4453, %v4586
        %v4732 = vmul.f32 %v4455, %v4591
        %v4733 = vmul.f32 %v4457, %v4596
        %v4734 = vmul.f32 %v4459, %v4601
        %v4735 = vmul.f32 %v4461, %v4606
        %v4736 = vmul.f32 %v4463, %v4611
        %v4737 = vmul.f32 %v4465, %v4616
        %v4738 = vmul.f32 %v4467, %v4621
        %v4739 = vmul.f32 %v4469, %v4626
        %v4740 = vmul.f32 %v4471, %v4631
        %v4741 = vmul.f32 %v4473, %v4636
        %v4742 = vmul.f32 %v4475, %v4641
        %v4743 = vmul.f32 %v4477, %v4646
        %v4744 = vmul.f32 %v4479, %v4651
        %v4745 = vmul.f32 %v4481, %v4656
        %v4746 = vmul.f32 %v4483, %v4661
        %v4747 = vmul.f32 %v4485, %v4666
        %v4748 = vmul.f32 %v4487, %v4671
        %v4749 = vmul.f32 %v4489, %v4676
        %v4750 = vmul.f32 %v4491, %v4681
        %v4751 = vmul.f32 %v4493, %v4686
        %v4752 = vmul.f32 %v4495, %v4691
        %v4753 = vmul.f32 %v4497, %v4696
        %v4754 = vmul.f32 %v4499, %v4701
        %v4755 = vmul.f32 %v4501, %v4706
        %v4756 = vmul.f32 %v4503, %v4711
        %v4757 = vmul.f32 %v4534, %v4716
        %v4758 = vmul.f32 %v4721, 0.0
        %v4759 = vmul.f32 %v4726, 0.0
        %v4760 = vadd.f32 %v4207, %v4728
        %v4761 = vadd.f32 %v4208, %v4729
        %v4762 = vadd.f32 %v4209, %v4730
        %v4763 = vadd.f32 %v4210, %v4731
        %v4764 = vadd.f32 %v4211, %v4732
        %v4765 = vadd.f32 %v4212, %v4733
        %v4766 = vadd.f32 %v4213, %v4734
        %v4767 = vadd.f32 %v4214, %v4735
        %v4768 = vadd.f32 %v4215, %v4736
        %v4769 = vadd.f32 %v4216, %v4737
        %v4770 = vadd.f32 %v4217, %v4738
        %v4771 = vadd.f32 %v4218, %v4739
        %v4772 = vadd.f32 %v4219, %v4740
        %v4773 = vadd.f32 %v4220, %v4741
        %v4774 = vadd.f32 %v4221, %v4742
        %v4775 = vadd.f32 %v4222, %v4743
        %v4776 = vadd.f32 %v4223, %v4744
        %v4777 = vadd.f32 %v4224, %v4745
        %v4778 = vadd.f32 %v4225, %v4746
        %v4779 = vadd.f32 %v4226, %v4747
        %v4780 = vadd.f32 %v4227, %v4748
        %v4781 = vadd.f32 %v4228, %v4749
        %v4782 = vadd.f32 %v4229, %v4750
        %v4783 = vadd.f32 %v4230, %v4751
        %v4784 = vadd.f32 %v4231, %v4752
        %v4785 = vadd.f32 %v4232, %v4753
        %v4786 = vadd.f32 %v4233, %v4754
        %v4787 = vadd.f32 %v4234, %v4755
        %v4788 = vadd.f32 %v4235, %v4756
        %v4789 = vadd.f32 %v4236, %v4757
        %v4790 = vadd.f32 %v4237, %v4758
        %v4791 = vadd.f32 %v4238, %v4759
        %v4792 = vld [vmem:[%s3] sm:$0x1]
        %v4794 = vlaneseq
        %v4795 = vshrl.u32 %v4794, 7
        %v4796 = vsub.s32 0, %v4795
        %v4797 = vrot.slane %v4792, %v4796
        %v4799 = vmul.f32 %v4760, %v4797
        %v4800 = vmul.f32 %v4761, %v4797
        %v4801 = vmul.f32 %v4762, %v4797
        %v4802 = vmul.f32 %v4763, %v4797
        %v4803 = vmul.f32 %v4764, %v4797
        %v4804 = vmul.f32 %v4765, %v4797
        %v4805 = vmul.f32 %v4766, %v4797
        %v4806 = vmul.f32 %v4767, %v4797
        %v4807 = vmul.f32 %v4768, %v4797
        %v4808 = vmul.f32 %v4769, %v4797
        %v4809 = vmul.f32 %v4770, %v4797
        %v4810 = vmul.f32 %v4771, %v4797
        %v4811 = vmul.f32 %v4772, %v4797
        %v4812 = vmul.f32 %v4773, %v4797
        %v4813 = vmul.f32 %v4774, %v4797
        %v4814 = vmul.f32 %v4775, %v4797
        %v4815 = vmul.f32 %v4776, %v4797
        %v4816 = vmul.f32 %v4777, %v4797
        %v4817 = vmul.f32 %v4778, %v4797
        %v4818 = vmul.f32 %v4779, %v4797
        %v4819 = vmul.f32 %v4780, %v4797
        %v4820 = vmul.f32 %v4781, %v4797
        %v4821 = vmul.f32 %v4782, %v4797
        %v4822 = vmul.f32 %v4783, %v4797
        %v4823 = vmul.f32 %v4784, %v4797
        %v4824 = vmul.f32 %v4785, %v4797
        %v4825 = vmul.f32 %v4786, %v4797
        %v4826 = vmul.f32 %v4787, %v4797
        %v4827 = vmul.f32 %v4788, %v4797
        %v4828 = vmul.f32 %v4789, %v4797
        %v4829 = vmul.f32 %v4790, %v4797
        %v4830 = vmul.f32 %v4791, %v4797
        %v4831 = vld [vmem:[%s4] sm:$0x1]
        %v4833 = vlaneseq
        %v4834 = vshrl.u32 %v4833, 7
        %v4835 = vsub.s32 0, %v4834
        %v4836 = vrot.slane %v4831, %v4835
        %v4838 = vadd.f32 %v4799, %v4836
        %v4839 = vadd.f32 %v4800, %v4836
        %v4840 = vadd.f32 %v4801, %v4836
        %v4841 = vadd.f32 %v4802, %v4836
        %v4842 = vadd.f32 %v4803, %v4836
        %v4843 = vadd.f32 %v4804, %v4836
        %v4844 = vadd.f32 %v4805, %v4836
        %v4845 = vadd.f32 %v4806, %v4836
        %v4846 = vadd.f32 %v4807, %v4836
        %v4847 = vadd.f32 %v4808, %v4836
        %v4848 = vadd.f32 %v4809, %v4836
        %v4849 = vadd.f32 %v4810, %v4836
        %v4850 = vadd.f32 %v4811, %v4836
        %v4851 = vadd.f32 %v4812, %v4836
        %v4852 = vadd.f32 %v4813, %v4836
        %v4853 = vadd.f32 %v4814, %v4836
        %v4854 = vadd.f32 %v4815, %v4836
        %v4855 = vadd.f32 %v4816, %v4836
        %v4856 = vadd.f32 %v4817, %v4836
        %v4857 = vadd.f32 %v4818, %v4836
        %v4858 = vadd.f32 %v4819, %v4836
        %v4859 = vadd.f32 %v4820, %v4836
        %v4860 = vadd.f32 %v4821, %v4836
        %v4861 = vadd.f32 %v4822, %v4836
        %v4862 = vadd.f32 %v4823, %v4836
        %v4863 = vadd.f32 %v4824, %v4836
        %v4864 = vadd.f32 %v4825, %v4836
        %v4865 = vadd.f32 %v4826, %v4836
        %v4866 = vadd.f32 %v4827, %v4836
        %v4867 = vadd.f32 %v4828, %v4836
        %v4868 = vadd.f32 %v4829, %v4836
        %v4869 = vadd.f32 %v4830, %v4836
        %v4870 = vmax.f32 %v4838, 0.0
        %v4871 = vmax.f32 %v4839, 0.0
        %v4872 = vmax.f32 %v4840, 0.0
        %v4873 = vmax.f32 %v4841, 0.0
        %v4874 = vmax.f32 %v4842, 0.0
        %v4875 = vmax.f32 %v4843, 0.0
        %v4876 = vmax.f32 %v4844, 0.0
        %v4877 = vmax.f32 %v4845, 0.0
        %v4878 = vmax.f32 %v4846, 0.0
        %v4879 = vmax.f32 %v4847, 0.0
        %v4880 = vmax.f32 %v4848, 0.0
        %v4881 = vmax.f32 %v4849, 0.0
        %v4882 = vmax.f32 %v4850, 0.0
        %v4883 = vmax.f32 %v4851, 0.0
        %v4884 = vmax.f32 %v4852, 0.0
        %v4885 = vmax.f32 %v4853, 0.0
        %v4886 = vmax.f32 %v4854, 0.0
        %v4887 = vmax.f32 %v4855, 0.0
        %v4888 = vmax.f32 %v4856, 0.0
        %v4889 = vmax.f32 %v4857, 0.0
        %v4890 = vmax.f32 %v4858, 0.0
        %v4891 = vmax.f32 %v4859, 0.0
        %v4892 = vmax.f32 %v4860, 0.0
        %v4893 = vmax.f32 %v4861, 0.0
        %v4894 = vmax.f32 %v4862, 0.0
        %v4895 = vmax.f32 %v4863, 0.0
        %v4896 = vmax.f32 %v4864, 0.0
        %v4897 = vmax.f32 %v4865, 0.0
        %v4898 = vmax.f32 %v4866, 0.0
        %v4899 = vmax.f32 %v4867, 0.0
        %v4900 = vmax.f32 %v4868, 0.0
        %v4901 = vmax.f32 %v4869, 0.0
        %4902 = vst.msk [vmem:[%s232] sm:$0xff] %vm367, %v4870
        %4903 = vst.msk [vmem:[%s232 + $0x8] sm:$0xff] %vm367, %v4871
        %4904 = vst.msk [vmem:[%s232 + $0x10] sm:$0xff] %vm367, %v4872
        %4905 = vst.msk [vmem:[%s232 + $0x18] sm:$0xff] %vm367, %v4873
        %4906 = vst.msk [vmem:[%s232 + $0x20] sm:$0xff] %vm367, %v4874
        %4907 = vst.msk [vmem:[%s232 + $0x28] sm:$0xff] %vm367, %v4875
        %4908 = vst.msk [vmem:[%s232 + $0x30] sm:$0xff] %vm367, %v4876
        %4909 = vst.msk [vmem:[%s232 + $0x38] sm:$0xff] %vm367, %v4877
        %4910 = vst.msk [vmem:[%s232 + $0x40] sm:$0xff] %vm367, %v4878
        %4911 = vst.msk [vmem:[%s232 + $0x48] sm:$0xff] %vm367, %v4879
        %4912 = vst.msk [vmem:[%s232 + $0x50] sm:$0xff] %vm367, %v4880
        %4913 = vst.msk [vmem:[%s232 + $0x58] sm:$0xff] %vm367, %v4881
        %4914 = vst.msk [vmem:[%s232 + $0x60] sm:$0xff] %vm367, %v4882
        %4915 = vst.msk [vmem:[%s232 + $0x68] sm:$0xff] %vm367, %v4883
        %4916 = vst.msk [vmem:[%s232 + $0x70] sm:$0xff] %vm367, %v4884
        %4917 = vst.msk [vmem:[%s232 + $0x78] sm:$0xff] %vm367, %v4885
        %4918 = vst.msk [vmem:[%s232 + $0x80] sm:$0xff] %vm367, %v4886
        %4919 = vst.msk [vmem:[%s232 + $0x88] sm:$0xff] %vm367, %v4887
        %4920 = vst.msk [vmem:[%s232 + $0x90] sm:$0xff] %vm367, %v4888
        %4921 = vst.msk [vmem:[%s232 + $0x98] sm:$0xff] %vm367, %v4889
        %4922 = vst.msk [vmem:[%s232 + $0xa0] sm:$0xff] %vm367, %v4890
        %4923 = vst.msk [vmem:[%s232 + $0xa8] sm:$0xff] %vm367, %v4891
        %4924 = vst.msk [vmem:[%s232 + $0xb0] sm:$0xff] %vm367, %v4892
        %4925 = vst.msk [vmem:[%s232 + $0xb8] sm:$0xff] %vm367, %v4893
        %4926 = vst.msk [vmem:[%s232 + $0xc0] sm:$0xff] %vm367, %v4894
        %4927 = vst.msk [vmem:[%s232 + $0xc8] sm:$0xff] %vm367, %v4895
        %4928 = vst.msk [vmem:[%s232 + $0xd0] sm:$0xff] %vm367, %v4896
        %4929 = vst.msk [vmem:[%s232 + $0xd8] sm:$0xff] %vm367, %v4897
        %4930 = vst.msk [vmem:[%s232 + $0xe0] sm:$0xff] %vm367, %v4898
        %4931 = vst.msk [vmem:[%s232 + $0xe8] sm:$0xff] %vm367, %v4899
        %4932 = vst.msk [vmem:[%s232 + $0xf0] sm:$0xff] %vm367, %v4900
        %4933 = vst.msk [vmem:[%s232 + $0xf8] sm:$0xff] %vm367, %v4901
        %s4934 = sand.u32 %s138, 1
        %s4935 = scalar_lea.sflag [#allocation4], %s4934
        %s4936 = sand.u32 %s138, 1
        %s4937 = smul.addr %s4936, 256
        %s4938 = scalar_lea.vmem [#allocation5], %s4937
        // Predicated region
        $region45: #{basic_conv2d.1} parent=39 // pred_check
          %p4939 = pneg %p148
        $region46: #{basic_conv2d.1} parent=39 // pred_check_branch
          %4941 = sbr.rel (%p4939) target = $region48
        $region47: #{basic_conv2d.1} parent=39 // pred_region
          %s4943 = ssub.s32 4096, 4096
          %4944 = vsyncadd %s4935, %s4943
          %s4945 = smul.addr %s20, 32
          %s4946 = smul.addr %s4945, 128
          %s4947 = scalar_lea.hbm %s5, %s4946
          %s4948 = sshll.u32 %s4938, 4
          %s4949 = int_to_ptr.vmem [resolvable:$true] %s4948
          %4954 = dma.vmem_to_hbm [thread:$0]  %s4949, 4096, %s4947, %s4935, 128, 128, 8
        $region48: #{basic_conv2d.1} parent=39 // pred_fallthru
          _
      $region40: #{basic_conv2d.1} parent=5 // pred_fallthru
        _
      %p4955 = scmp.le.s32.totalorder 2, %s15
      // Predicated region
      $region49: #{basic_conv2d.1} parent=5 // pred_check
        %p4956 = pneg %p4955
      $region50: #{basic_conv2d.1} parent=5 // pred_check_branch
        %4958 = sbr.rel (%p4956) target = $region52
      $region51: #{basic_conv2d.1} parent=5 // pred_region
        %s4959 = ssub.s32 %s15, 2
        // Predicated region
        $region53: #{basic_conv2d.1} parent=51 // pred_check
          %p4960 = pneg %p154
        $region54: #{basic_conv2d.1} parent=51 // pred_check_branch
          %4962 = sbr.rel (%p4960) target = $region56
        $region55: #{basic_conv2d.1} parent=51 // pred_region
          %s4963 = sand.u32 %s139, 1
          %s4964 = scalar_lea.sflag [#allocation4], %s4963
          %s4965 = sand.u32 %s139, 1
          %s4966 = smul.addr %s4965, 256
          %s4967 = scalar_lea.vmem [#allocation5], %s4966
          %4968 = dma.done %s4964, 4096
        $region56: #{basic_conv2d.1} parent=51 // pred_fallthru
          _
      $region52: #{basic_conv2d.1} parent=5 // pred_fallthru
        _
    $region6: #{basic_conv2d.1} parent=1 // loop_footer
      %s19 = sadd.s32 1, %s15
    $region7: #{basic_conv2d.1} parent=1 // loop_footer_branch
      %14 = sbr.rel target = $region3
    $region8: #{basic_conv2d.1} parent=1 // loop_exit
      _
    %4969 = vsyncpa [#allocation3], 1
    %s4970 = scalar_lea.sflag [#allocation3], 1
    %4971 = vsyncpa %s4970, 1
    %4972 = vsyncpa [#allocation4], 1
    %s4973 = scalar_lea.sflag [#allocation4], 1
    %4974 = vsyncpa %s4973, 1

</llo_original>
